<compile_context>
chip_gen: v6e
topology: v6e:2x2x1
jax: 0.10.0
libtpu: 0.0.40
codegen_flags: <defaults>
</compile_context>

<pallas_src>
import functools

import jax
import jax.numpy as jnp
from jax.experimental import pallas as pl
from jax.experimental.pallas import tpu as pltpu

Z_DIM = 100
H1, H2, H3 = 256, 512, 1024
IMAGE_DIM = 784            # 28*28 (MNIST-style generator)

_LANE = 128
_SUBLANE = 8
Z_PAD = 128                # 100 -> one full vreg of lanes


def _round_up(x, m):
    return ((x + m - 1) // m) * m


def _device_kind():
    try:
        return jax.devices()[0].device_kind.lower()
    except Exception:
        return ""


# ---------------------------------------------------------------------------
# Kernel
# ---------------------------------------------------------------------------
def generator_kernel(x_ref,
                     w1_ref, b1_ref,
                     w2_ref, b2_ref,
                     w3_ref, b3_ref,
                     w4_ref, b4_ref,
                     o_ref, *, act_dtype):
    """Fused 4-layer MLP: bf16 MXU inputs, f32 accumulate, act_dtype elementwise."""

    def layer(h, w_ref, b_ref, last):
        acc = jnp.dot(h, w_ref[...], preferred_element_type=jnp.float32)
        acc = acc.astype(act_dtype) + b_ref[...].astype(act_dtype)
        if last:
            return jnp.tanh(acc)                       # EUP tanh (bf16 on v6e/v7x)
        acc = jnp.maximum(acc, 0.2 * acc)              # LeakyReLU(0.2): mul + max
        return acc.astype(jnp.bfloat16)                # MXU input for next layer

    h = x_ref[...].astype(jnp.bfloat16)
    h = layer(h, w1_ref, b1_ref, last=False)
    h = layer(h, w2_ref, b2_ref, last=False)
    h = layer(h, w3_ref, b3_ref, last=False)
    out = layer(h, w4_ref, b4_ref, last=True)
    o_ref[...] = out.astype(o_ref.dtype)


# ---------------------------------------------------------------------------
# One-time parameter preparation (hoisted out of the per-call path)
# ---------------------------------------------------------------------------
def prepare_params(params):
    """Cast weights to bf16 and zero-pad w1 rows 100->128. Call once."""
    w1 = jnp.zeros((Z_PAD, H1), jnp.bfloat16)
    w1 = w1.at[:Z_DIM, :].set(params["w1"].astype(jnp.bfloat16))
    return {
        "w1": w1,
        "b1": params["b1"].astype(jnp.float32).reshape(1, H1),
        "w2": params["w2"].astype(jnp.bfloat16),
        "b2": params["b2"].astype(jnp.float32).reshape(1, H2),
        "w3": params["w3"].astype(jnp.bfloat16),
        "b3": params["b3"].astype(jnp.float32).reshape(1, H3),
        "w4": params["w4"].astype(jnp.bfloat16),
        "b4": params["b4"].astype(jnp.float32).reshape(1, IMAGE_DIM),
    }


# ---------------------------------------------------------------------------
# Forward
# ---------------------------------------------------------------------------
@functools.partial(jax.jit,
                   static_argnames=("block_m", "elementwise_bf16", "two_tc"))
def _generator_forward(x, prepped, *, block_m, elementwise_bf16, two_tc):
    B, zdim = x.shape
    assert zdim == Z_DIM

    # ---- batch tile ---------------------------------------------------------
    bm = _round_up(min(block_m, _round_up(B, _SUBLANE)), _SUBLANE)
    # Split a single-step grid only on v7x (2 TensorCores per chip).
    if two_tc and pl.cdiv(B, bm) == 1 and bm >= 2 * _LANE:
        bm = _round_up(bm // 2, _LANE)
    grid = (pl.cdiv(B, bm),)     # last tile may be partial (masked writeback)

    # ---- only per-call input prep: zero-pad z 100 -> 128 lanes (tiny) -------
    xp = jnp.pad(x, ((0, 0), (0, Z_PAD - Z_DIM)))

    act_dtype = jnp.bfloat16 if elementwise_bf16 else jnp.float32
    kernel = functools.partial(generator_kernel, act_dtype=act_dtype)

    # Weights / biases: full-array blocks, constant block index -> stay
    # VMEM-resident across the whole grid.
    def resident(arr):
        return pl.BlockSpec(arr.shape, lambda i: (0, 0))

    w1, b1 = prepped["w1"], prepped["b1"]
    w2, b2 = prepped["w2"], prepped["b2"]
    w3, b3 = prepped["w3"], prepped["b3"]
    w4, b4 = prepped["w4"], prepped["b4"]

    flops = 2 * B * (Z_DIM * H1 + H1 * H2 + H2 * H3 + H3 * IMAGE_DIM)
    param_bytes = sum(int(a.size) * a.dtype.itemsize for a in prepped.values())
    bytes_accessed = (int(xp.size) * xp.dtype.itemsize
                      + param_bytes
                      + B * IMAGE_DIM * 4)

    out = pl.pallas_call(
        kernel,
        out_shape=jax.ShapeDtypeStruct((B, IMAGE_DIM), jnp.float32),
        grid_spec=pltpu.PrefetchScalarGridSpec(
            num_scalar_prefetch=0,
            grid=grid,
            in_specs=[
                pl.BlockSpec((bm, Z_PAD), lambda i: (i, 0)),   # x tile
                resident(w1), resident(b1),
                resident(w2), resident(b2),
                resident(w3), resident(b3),
                resident(w4), resident(b4),
            ],
            out_specs=pl.BlockSpec((bm, IMAGE_DIM), lambda i: (i, 0)),
        ),
        compiler_params=pltpu.CompilerParams(
            dimension_semantics=("parallel",),
            vmem_limit_bytes=48 * 1024 * 1024,
        ),
        cost_estimate=pl.CostEstimate(
            flops=flops,
            transcendentals=B * IMAGE_DIM,
            bytes_accessed=bytes_accessed,
        ),
    )(xp, w1, b1, w2, b2, w3, b3, w4, b4)
    return out


def generator_forward(x, prepped_params, *, block_m=512):
    """x: (B, Z_DIM) float32, prepped_params from prepare_params()."""
    kind = _device_kind()
    # bf16 VPU/EUP paths exist on v6e and newer; keep f32 elementwise on v5/v4/v3.
    elementwise_bf16 = not any(v in kind for v in ("v2", "v3", "v4", "v5"))
    two_tc = "v7" in kind
    return _generator_forward(x, prepped_params, block_m=block_m,
                              elementwise_bf16=elementwise_bf16, two_tc=two_tc)


# ---------------------------------------------------------------------------
# Init / reference / test
# ---------------------------------------------------------------------------
def init_params(key):
    """Deterministic synthetic init (uniform, PyTorch-Linear-like scale), f32."""
    dims = [(Z_DIM, H1), (H1, H2), (H2, H3), (H3, IMAGE_DIM)]
    params = {}
    for idx, (fan_in, fan_out) in enumerate(dims, start=1):
        key, kw, kb = jax.random.split(key, 3)
        bound = 1.0 / jnp.sqrt(jnp.float32(fan_in))
        params[f"w{idx}"] = jax.random.uniform(
            kw, (fan_in, fan_out), jnp.float32, -bound, bound)
        params[f"b{idx}"] = jax.random.uniform(
            kb, (1, fan_out), jnp.float32, -bound, bound)
    return params


def generator_reference(x, params):
    """Pure-JAX reference mirroring the kernel's bf16-in / f32-acc matmuls."""
    h = x.astype(jnp.bfloat16)
    for idx in range(1, 5):
        w = params[f"w{idx}"].astype(jnp.bfloat16)
        h = jnp.dot(h, w, preferred_element_type=jnp.float32) + params[f"b{idx}"]
        if idx < 4:
            h = jnp.where(h > 0, h, 0.2 * h).astype(jnp.bfloat16)
    return jnp.tanh(h)


if __name__ == "__main__":
    key = jax.random.PRNGKey(0)
    key, kx = jax.random.split(key)

    params = init_params(key)
    prepped = prepare_params(params)   # one-time bf16 cast + padding

    # Small batch (single grid step, partial tile on the batch dim).
    B = 16
    x = jax.random.normal(kx, (B, Z_DIM), jnp.float32)
    out = jax.block_until_ready(generator_forward(x, prepped))
    ref = generator_reference(x, params)
    assert out.shape == (B, IMAGE_DIM)
    assert bool(jnp.all(jnp.abs(out - ref) < 5e-2)), "mismatch vs reference (small)"
    assert bool(jnp.all(jnp.abs(out) <= 1.0 + 1e-6))

    # Non-multiple batch, default tiling.
    B2 = 300
    x2 = jax.random.normal(jax.random.PRNGKey(1), (B2, Z_DIM), jnp.float32)
    out2 = jax.block_until_ready(generator_forward(x2, prepped))
    ref2 = generator_reference(x2, params)
    assert out2.shape == (B2, IMAGE_DIM)
    assert bool(jnp.all(jnp.abs(out2 - ref2) < 5e-2)), "mismatch vs reference (default tile)"

    # Force a multi-step grid with a partial last tile (300 = 2*128 + 44).
    out3 = jax.block_until_ready(generator_forward(x2, prepped, block_m=128))
    assert out3.shape == (B2, IMAGE_DIM)
    assert bool(jnp.all(jnp.abs(out3 - ref2) < 5e-2)), "mismatch vs reference (multi-step)"

    print("KERNEL_OK")
</pallas_src>

<mosaic_0001>
module attributes {stable_mosaic.version = 11 : i64} {
  func.func @generator_kernel(%arg0: i32, %arg1: memref<16x128xf32, #tpu.memory_space<vmem>>, %arg2: memref<128x256xbf16, #tpu.memory_space<vmem>>, %arg3: memref<1x256xf32, #tpu.memory_space<vmem>>, %arg4: memref<256x512xbf16, #tpu.memory_space<vmem>>, %arg5: memref<1x512xf32, #tpu.memory_space<vmem>>, %arg6: memref<512x1024xbf16, #tpu.memory_space<vmem>>, %arg7: memref<1x1024xf32, #tpu.memory_space<vmem>>, %arg8: memref<1024x784xbf16, #tpu.memory_space<vmem>>, %arg9: memref<1x784xf32, #tpu.memory_space<vmem>>, %arg10: memref<16x784xf32, #tpu.memory_space<vmem>>) attributes {dimension_semantics = [#tpu.dimension_semantics<parallel>], iteration_bounds = array<i64: 1>, scalar_prefetch = 0 : i64, scratch_operands = 0 : i64, tpu.core_type = #tpu.core_type<tc>, window_params = [{transform_indices = @transform_0, window_bounds = array<i64: 16, 128>}, {pipeline_mode = #tpu.pipeline_mode<synchronous>, transform_indices = @transform_1, window_bounds = array<i64: 128, 256>}, {pipeline_mode = #tpu.pipeline_mode<synchronous>, transform_indices = @transform_2, window_bounds = array<i64: 1, 256>}, {pipeline_mode = #tpu.pipeline_mode<synchronous>, transform_indices = @transform_3, window_bounds = array<i64: 256, 512>}, {pipeline_mode = #tpu.pipeline_mode<synchronous>, transform_indices = @transform_4, window_bounds = array<i64: 1, 512>}, {pipeline_mode = #tpu.pipeline_mode<synchronous>, transform_indices = @transform_5, window_bounds = array<i64: 512, 1024>}, {pipeline_mode = #tpu.pipeline_mode<synchronous>, transform_indices = @transform_6, window_bounds = array<i64: 1, 1024>}, {pipeline_mode = #tpu.pipeline_mode<synchronous>, transform_indices = @transform_7, window_bounds = array<i64: 1024, 784>}, {pipeline_mode = #tpu.pipeline_mode<synchronous>, transform_indices = @transform_8, window_bounds = array<i64: 1, 784>}, {transform_indices = @transform_9, window_bounds = array<i64: 16, 784>}]} {
    %c0 = arith.constant 0 : index
    %c0_0 = arith.constant 0 : index
    %0 = vector.load %arg1[%c0, %c0_0] : memref<16x128xf32, #tpu.memory_space<vmem>>, vector<16x128xf32>
    %1 = arith.truncf %0 : vector<16x128xf32> to vector<16x128xbf16>
    %c0_1 = arith.constant 0 : index
    %c0_2 = arith.constant 0 : index
    %2 = vector.load %arg2[%c0_1, %c0_2] : memref<128x256xbf16, #tpu.memory_space<vmem>>, vector<128x256xbf16>
    %cst = arith.constant dense<0.000000e+00> : vector<16x256xf32>
    %3 = tpu.matmul %1, %2, %cst {dimension_numbers = #tpu.dot_dimension_numbers<[1], [0], [0], [1], [0, 0, 1, 1], [], []>} : vector<16x128xbf16>, vector<128x256xbf16>, vector<16x256xf32> -> vector<16x256xf32>
    %4 = arith.truncf %3 : vector<16x256xf32> to vector<16x256xbf16>
    %c0_3 = arith.constant 0 : index
    %c0_4 = arith.constant 0 : index
    %5 = vector.load %arg3[%c0_3, %c0_4] : memref<1x256xf32, #tpu.memory_space<vmem>>, vector<1x256xf32>
    %6 = arith.truncf %5 : vector<1x256xf32> to vector<1x256xbf16>
    %7 = vector.broadcast %6 : vector<1x256xbf16> to vector<16x256xbf16>
    %8 = arith.addf %4, %7 : vector<16x256xbf16>
    %cst_5 = arith.constant 2.001950e-01 : bf16
    %9 = vector.broadcast %cst_5 : bf16 to vector<16x256xbf16>
    %10 = arith.mulf %9, %8 : vector<16x256xbf16>
    %11 = arith.maximumf %8, %10 : vector<16x256xbf16>
    %c0_6 = arith.constant 0 : index
    %c0_7 = arith.constant 0 : index
    %12 = vector.load %arg4[%c0_6, %c0_7] : memref<256x512xbf16, #tpu.memory_space<vmem>>, vector<256x512xbf16>
    %cst_8 = arith.constant dense<0.000000e+00> : vector<16x512xf32>
    %13 = tpu.matmul %11, %12, %cst_8 {dimension_numbers = #tpu.dot_dimension_numbers<[1], [0], [0], [1], [0, 0, 1, 1], [], []>} : vector<16x256xbf16>, vector<256x512xbf16>, vector<16x512xf32> -> vector<16x512xf32>
    %14 = arith.truncf %13 : vector<16x512xf32> to vector<16x512xbf16>
    %c0_9 = arith.constant 0 : index
    %c0_10 = arith.constant 0 : index
    %15 = vector.load %arg5[%c0_9, %c0_10] : memref<1x512xf32, #tpu.memory_space<vmem>>, vector<1x512xf32>
    %16 = arith.truncf %15 : vector<1x512xf32> to vector<1x512xbf16>
    %17 = vector.broadcast %16 : vector<1x512xbf16> to vector<16x512xbf16>
    %18 = arith.addf %14, %17 : vector<16x512xbf16>
    %cst_11 = arith.constant 2.001950e-01 : bf16
    %19 = vector.broadcast %cst_11 : bf16 to vector<16x512xbf16>
    %20 = arith.mulf %19, %18 : vector<16x512xbf16>
    %21 = arith.maximumf %18, %20 : vector<16x512xbf16>
    %c0_12 = arith.constant 0 : index
    %c0_13 = arith.constant 0 : index
    %22 = vector.load %arg6[%c0_12, %c0_13] : memref<512x1024xbf16, #tpu.memory_space<vmem>>, vector<512x1024xbf16>
    %cst_14 = arith.constant dense<0.000000e+00> : vector<16x1024xf32>
    %23 = tpu.matmul %21, %22, %cst_14 {dimension_numbers = #tpu.dot_dimension_numbers<[1], [0], [0], [1], [0, 0, 1, 1], [], []>} : vector<16x512xbf16>, vector<512x1024xbf16>, vector<16x1024xf32> -> vector<16x1024xf32>
    %24 = arith.truncf %23 : vector<16x1024xf32> to vector<16x1024xbf16>
    %c0_15 = arith.constant 0 : index
    %c0_16 = arith.constant 0 : index
    %25 = vector.load %arg7[%c0_15, %c0_16] : memref<1x1024xf32, #tpu.memory_space<vmem>>, vector<1x1024xf32>
    %26 = arith.truncf %25 : vector<1x1024xf32> to vector<1x1024xbf16>
    %27 = vector.broadcast %26 : vector<1x1024xbf16> to vector<16x1024xbf16>
    %28 = arith.addf %24, %27 : vector<16x1024xbf16>
    %cst_17 = arith.constant 2.001950e-01 : bf16
    %29 = vector.broadcast %cst_17 : bf16 to vector<16x1024xbf16>
    %30 = arith.mulf %29, %28 : vector<16x1024xbf16>
    %31 = arith.maximumf %28, %30 : vector<16x1024xbf16>
    %c0_18 = arith.constant 0 : index
    %c0_19 = arith.constant 0 : index
    %32 = vector.load %arg8[%c0_18, %c0_19] : memref<1024x784xbf16, #tpu.memory_space<vmem>>, vector<1024x784xbf16>
    %cst_20 = arith.constant dense<0.000000e+00> : vector<16x784xf32>
    %33 = tpu.matmul %31, %32, %cst_20 {dimension_numbers = #tpu.dot_dimension_numbers<[1], [0], [0], [1], [0, 0, 1, 1], [], []>} : vector<16x1024xbf16>, vector<1024x784xbf16>, vector<16x784xf32> -> vector<16x784xf32>
    %34 = arith.truncf %33 : vector<16x784xf32> to vector<16x784xbf16>
    %c0_21 = arith.constant 0 : index
    %c0_22 = arith.constant 0 : index
    %35 = vector.load %arg9[%c0_21, %c0_22] : memref<1x784xf32, #tpu.memory_space<vmem>>, vector<1x784xf32>
    %36 = arith.truncf %35 : vector<1x784xf32> to vector<1x784xbf16>
    %37 = vector.broadcast %36 : vector<1x784xbf16> to vector<16x784xbf16>
    %38 = arith.addf %34, %37 : vector<16x784xbf16>
    %39 = math.tanh %38 : vector<16x784xbf16>
    %40 = arith.extf %39 : vector<16x784xbf16> to vector<16x784xf32>
    %c0_23 = arith.constant 0 : index
    %c0_24 = arith.constant 0 : index
    %41 = vector.load %arg10[%c0_23, %c0_24] : memref<16x784xf32, #tpu.memory_space<vmem>>, vector<16x784xf32>
    tpu.vector_store %arg10[%c0_23, %c0_24], %40 {strides = array<i32>} : memref<16x784xf32, #tpu.memory_space<vmem>>, vector<16x784xf32>,
    return
  }
  func.func @transform_0(%arg0: i32) -> (i32, i32) {
    %c0_i32 = arith.constant 0 : i32
    %c0_i32_0 = arith.constant 0 : i32
    return %arg0, %c0_i32 : i32, i32
  }
  func.func @transform_1(%arg0: i32) -> (i32, i32) {
    %c0_i32 = arith.constant 0 : i32
    %c0_i32_0 = arith.constant 0 : i32
    %c0_i32_1 = arith.constant 0 : i32
    return %c0_i32, %c0_i32_0 : i32, i32
  }
  func.func @transform_2(%arg0: i32) -> (i32, i32) {
    %c0_i32 = arith.constant 0 : i32
    %c0_i32_0 = arith.constant 0 : i32
    %c0_i32_1 = arith.constant 0 : i32
    return %c0_i32, %c0_i32_0 : i32, i32
  }
  func.func @transform_3(%arg0: i32) -> (i32, i32) {
    %c0_i32 = arith.constant 0 : i32
    %c0_i32_0 = arith.constant 0 : i32
    %c0_i32_1 = arith.constant 0 : i32
    return %c0_i32, %c0_i32_0 : i32, i32
  }
  func.func @transform_4(%arg0: i32) -> (i32, i32) {
    %c0_i32 = arith.constant 0 : i32
    %c0_i32_0 = arith.constant 0 : i32
    %c0_i32_1 = arith.constant 0 : i32
    return %c0_i32, %c0_i32_0 : i32, i32
  }
  func.func @transform_5(%arg0: i32) -> (i32, i32) {
    %c0_i32 = arith.constant 0 : i32
    %c0_i32_0 = arith.constant 0 : i32
    %c0_i32_1 = arith.constant 0 : i32
    return %c0_i32, %c0_i32_0 : i32, i32
  }
  func.func @transform_6(%arg0: i32) -> (i32, i32) {
    %c0_i32 = arith.constant 0 : i32
    %c0_i32_0 = arith.constant 0 : i32
    %c0_i32_1 = arith.constant 0 : i32
    return %c0_i32, %c0_i32_0 : i32, i32
  }
  func.func @transform_7(%arg0: i32) -> (i32, i32) {
    %c0_i32 = arith.constant 0 : i32
    %c0_i32_0 = arith.constant 0 : i32
    %c0_i32_1 = arith.constant 0 : i32
    return %c0_i32, %c0_i32_0 : i32, i32
  }
  func.func @transform_8(%arg0: i32) -> (i32, i32) {
    %c0_i32 = arith.constant 0 : i32
    %c0_i32_0 = arith.constant 0 : i32
    %c0_i32_1 = arith.constant 0 : i32
    return %c0_i32, %c0_i32_0 : i32, i32
  }
  func.func @transform_9(%arg0: i32) -> (i32, i32) {
    %c0_i32 = arith.constant 0 : i32
    %c0_i32_0 = arith.constant 0 : i32
    return %arg0, %c0_i32 : i32, i32
  }
}

</mosaic_0001>

<llo_original>
// kernel: _generator_forward.1
$region0: #{_generator_forward.1}
  #allocation0 [shape = 'u32[]', space=smem, size = 0x4, offset = 0x4, fixed_abs, tag = 'smem constant byte address 0x4 - core index']
  #allocation1 [shape = 'u32[144,128]{1,0:T(1,128)}', space=vmem, size = 0x12000, scoped, tag = 'internal scratch']
  %s0 = inlined_call_operand.vmem [shape: f32[16,128], index: 0, kind: input, shape index: {}]
  %s1 = inlined_call_operand.vmem [shape: bf16[128,256], index: 1, kind: input, shape index: {}]
  %s2 = inlined_call_operand.vmem [shape: f32[1,256], index: 2, kind: input, shape index: {}]
  %s3 = inlined_call_operand.vmem [shape: bf16[256,512], index: 3, kind: input, shape index: {}]
  %s4 = inlined_call_operand.vmem [shape: f32[1,512], index: 4, kind: input, shape index: {}]
  %s5 = inlined_call_operand.vmem [shape: bf16[512,1024], index: 5, kind: input, shape index: {}]
  %s6 = inlined_call_operand.vmem [shape: f32[1,1024], index: 6, kind: input, shape index: {}]
  %s7 = inlined_call_operand.vmem [shape: bf16[1024,784], index: 7, kind: input, shape index: {}]
  %s8 = inlined_call_operand.vmem [shape: f32[1,784], index: 8, kind: input, shape index: {}]
  %s9 = inlined_call_operand.hbm [shape: f32[16,784], index: 9, kind: output, shape index: {}]
  %s10 = sld [smem:[#allocation0]]
  $region46: #{_generator_forward.1} parent=0
    _
  %s12 = ssub.s32 1, %s10
  %s13 = scalar_select 0, %s12, %s10
  $region1: #{_generator_forward.1} parent=0
    #allocation2 [shape = 'u8[57344]{0}', space=vmem, size = 0xe000, scoped, tag = 'output window, operand 0, single buffered']
    #allocation3 [shape = 's32[1]{0}', space=sflag, size = 0x4, scoped, tag = 'scoped memory for _generator_forward.1']
    %14 = vsyncpa [#allocation3], 0
    // Predicated region
    $region2: #{_generator_forward.1} parent=1 // pred_check
      _
    $region3: #{_generator_forward.1} parent=1 // pred_check_branch
      %16 = sbr.rel (0) target = $region5
    $region4: #{_generator_forward.1} parent=1 // pred_region
      _
    $region5: #{_generator_forward.1} parent=1 // pred_fallthru
      _
    // Predicated region
    $region6: #{_generator_forward.1} parent=1 // pred_check
      _
    $region7: #{_generator_forward.1} parent=1 // pred_check_branch
      %18 = sbr.rel (0) target = $region9
    $region8: #{_generator_forward.1} parent=1 // pred_region
      _
    $region9: #{_generator_forward.1} parent=1 // pred_fallthru
      _
    // Predicated region
    $region10: #{_generator_forward.1} parent=1 // pred_check
      _
    $region11: #{_generator_forward.1} parent=1 // pred_check_branch
      %20 = sbr.rel (0) target = $region13
    $region12: #{_generator_forward.1} parent=1 // pred_region
      _
    $region13: #{_generator_forward.1} parent=1 // pred_fallthru
      _
    // Predicated region
    $region14: #{_generator_forward.1} parent=1 // pred_check
      _
    $region15: #{_generator_forward.1} parent=1 // pred_check_branch
      %22 = sbr.rel (0) target = $region17
    $region16: #{_generator_forward.1} parent=1 // pred_region
      _
    $region17: #{_generator_forward.1} parent=1 // pred_fallthru
      _
    // Predicated region
    $region18: #{_generator_forward.1} parent=1 // pred_check
      _
    $region19: #{_generator_forward.1} parent=1 // pred_check_branch
      %24 = sbr.rel (0) target = $region21
    $region20: #{_generator_forward.1} parent=1 // pred_region
      _
    $region21: #{_generator_forward.1} parent=1 // pred_fallthru
      _
    // Predicated region
    $region22: #{_generator_forward.1} parent=1 // pred_check
      _
    $region23: #{_generator_forward.1} parent=1 // pred_check_branch
      %26 = sbr.rel (0) target = $region25
    $region24: #{_generator_forward.1} parent=1 // pred_region
      _
    $region25: #{_generator_forward.1} parent=1 // pred_fallthru
      _
    // Predicated region
    $region26: #{_generator_forward.1} parent=1 // pred_check
      _
    $region27: #{_generator_forward.1} parent=1 // pred_check_branch
      %28 = sbr.rel (0) target = $region29
    $region28: #{_generator_forward.1} parent=1 // pred_region
      _
    $region29: #{_generator_forward.1} parent=1 // pred_fallthru
      _
    // Predicated region
    $region30: #{_generator_forward.1} parent=1 // pred_check
      _
    $region31: #{_generator_forward.1} parent=1 // pred_check_branch
      %30 = sbr.rel (0) target = $region33
    $region32: #{_generator_forward.1} parent=1 // pred_region
      _
    $region33: #{_generator_forward.1} parent=1 // pred_fallthru
      _
    // Predicated region
    $region34: #{_generator_forward.1} parent=1 // pred_check
      _
    $region35: #{_generator_forward.1} parent=1 // pred_check_branch
      %32 = sbr.rel (0) target = $region37
    $region36: #{_generator_forward.1} parent=1 // pred_region
      _
    $region37: #{_generator_forward.1} parent=1 // pred_fallthru
      _
    %v35 = vld [vmem:[%s0] sm:$0xff]
    %v36 = vld [vmem:[%s0 + $0x8] sm:$0xff]
    %v37 = vpack.c.bf16 %v36, %v35
    %v38 = vld [vmem:[%s1] sm:$0xff]
    %v39 = vld [vmem:[%s1 + $0x8] sm:$0xff]
    %v40 = vld [vmem:[%s1 + $0x10] sm:$0xff]
    %v41 = vld [vmem:[%s1 + $0x18] sm:$0xff]
    %v42 = vld [vmem:[%s1 + $0x20] sm:$0xff]
    %v43 = vld [vmem:[%s1 + $0x28] sm:$0xff]
    %v44 = vld [vmem:[%s1 + $0x30] sm:$0xff]
    %v45 = vld [vmem:[%s1 + $0x38] sm:$0xff]
    %v46 = vld [vmem:[%s1 + $0x40] sm:$0xff]
    %v47 = vld [vmem:[%s1 + $0x48] sm:$0xff]
    %v48 = vld [vmem:[%s1 + $0x50] sm:$0xff]
    %v49 = vld [vmem:[%s1 + $0x58] sm:$0xff]
    %v50 = vld [vmem:[%s1 + $0x60] sm:$0xff]
    %v51 = vld [vmem:[%s1 + $0x68] sm:$0xff]
    %v52 = vld [vmem:[%s1 + $0x70] sm:$0xff]
    %v53 = vld [vmem:[%s1 + $0x78] sm:$0xff]
    %v70 = vunpack.c.l.b16 %v38
    %v71 = vunpack.c.h.b16 %v38
    %v72 = vunpack.c.l.b16 %v39
    %v73 = vunpack.c.h.b16 %v39
    %v74 = vunpack.c.l.b16 %v40
    %v75 = vunpack.c.h.b16 %v40
    %v76 = vunpack.c.l.b16 %v41
    %v77 = vunpack.c.h.b16 %v41
    %v78 = vunpack.c.l.b16 %v42
    %v79 = vunpack.c.h.b16 %v42
    %v80 = vunpack.c.l.b16 %v43
    %v81 = vunpack.c.h.b16 %v43
    %v82 = vunpack.c.l.b16 %v44
    %v83 = vunpack.c.h.b16 %v44
    %v84 = vunpack.c.l.b16 %v45
    %v85 = vunpack.c.h.b16 %v45
    %v86 = vunpack.c.l.b16 %v46
    %v87 = vunpack.c.h.b16 %v46
    %v88 = vunpack.c.l.b16 %v47
    %v89 = vunpack.c.h.b16 %v47
    %v90 = vunpack.c.l.b16 %v48
    %v91 = vunpack.c.h.b16 %v48
    %v92 = vunpack.c.l.b16 %v49
    %v93 = vunpack.c.h.b16 %v49
    %v94 = vunpack.c.l.b16 %v50
    %v95 = vunpack.c.h.b16 %v50
    %v96 = vunpack.c.l.b16 %v51
    %v97 = vunpack.c.h.b16 %v51
    %v98 = vunpack.c.l.b16 %v52
    %v99 = vunpack.c.h.b16 %v52
    %v100 = vunpack.c.l.b16 %v53
    %v101 = vunpack.c.h.b16 %v53
    %v102 = vpack.c.b16 %v72, %v70
    %v103 = vpack.c.b16 %v73, %v71
    %v104 = vpack.c.b16 %v76, %v74
    %v105 = vpack.c.b16 %v77, %v75
    %v106 = vpack.c.b16 %v80, %v78
    %v107 = vpack.c.b16 %v81, %v79
    %v108 = vpack.c.b16 %v84, %v82
    %v109 = vpack.c.b16 %v85, %v83
    %v110 = vpack.c.b16 %v88, %v86
    %v111 = vpack.c.b16 %v89, %v87
    %v112 = vpack.c.b16 %v92, %v90
    %v113 = vpack.c.b16 %v93, %v91
    %v114 = vpack.c.b16 %v96, %v94
    %v115 = vpack.c.b16 %v97, %v95
    %v116 = vpack.c.b16 %v100, %v98
    %v117 = vpack.c.b16 %v101, %v99
    %134 = vmatprep.subr.bf16.mxu0 %v117
    %135 = vmatpush1.bf16.msra.mxu0 %v116
    %136 = vmatprep.subr.bf16.mxu0 %v115
    %137 = vmatpush1.bf16.msra.mxu0 %v114
    %138 = vmatprep.subr.bf16.mxu0 %v113
    %139 = vmatpush1.bf16.msra.mxu0 %v112
    %140 = vmatprep.subr.bf16.mxu0 %v111
    %141 = vmatpush1.bf16.msra.mxu0 %v110
    %142 = vmatprep.subr.bf16.mxu0 %v109
    %143 = vmatpush1.bf16.msra.mxu0 %v108
    %144 = vmatprep.subr.bf16.mxu0 %v107
    %145 = vmatpush1.bf16.msra.mxu0 %v106
    %146 = vmatprep.subr.bf16.mxu0 %v105
    %147 = vmatpush1.bf16.msra.mxu0 %v104
    %148 = vmatprep.subr.bf16.mxu0 %v103
    %149 = vmatpush1.bf16.msra.mxu0 %v102
    %150 = vmatprep.subr.bf16.mxu0 0
    %151 = vmatpush2.bf16.msra.mxu0 0
    %152 = vmatprep.subr.bf16.mxu0 0
    %153 = vmatpush2.bf16.msra.mxu0 0
    %154 = vmatprep.subr.bf16.mxu0 0
    %155 = vmatpush2.bf16.msra.mxu0 0
    %156 = vmatprep.subr.bf16.mxu0 0
    %157 = vmatpush2.bf16.msra.mxu0 0
    %158 = vmatprep.subr.bf16.mxu0 0
    %159 = vmatpush2.bf16.msra.mxu0 0
    %160 = vmatprep.subr.bf16.mxu0 0
    %161 = vmatpush2.bf16.msra.mxu0 0
    %162 = vmatprep.subr.bf16.mxu0 0
    %163 = vmatpush2.bf16.msra.mxu0 0
    %164 = vmatprep.subr.bf16.mxu0 0
    %165 = vmatpush2.bf16.msra.mxu0 0
    %166 = vmatprep.mubr.bf16.mxu0 0
    %167 = vmatmul.mubr.bf16.gmra.mxu0 %v37
    %v168 = vpop.f32.mrf.mxu0
    %v169 = vadd.f32 0.0, %v168
    %v170 = vpop.f32.mrf.mxu0
    %v171 = vadd.f32 0.0, %v170
    %v172 = vpop.f32.mrf.mxu0
    %v173 = vadd.f32 0.0, %v172
    %v174 = vpop.f32.mrf.mxu0
    %v175 = vadd.f32 0.0, %v174
    %176 = vdwg.mxu0
    %v177 = vpack.c.bf16 %v173, %v169
    %v178 = vpack.c.bf16 %v175, %v171
    %v179 = vld [vmem:[%s2] sm:$0x3]
    %v181 = vlaneseq
    %v182 = vshrl.u32 %v181, 7
    %v183 = vsub.s32 0, %v182
    %v184 = vrot.slane %v179, %v183
    %v185 = vlaneseq
    %v186 = vshrl.u32 %v185, 7
    %v187 = vsub.s32 1, %v186
    %v188 = vrot.slane %v179, %v187
    %v191 = vpack.c.bf16 %v184, %v184
    %v192 = vpack.c.bf16 %v188, %v188
    %v194 = vpack.i.b16 %v191, %v191
    %v196 = vlaneseq
    %v197 = vshrl.u32 %v196, 7
    %v198 = vsub.s32 0, %v197
    %v199 = vrot.slane %v194, %v198
    %v201 = vpack.i.b16 %v192, %v192
    %v203 = vlaneseq
    %v204 = vshrl.u32 %v203, 7
    %v205 = vsub.s32 0, %v204
    %v206 = vrot.slane %v201, %v205
    %v207 = vadd.bf16 %v177, %v199
    %v208 = vadd.bf16 %v178, %v206
    %v209 = vmul.bf16 %v207, 1045249613
    %v210 = vmul.bf16 %v208, 1045249613
    %v211 = vmax.bf16 %v207, %v209
    %v212 = vmax.bf16 %v208, %v210
    %v213 = vld [vmem:[%s3] sm:$0xff]
    %v214 = vld [vmem:[%s3 + $0x8] sm:$0xff]
    %v215 = vld [vmem:[%s3 + $0x10] sm:$0xff]
    %v216 = vld [vmem:[%s3 + $0x18] sm:$0xff]
    %v217 = vld [vmem:[%s3 + $0x20] sm:$0xff]
    %v218 = vld [vmem:[%s3 + $0x28] sm:$0xff]
    %v219 = vld [vmem:[%s3 + $0x30] sm:$0xff]
    %v220 = vld [vmem:[%s3 + $0x38] sm:$0xff]
    %v221 = vld [vmem:[%s3 + $0x40] sm:$0xff]
    %v222 = vld [vmem:[%s3 + $0x48] sm:$0xff]
    %v223 = vld [vmem:[%s3 + $0x50] sm:$0xff]
    %v224 = vld [vmem:[%s3 + $0x58] sm:$0xff]
    %v225 = vld [vmem:[%s3 + $0x60] sm:$0xff]
    %v226 = vld [vmem:[%s3 + $0x68] sm:$0xff]
    %v227 = vld [vmem:[%s3 + $0x70] sm:$0xff]
    %v228 = vld [vmem:[%s3 + $0x78] sm:$0xff]
    %v229 = vld [vmem:[%s3 + $0x80] sm:$0xff]
    %v230 = vld [vmem:[%s3 + $0x88] sm:$0xff]
    %v231 = vld [vmem:[%s3 + $0x90] sm:$0xff]
    %v232 = vld [vmem:[%s3 + $0x98] sm:$0xff]
    %v233 = vld [vmem:[%s3 + $0xa0] sm:$0xff]
    %v234 = vld [vmem:[%s3 + $0xa8] sm:$0xff]
    %v235 = vld [vmem:[%s3 + $0xb0] sm:$0xff]
    %v236 = vld [vmem:[%s3 + $0xb8] sm:$0xff]
    %v237 = vld [vmem:[%s3 + $0xc0] sm:$0xff]
    %v238 = vld [vmem:[%s3 + $0xc8] sm:$0xff]
    %v239 = vld [vmem:[%s3 + $0xd0] sm:$0xff]
    %v240 = vld [vmem:[%s3 + $0xd8] sm:$0xff]
    %v241 = vld [vmem:[%s3 + $0xe0] sm:$0xff]
    %v242 = vld [vmem:[%s3 + $0xe8] sm:$0xff]
    %v243 = vld [vmem:[%s3 + $0xf0] sm:$0xff]
    %v244 = vld [vmem:[%s3 + $0xf8] sm:$0xff]
    %v245 = vld [vmem:[%s3 + $0x100] sm:$0xff]
    %v246 = vld [vmem:[%s3 + $0x108] sm:$0xff]
    %v247 = vld [vmem:[%s3 + $0x110] sm:$0xff]
    %v248 = vld [vmem:[%s3 + $0x118] sm:$0xff]
    %v249 = vld [vmem:[%s3 + $0x120] sm:$0xff]
    %v250 = vld [vmem:[%s3 + $0x128] sm:$0xff]
    %v251 = vld [vmem:[%s3 + $0x130] sm:$0xff]
    %v252 = vld [vmem:[%s3 + $0x138] sm:$0xff]
    %v253 = vld [vmem:[%s3 + $0x140] sm:$0xff]
    %v254 = vld [vmem:[%s3 + $0x148] sm:$0xff]
    %v255 = vld [vmem:[%s3 + $0x150] sm:$0xff]
    %v256 = vld [vmem:[%s3 + $0x158] sm:$0xff]
    %v257 = vld [vmem:[%s3 + $0x160] sm:$0xff]
    %v258 = vld [vmem:[%s3 + $0x168] sm:$0xff]
    %v259 = vld [vmem:[%s3 + $0x170] sm:$0xff]
    %v260 = vld [vmem:[%s3 + $0x178] sm:$0xff]
    %v261 = vld [vmem:[%s3 + $0x180] sm:$0xff]
    %v262 = vld [vmem:[%s3 + $0x188] sm:$0xff]
    %v263 = vld [vmem:[%s3 + $0x190] sm:$0xff]
    %v264 = vld [vmem:[%s3 + $0x198] sm:$0xff]
    %v265 = vld [vmem:[%s3 + $0x1a0] sm:$0xff]
    %v266 = vld [vmem:[%s3 + $0x1a8] sm:$0xff]
    %v267 = vld [vmem:[%s3 + $0x1b0] sm:$0xff]
    %v268 = vld [vmem:[%s3 + $0x1b8] sm:$0xff]
    %v269 = vld [vmem:[%s3 + $0x1c0] sm:$0xff]
    %v270 = vld [vmem:[%s3 + $0x1c8] sm:$0xff]
    %v271 = vld [vmem:[%s3 + $0x1d0] sm:$0xff]
    %v272 = vld [vmem:[%s3 + $0x1d8] sm:$0xff]
    %v273 = vld [vmem:[%s3 + $0x1e0] sm:$0xff]
    %v274 = vld [vmem:[%s3 + $0x1e8] sm:$0xff]
    %v275 = vld [vmem:[%s3 + $0x1f0] sm:$0xff]
    %v276 = vld [vmem:[%s3 + $0x1f8] sm:$0xff]
    %v341 = vunpack.c.l.b16 %v213
    %v342 = vunpack.c.h.b16 %v213
    %v343 = vunpack.c.l.b16 %v214
    %v344 = vunpack.c.h.b16 %v214
    %v345 = vunpack.c.l.b16 %v215
    %v346 = vunpack.c.h.b16 %v215
    %v347 = vunpack.c.l.b16 %v216
    %v348 = vunpack.c.h.b16 %v216
    %v349 = vunpack.c.l.b16 %v217
    %v350 = vunpack.c.h.b16 %v217
    %v351 = vunpack.c.l.b16 %v218
    %v352 = vunpack.c.h.b16 %v218
    %v353 = vunpack.c.l.b16 %v219
    %v354 = vunpack.c.h.b16 %v219
    %v355 = vunpack.c.l.b16 %v220
    %v356 = vunpack.c.h.b16 %v220
    %v357 = vunpack.c.l.b16 %v221
    %v358 = vunpack.c.h.b16 %v221
    %v359 = vunpack.c.l.b16 %v222
    %v360 = vunpack.c.h.b16 %v222
    %v361 = vunpack.c.l.b16 %v223
    %v362 = vunpack.c.h.b16 %v223
    %v363 = vunpack.c.l.b16 %v224
    %v364 = vunpack.c.h.b16 %v224
    %v365 = vunpack.c.l.b16 %v225
    %v366 = vunpack.c.h.b16 %v225
    %v367 = vunpack.c.l.b16 %v226
    %v368 = vunpack.c.h.b16 %v226
    %v369 = vunpack.c.l.b16 %v227
    %v370 = vunpack.c.h.b16 %v227
    %v371 = vunpack.c.l.b16 %v228
    %v372 = vunpack.c.h.b16 %v228
    %v373 = vunpack.c.l.b16 %v229
    %v374 = vunpack.c.h.b16 %v229
    %v375 = vunpack.c.l.b16 %v230
    %v376 = vunpack.c.h.b16 %v230
    %v377 = vunpack.c.l.b16 %v231
    %v378 = vunpack.c.h.b16 %v231
    %v379 = vunpack.c.l.b16 %v232
    %v380 = vunpack.c.h.b16 %v232
    %v381 = vunpack.c.l.b16 %v233
    %v382 = vunpack.c.h.b16 %v233
    %v383 = vunpack.c.l.b16 %v234
    %v384 = vunpack.c.h.b16 %v234
    %v385 = vunpack.c.l.b16 %v235
    %v386 = vunpack.c.h.b16 %v235
    %v387 = vunpack.c.l.b16 %v236
    %v388 = vunpack.c.h.b16 %v236
    %v389 = vunpack.c.l.b16 %v237
    %v390 = vunpack.c.h.b16 %v237
    %v391 = vunpack.c.l.b16 %v238
    %v392 = vunpack.c.h.b16 %v238
    %v393 = vunpack.c.l.b16 %v239
    %v394 = vunpack.c.h.b16 %v239
    %v395 = vunpack.c.l.b16 %v240
    %v396 = vunpack.c.h.b16 %v240
    %v397 = vunpack.c.l.b16 %v241
    %v398 = vunpack.c.h.b16 %v241
    %v399 = vunpack.c.l.b16 %v242
    %v400 = vunpack.c.h.b16 %v242
    %v401 = vunpack.c.l.b16 %v243
    %v402 = vunpack.c.h.b16 %v243
    %v403 = vunpack.c.l.b16 %v244
    %v404 = vunpack.c.h.b16 %v244
    %v405 = vunpack.c.l.b16 %v245
    %v406 = vunpack.c.h.b16 %v245
    %v407 = vunpack.c.l.b16 %v246
    %v408 = vunpack.c.h.b16 %v246
    %v409 = vunpack.c.l.b16 %v247
    %v410 = vunpack.c.h.b16 %v247
    %v411 = vunpack.c.l.b16 %v248
    %v412 = vunpack.c.h.b16 %v248
    %v413 = vunpack.c.l.b16 %v249
    %v414 = vunpack.c.h.b16 %v249
    %v415 = vunpack.c.l.b16 %v250
    %v416 = vunpack.c.h.b16 %v250
    %v417 = vunpack.c.l.b16 %v251
    %v418 = vunpack.c.h.b16 %v251
    %v419 = vunpack.c.l.b16 %v252
    %v420 = vunpack.c.h.b16 %v252
    %v421 = vunpack.c.l.b16 %v253
    %v422 = vunpack.c.h.b16 %v253
    %v423 = vunpack.c.l.b16 %v254
    %v424 = vunpack.c.h.b16 %v254
    %v425 = vunpack.c.l.b16 %v255
    %v426 = vunpack.c.h.b16 %v255
    %v427 = vunpack.c.l.b16 %v256
    %v428 = vunpack.c.h.b16 %v256
    %v429 = vunpack.c.l.b16 %v257
    %v430 = vunpack.c.h.b16 %v257
    %v431 = vunpack.c.l.b16 %v258
    %v432 = vunpack.c.h.b16 %v258
    %v433 = vunpack.c.l.b16 %v259
    %v434 = vunpack.c.h.b16 %v259
    %v435 = vunpack.c.l.b16 %v260
    %v436 = vunpack.c.h.b16 %v260
    %v437 = vunpack.c.l.b16 %v261
    %v438 = vunpack.c.h.b16 %v261
    %v439 = vunpack.c.l.b16 %v262
    %v440 = vunpack.c.h.b16 %v262
    %v441 = vunpack.c.l.b16 %v263
    %v442 = vunpack.c.h.b16 %v263
    %v443 = vunpack.c.l.b16 %v264
    %v444 = vunpack.c.h.b16 %v264
    %v445 = vunpack.c.l.b16 %v265
    %v446 = vunpack.c.h.b16 %v265
    %v447 = vunpack.c.l.b16 %v266
    %v448 = vunpack.c.h.b16 %v266
    %v449 = vunpack.c.l.b16 %v267
    %v450 = vunpack.c.h.b16 %v267
    %v451 = vunpack.c.l.b16 %v268
    %v452 = vunpack.c.h.b16 %v268
    %v453 = vunpack.c.l.b16 %v269
    %v454 = vunpack.c.h.b16 %v269
    %v455 = vunpack.c.l.b16 %v270
    %v456 = vunpack.c.h.b16 %v270
    %v457 = vunpack.c.l.b16 %v271
    %v458 = vunpack.c.h.b16 %v271
    %v459 = vunpack.c.l.b16 %v272
    %v460 = vunpack.c.h.b16 %v272
    %v461 = vunpack.c.l.b16 %v273
    %v462 = vunpack.c.h.b16 %v273
    %v463 = vunpack.c.l.b16 %v274
    %v464 = vunpack.c.h.b16 %v274
    %v465 = vunpack.c.l.b16 %v275
    %v466 = vunpack.c.h.b16 %v275
    %v467 = vunpack.c.l.b16 %v276
    %v468 = vunpack.c.h.b16 %v276
    %v469 = vpack.c.b16 %v345, %v341
    %v470 = vpack.c.b16 %v346, %v342
    %v471 = vpack.c.b16 %v347, %v343
    %v472 = vpack.c.b16 %v348, %v344
    %v473 = vpack.c.b16 %v353, %v349
    %v474 = vpack.c.b16 %v354, %v350
    %v475 = vpack.c.b16 %v355, %v351
    %v476 = vpack.c.b16 %v356, %v352
    %v477 = vpack.c.b16 %v361, %v357
    %v478 = vpack.c.b16 %v362, %v358
    %v479 = vpack.c.b16 %v363, %v359
    %v480 = vpack.c.b16 %v364, %v360
    %v481 = vpack.c.b16 %v369, %v365
    %v482 = vpack.c.b16 %v370, %v366
    %v483 = vpack.c.b16 %v371, %v367
    %v484 = vpack.c.b16 %v372, %v368
    %v485 = vpack.c.b16 %v377, %v373
    %v486 = vpack.c.b16 %v378, %v374
    %v487 = vpack.c.b16 %v379, %v375
    %v488 = vpack.c.b16 %v380, %v376
    %v489 = vpack.c.b16 %v385, %v381
    %v490 = vpack.c.b16 %v386, %v382
    %v491 = vpack.c.b16 %v387, %v383
    %v492 = vpack.c.b16 %v388, %v384
    %v493 = vpack.c.b16 %v393, %v389
    %v494 = vpack.c.b16 %v394, %v390
    %v495 = vpack.c.b16 %v395, %v391
    %v496 = vpack.c.b16 %v396, %v392
    %v497 = vpack.c.b16 %v401, %v397
    %v498 = vpack.c.b16 %v402, %v398
    %v499 = vpack.c.b16 %v403, %v399
    %v500 = vpack.c.b16 %v404, %v400
    %v501 = vpack.c.b16 %v409, %v405
    %v502 = vpack.c.b16 %v410, %v406
    %v503 = vpack.c.b16 %v411, %v407
    %v504 = vpack.c.b16 %v412, %v408
    %v505 = vpack.c.b16 %v417, %v413
    %v506 = vpack.c.b16 %v418, %v414
    %v507 = vpack.c.b16 %v419, %v415
    %v508 = vpack.c.b16 %v420, %v416
    %v509 = vpack.c.b16 %v425, %v421
    %v510 = vpack.c.b16 %v426, %v422
    %v511 = vpack.c.b16 %v427, %v423
    %v512 = vpack.c.b16 %v428, %v424
    %v513 = vpack.c.b16 %v433, %v429
    %v514 = vpack.c.b16 %v434, %v430
    %v515 = vpack.c.b16 %v435, %v431
    %v516 = vpack.c.b16 %v436, %v432
    %v517 = vpack.c.b16 %v441, %v437
    %v518 = vpack.c.b16 %v442, %v438
    %v519 = vpack.c.b16 %v443, %v439
    %v520 = vpack.c.b16 %v444, %v440
    %v521 = vpack.c.b16 %v449, %v445
    %v522 = vpack.c.b16 %v450, %v446
    %v523 = vpack.c.b16 %v451, %v447
    %v524 = vpack.c.b16 %v452, %v448
    %v525 = vpack.c.b16 %v457, %v453
    %v526 = vpack.c.b16 %v458, %v454
    %v527 = vpack.c.b16 %v459, %v455
    %v528 = vpack.c.b16 %v460, %v456
    %v529 = vpack.c.b16 %v465, %v461
    %v530 = vpack.c.b16 %v466, %v462
    %v531 = vpack.c.b16 %v467, %v463
    %v532 = vpack.c.b16 %v468, %v464
    %597 = vmatprep.subr.bf16.mxu0 %v498
    %598 = vmatpush1.bf16.msra.mxu0 %v497
    %599 = vmatprep.subr.bf16.mxu0 %v494
    %600 = vmatpush1.bf16.msra.mxu0 %v493
    %601 = vmatprep.subr.bf16.mxu0 %v490
    %602 = vmatpush1.bf16.msra.mxu0 %v489
    %603 = vmatprep.subr.bf16.mxu0 %v486
    %604 = vmatpush1.bf16.msra.mxu0 %v485
    %605 = vmatprep.subr.bf16.mxu0 %v482
    %606 = vmatpush1.bf16.msra.mxu0 %v481
    %607 = vmatprep.subr.bf16.mxu0 %v478
    %608 = vmatpush1.bf16.msra.mxu0 %v477
    %609 = vmatprep.subr.bf16.mxu0 %v474
    %610 = vmatpush1.bf16.msra.mxu0 %v473
    %611 = vmatprep.subr.bf16.mxu0 %v470
    %612 = vmatpush1.bf16.msra.mxu0 %v469
    %613 = vmatprep.subr.bf16.mxu0 %v530
    %614 = vmatpush2.bf16.msra.mxu0 %v529
    %615 = vmatprep.subr.bf16.mxu0 %v526
    %616 = vmatpush2.bf16.msra.mxu0 %v525
    %617 = vmatprep.subr.bf16.mxu0 %v522
    %618 = vmatpush2.bf16.msra.mxu0 %v521
    %619 = vmatprep.subr.bf16.mxu0 %v518
    %620 = vmatpush2.bf16.msra.mxu0 %v517
    %621 = vmatprep.subr.bf16.mxu0 %v514
    %622 = vmatpush2.bf16.msra.mxu0 %v513
    %623 = vmatprep.subr.bf16.mxu0 %v510
    %624 = vmatpush2.bf16.msra.mxu0 %v509
    %625 = vmatprep.subr.bf16.mxu0 %v506
    %626 = vmatpush2.bf16.msra.mxu0 %v505
    %627 = vmatprep.subr.bf16.mxu0 %v502
    %628 = vmatpush2.bf16.msra.mxu0 %v501
    %629 = vmatprep.mubr.bf16.mxu0 %v212
    %630 = vmatmul.mubr.bf16.gmra.mxu0 %v211
    %v631 = vpop.f32.mrf.mxu0
    %v632 = vadd.f32 0.0, %v631
    %v633 = vpop.f32.mrf.mxu0
    %v634 = vadd.f32 0.0, %v633
    %v635 = vpop.f32.mrf.mxu0
    %v636 = vadd.f32 0.0, %v635
    %v637 = vpop.f32.mrf.mxu0
    %v638 = vadd.f32 0.0, %v637
    %639 = vdwg.mxu0
    %640 = vmatprep.subr.bf16.mxu0 %v500
    %641 = vmatpush1.bf16.msra.mxu0 %v499
    %642 = vmatprep.subr.bf16.mxu0 %v496
    %643 = vmatpush1.bf16.msra.mxu0 %v495
    %644 = vmatprep.subr.bf16.mxu0 %v492
    %645 = vmatpush1.bf16.msra.mxu0 %v491
    %646 = vmatprep.subr.bf16.mxu0 %v488
    %647 = vmatpush1.bf16.msra.mxu0 %v487
    %648 = vmatprep.subr.bf16.mxu0 %v484
    %649 = vmatpush1.bf16.msra.mxu0 %v483
    %650 = vmatprep.subr.bf16.mxu0 %v480
    %651 = vmatpush1.bf16.msra.mxu0 %v479
    %652 = vmatprep.subr.bf16.mxu0 %v476
    %653 = vmatpush1.bf16.msra.mxu0 %v475
    %654 = vmatprep.subr.bf16.mxu0 %v472
    %655 = vmatpush1.bf16.msra.mxu0 %v471
    %656 = vmatprep.subr.bf16.mxu0 %v532
    %657 = vmatpush2.bf16.msra.mxu0 %v531
    %658 = vmatprep.subr.bf16.mxu0 %v528
    %659 = vmatpush2.bf16.msra.mxu0 %v527
    %660 = vmatprep.subr.bf16.mxu0 %v524
    %661 = vmatpush2.bf16.msra.mxu0 %v523
    %662 = vmatprep.subr.bf16.mxu0 %v520
    %663 = vmatpush2.bf16.msra.mxu0 %v519
    %664 = vmatprep.subr.bf16.mxu0 %v516
    %665 = vmatpush2.bf16.msra.mxu0 %v515
    %666 = vmatprep.subr.bf16.mxu0 %v512
    %667 = vmatpush2.bf16.msra.mxu0 %v511
    %668 = vmatprep.subr.bf16.mxu0 %v508
    %669 = vmatpush2.bf16.msra.mxu0 %v507
    %670 = vmatprep.subr.bf16.mxu0 %v504
    %671 = vmatpush2.bf16.msra.mxu0 %v503
    %672 = vmatprep.mubr.bf16.mxu0 %v212
    %673 = vmatmul.mubr.bf16.gmra.mxu0 %v211
    %v674 = vpop.f32.mrf.mxu0
    %v675 = vadd.f32 0.0, %v674
    %v676 = vpop.f32.mrf.mxu0
    %v677 = vadd.f32 0.0, %v676
    %v678 = vpop.f32.mrf.mxu0
    %v679 = vadd.f32 0.0, %v678
    %v680 = vpop.f32.mrf.mxu0
    %v681 = vadd.f32 0.0, %v680
    %682 = vdwg.mxu0
    %v683 = vpack.c.bf16 %v636, %v632
    %v684 = vpack.c.bf16 %v638, %v634
    %v685 = vpack.c.bf16 %v679, %v675
    %v686 = vpack.c.bf16 %v681, %v677
    %v687 = vld [vmem:[%s4] sm:$0xf]
    %v689 = vlaneseq
    %v690 = vshrl.u32 %v689, 7
    %v691 = vsub.s32 0, %v690
    %v692 = vrot.slane %v687, %v691
    %v693 = vlaneseq
    %v694 = vshrl.u32 %v693, 7
    %v695 = vsub.s32 1, %v694
    %v696 = vrot.slane %v687, %v695
    %v697 = vlaneseq
    %v698 = vshrl.u32 %v697, 7
    %v699 = vsub.s32 2, %v698
    %v700 = vrot.slane %v687, %v699
    %v701 = vlaneseq
    %v702 = vshrl.u32 %v701, 7
    %v703 = vsub.s32 3, %v702
    %v704 = vrot.slane %v687, %v703
    %v709 = vpack.c.bf16 %v692, %v692
    %v710 = vpack.c.bf16 %v696, %v696
    %v711 = vpack.c.bf16 %v700, %v700
    %v712 = vpack.c.bf16 %v704, %v704
    %v714 = vpack.i.b16 %v709, %v709
    %v716 = vlaneseq
    %v717 = vshrl.u32 %v716, 7
    %v718 = vsub.s32 0, %v717
    %v719 = vrot.slane %v714, %v718
    %v721 = vpack.i.b16 %v710, %v710
    %v723 = vlaneseq
    %v724 = vshrl.u32 %v723, 7
    %v725 = vsub.s32 0, %v724
    %v726 = vrot.slane %v721, %v725
    %v728 = vpack.i.b16 %v711, %v711
    %v730 = vlaneseq
    %v731 = vshrl.u32 %v730, 7
    %v732 = vsub.s32 0, %v731
    %v733 = vrot.slane %v728, %v732
    %v735 = vpack.i.b16 %v712, %v712
    %v737 = vlaneseq
    %v738 = vshrl.u32 %v737, 7
    %v739 = vsub.s32 0, %v738
    %v740 = vrot.slane %v735, %v739
    %v741 = vadd.bf16 %v683, %v719
    %v742 = vadd.bf16 %v684, %v726
    %v743 = vadd.bf16 %v685, %v733
    %v744 = vadd.bf16 %v686, %v740
    %v745 = vmul.bf16 %v741, 1045249613
    %v746 = vmul.bf16 %v742, 1045249613
    %v747 = vmul.bf16 %v743, 1045249613
    %v748 = vmul.bf16 %v744, 1045249613
    %v749 = vmax.bf16 %v741, %v745
    %v750 = vmax.bf16 %v742, %v746
    %v751 = vmax.bf16 %v743, %v747
    %v752 = vmax.bf16 %v744, %v748
    %v753 = vld [vmem:[%s5] sm:$0xff]
    %v754 = vld [vmem:[%s5 + $0x8] sm:$0xff]
    %v755 = vld [vmem:[%s5 + $0x10] sm:$0xff]
    %v756 = vld [vmem:[%s5 + $0x18] sm:$0xff]
    %v757 = vld [vmem:[%s5 + $0x20] sm:$0xff]
    %v758 = vld [vmem:[%s5 + $0x28] sm:$0xff]
    %v759 = vld [vmem:[%s5 + $0x30] sm:$0xff]
    %v760 = vld [vmem:[%s5 + $0x38] sm:$0xff]
    %v761 = vld [vmem:[%s5 + $0x40] sm:$0xff]
    %v762 = vld [vmem:[%s5 + $0x48] sm:$0xff]
    %v763 = vld [vmem:[%s5 + $0x50] sm:$0xff]
    %v764 = vld [vmem:[%s5 + $0x58] sm:$0xff]
    %v765 = vld [vmem:[%s5 + $0x60] sm:$0xff]
    %v766 = vld [vmem:[%s5 + $0x68] sm:$0xff]
    %v767 = vld [vmem:[%s5 + $0x70] sm:$0xff]
    %v768 = vld [vmem:[%s5 + $0x78] sm:$0xff]
    %v769 = vld [vmem:[%s5 + $0x80] sm:$0xff]
    %v770 = vld [vmem:[%s5 + $0x88] sm:$0xff]
    %v771 = vld [vmem:[%s5 + $0x90] sm:$0xff]
    %v772 = vld [vmem:[%s5 + $0x98] sm:$0xff]
    %v773 = vld [vmem:[%s5 + $0xa0] sm:$0xff]
    %v774 = vld [vmem:[%s5 + $0xa8] sm:$0xff]
    %v775 = vld [vmem:[%s5 + $0xb0] sm:$0xff]
    %v776 = vld [vmem:[%s5 + $0xb8] sm:$0xff]
    %v777 = vld [vmem:[%s5 + $0xc0] sm:$0xff]
    %v778 = vld [vmem:[%s5 + $0xc8] sm:$0xff]
    %v779 = vld [vmem:[%s5 + $0xd0] sm:$0xff]
    %v780 = vld [vmem:[%s5 + $0xd8] sm:$0xff]
    %v781 = vld [vmem:[%s5 + $0xe0] sm:$0xff]
    %v782 = vld [vmem:[%s5 + $0xe8] sm:$0xff]
    %v783 = vld [vmem:[%s5 + $0xf0] sm:$0xff]
    %v784 = vld [vmem:[%s5 + $0xf8] sm:$0xff]
    %v785 = vld [vmem:[%s5 + $0x100] sm:$0xff]
    %v786 = vld [vmem:[%s5 + $0x108] sm:$0xff]
    %v787 = vld [vmem:[%s5 + $0x110] sm:$0xff]
    %v788 = vld [vmem:[%s5 + $0x118] sm:$0xff]
    %v789 = vld [vmem:[%s5 + $0x120] sm:$0xff]
    %v790 = vld [vmem:[%s5 + $0x128] sm:$0xff]
    %v791 = vld [vmem:[%s5 + $0x130] sm:$0xff]
    %v792 = vld [vmem:[%s5 + $0x138] sm:$0xff]
    %v793 = vld [vmem:[%s5 + $0x140] sm:$0xff]
    %v794 = vld [vmem:[%s5 + $0x148] sm:$0xff]
    %v795 = vld [vmem:[%s5 + $0x150] sm:$0xff]
    %v796 = vld [vmem:[%s5 + $0x158] sm:$0xff]
    %v797 = vld [vmem:[%s5 + $0x160] sm:$0xff]
    %v798 = vld [vmem:[%s5 + $0x168] sm:$0xff]
    %v799 = vld [vmem:[%s5 + $0x170] sm:$0xff]
    %v800 = vld [vmem:[%s5 + $0x178] sm:$0xff]
    %v801 = vld [vmem:[%s5 + $0x180] sm:$0xff]
    %v802 = vld [vmem:[%s5 + $0x188] sm:$0xff]
    %v803 = vld [vmem:[%s5 + $0x190] sm:$0xff]
    %v804 = vld [vmem:[%s5 + $0x198] sm:$0xff]
    %v805 = vld [vmem:[%s5 + $0x1a0] sm:$0xff]
    %v806 = vld [vmem:[%s5 + $0x1a8] sm:$0xff]
    %v807 = vld [vmem:[%s5 + $0x1b0] sm:$0xff]
    %v808 = vld [vmem:[%s5 + $0x1b8] sm:$0xff]
    %v809 = vld [vmem:[%s5 + $0x1c0] sm:$0xff]
    %v810 = vld [vmem:[%s5 + $0x1c8] sm:$0xff]
    %v811 = vld [vmem:[%s5 + $0x1d0] sm:$0xff]
    %v812 = vld [vmem:[%s5 + $0x1d8] sm:$0xff]
    %v813 = vld [vmem:[%s5 + $0x1e0] sm:$0xff]
    %v814 = vld [vmem:[%s5 + $0x1e8] sm:$0xff]
    %v815 = vld [vmem:[%s5 + $0x1f0] sm:$0xff]
    %v816 = vld [vmem:[%s5 + $0x1f8] sm:$0xff]
    %v817 = vld [vmem:[%s5 + $0x200] sm:$0xff]
    %v818 = vld [vmem:[%s5 + $0x208] sm:$0xff]
    %v819 = vld [vmem:[%s5 + $0x210] sm:$0xff]
    %v820 = vld [vmem:[%s5 + $0x218] sm:$0xff]
    %v821 = vld [vmem:[%s5 + $0x220] sm:$0xff]
    %v822 = vld [vmem:[%s5 + $0x228] sm:$0xff]
    %v823 = vld [vmem:[%s5 + $0x230] sm:$0xff]
    %v824 = vld [vmem:[%s5 + $0x238] sm:$0xff]
    %v825 = vld [vmem:[%s5 + $0x240] sm:$0xff]
    %v826 = vld [vmem:[%s5 + $0x248] sm:$0xff]
    %v827 = vld [vmem:[%s5 + $0x250] sm:$0xff]
    %v828 = vld [vmem:[%s5 + $0x258] sm:$0xff]
    %v829 = vld [vmem:[%s5 + $0x260] sm:$0xff]
    %v830 = vld [vmem:[%s5 + $0x268] sm:$0xff]
    %v831 = vld [vmem:[%s5 + $0x270] sm:$0xff]
    %v832 = vld [vmem:[%s5 + $0x278] sm:$0xff]
    %v833 = vld [vmem:[%s5 + $0x280] sm:$0xff]
    %v834 = vld [vmem:[%s5 + $0x288] sm:$0xff]
    %v835 = vld [vmem:[%s5 + $0x290] sm:$0xff]
    %v836 = vld [vmem:[%s5 + $0x298] sm:$0xff]
    %v837 = vld [vmem:[%s5 + $0x2a0] sm:$0xff]
    %v838 = vld [vmem:[%s5 + $0x2a8] sm:$0xff]
    %v839 = vld [vmem:[%s5 + $0x2b0] sm:$0xff]
    %v840 = vld [vmem:[%s5 + $0x2b8] sm:$0xff]
    %v841 = vld [vmem:[%s5 + $0x2c0] sm:$0xff]
    %v842 = vld [vmem:[%s5 + $0x2c8] sm:$0xff]
    %v843 = vld [vmem:[%s5 + $0x2d0] sm:$0xff]
    %v844 = vld [vmem:[%s5 + $0x2d8] sm:$0xff]
    %v845 = vld [vmem:[%s5 + $0x2e0] sm:$0xff]
    %v846 = vld [vmem:[%s5 + $0x2e8] sm:$0xff]
    %v847 = vld [vmem:[%s5 + $0x2f0] sm:$0xff]
    %v848 = vld [vmem:[%s5 + $0x2f8] sm:$0xff]
    %v849 = vld [vmem:[%s5 + $0x300] sm:$0xff]
    %v850 = vld [vmem:[%s5 + $0x308] sm:$0xff]
    %v851 = vld [vmem:[%s5 + $0x310] sm:$0xff]
    %v852 = vld [vmem:[%s5 + $0x318] sm:$0xff]
    %v853 = vld [vmem:[%s5 + $0x320] sm:$0xff]
    %v854 = vld [vmem:[%s5 + $0x328] sm:$0xff]
    %v855 = vld [vmem:[%s5 + $0x330] sm:$0xff]
    %v856 = vld [vmem:[%s5 + $0x338] sm:$0xff]
    %v857 = vld [vmem:[%s5 + $0x340] sm:$0xff]
    %v858 = vld [vmem:[%s5 + $0x348] sm:$0xff]
    %v859 = vld [vmem:[%s5 + $0x350] sm:$0xff]
    %v860 = vld [vmem:[%s5 + $0x358] sm:$0xff]
    %v861 = vld [vmem:[%s5 + $0x360] sm:$0xff]
    %v862 = vld [vmem:[%s5 + $0x368] sm:$0xff]
    %v863 = vld [vmem:[%s5 + $0x370] sm:$0xff]
    %v864 = vld [vmem:[%s5 + $0x378] sm:$0xff]
    %v865 = vld [vmem:[%s5 + $0x380] sm:$0xff]
    %v866 = vld [vmem:[%s5 + $0x388] sm:$0xff]
    %v867 = vld [vmem:[%s5 + $0x390] sm:$0xff]
    %v868 = vld [vmem:[%s5 + $0x398] sm:$0xff]
    %v869 = vld [vmem:[%s5 + $0x3a0] sm:$0xff]
    %v870 = vld [vmem:[%s5 + $0x3a8] sm:$0xff]
    %v871 = vld [vmem:[%s5 + $0x3b0] sm:$0xff]
    %v872 = vld [vmem:[%s5 + $0x3b8] sm:$0xff]
    %v873 = vld [vmem:[%s5 + $0x3c0] sm:$0xff]
    %v874 = vld [vmem:[%s5 + $0x3c8] sm:$0xff]
    %v875 = vld [vmem:[%s5 + $0x3d0] sm:$0xff]
    %v876 = vld [vmem:[%s5 + $0x3d8] sm:$0xff]
    %v877 = vld [vmem:[%s5 + $0x3e0] sm:$0xff]
    %v878 = vld [vmem:[%s5 + $0x3e8] sm:$0xff]
    %v879 = vld [vmem:[%s5 + $0x3f0] sm:$0xff]
    %v880 = vld [vmem:[%s5 + $0x3f8] sm:$0xff]
    %v881 = vld [vmem:[%s5 + $0x400] sm:$0xff]
    %v882 = vld [vmem:[%s5 + $0x408] sm:$0xff]
    %v883 = vld [vmem:[%s5 + $0x410] sm:$0xff]
    %v884 = vld [vmem:[%s5 + $0x418] sm:$0xff]
    %v885 = vld [vmem:[%s5 + $0x420] sm:$0xff]
    %v886 = vld [vmem:[%s5 + $0x428] sm:$0xff]
    %v887 = vld [vmem:[%s5 + $0x430] sm:$0xff]
    %v888 = vld [vmem:[%s5 + $0x438] sm:$0xff]
    %v889 = vld [vmem:[%s5 + $0x440] sm:$0xff]
    %v890 = vld [vmem:[%s5 + $0x448] sm:$0xff]
    %v891 = vld [vmem:[%s5 + $0x450] sm:$0xff]
    %v892 = vld [vmem:[%s5 + $0x458] sm:$0xff]
    %v893 = vld [vmem:[%s5 + $0x460] sm:$0xff]
    %v894 = vld [vmem:[%s5 + $0x468] sm:$0xff]
    %v895 = vld [vmem:[%s5 + $0x470] sm:$0xff]
    %v896 = vld [vmem:[%s5 + $0x478] sm:$0xff]
    %v897 = vld [vmem:[%s5 + $0x480] sm:$0xff]
    %v898 = vld [vmem:[%s5 + $0x488] sm:$0xff]
    %v899 = vld [vmem:[%s5 + $0x490] sm:$0xff]
    %v900 = vld [vmem:[%s5 + $0x498] sm:$0xff]
    %v901 = vld [vmem:[%s5 + $0x4a0] sm:$0xff]
    %v902 = vld [vmem:[%s5 + $0x4a8] sm:$0xff]
    %v903 = vld [vmem:[%s5 + $0x4b0] sm:$0xff]
    %v904 = vld [vmem:[%s5 + $0x4b8] sm:$0xff]
    %v905 = vld [vmem:[%s5 + $0x4c0] sm:$0xff]
    %v906 = vld [vmem:[%s5 + $0x4c8] sm:$0xff]
    %v907 = vld [vmem:[%s5 + $0x4d0] sm:$0xff]
    %v908 = vld [vmem:[%s5 + $0x4d8] sm:$0xff]
    %v909 = vld [vmem:[%s5 + $0x4e0] sm:$0xff]
    %v910 = vld [vmem:[%s5 + $0x4e8] sm:$0xff]
    %v911 = vld [vmem:[%s5 + $0x4f0] sm:$0xff]
    %v912 = vld [vmem:[%s5 + $0x4f8] sm:$0xff]
    %v913 = vld [vmem:[%s5 + $0x500] sm:$0xff]
    %v914 = vld [vmem:[%s5 + $0x508] sm:$0xff]
    %v915 = vld [vmem:[%s5 + $0x510] sm:$0xff]
    %v916 = vld [vmem:[%s5 + $0x518] sm:$0xff]
    %v917 = vld [vmem:[%s5 + $0x520] sm:$0xff]
    %v918 = vld [vmem:[%s5 + $0x528] sm:$0xff]
    %v919 = vld [vmem:[%s5 + $0x530] sm:$0xff]
    %v920 = vld [vmem:[%s5 + $0x538] sm:$0xff]
    %v921 = vld [vmem:[%s5 + $0x540] sm:$0xff]
    %v922 = vld [vmem:[%s5 + $0x548] sm:$0xff]
    %v923 = vld [vmem:[%s5 + $0x550] sm:$0xff]
    %v924 = vld [vmem:[%s5 + $0x558] sm:$0xff]
    %v925 = vld [vmem:[%s5 + $0x560] sm:$0xff]
    %v926 = vld [vmem:[%s5 + $0x568] sm:$0xff]
    %v927 = vld [vmem:[%s5 + $0x570] sm:$0xff]
    %v928 = vld [vmem:[%s5 + $0x578] sm:$0xff]
    %v929 = vld [vmem:[%s5 + $0x580] sm:$0xff]
    %v930 = vld [vmem:[%s5 + $0x588] sm:$0xff]
    %v931 = vld [vmem:[%s5 + $0x590] sm:$0xff]
    %v932 = vld [vmem:[%s5 + $0x598] sm:$0xff]
    %v933 = vld [vmem:[%s5 + $0x5a0] sm:$0xff]
    %v934 = vld [vmem:[%s5 + $0x5a8] sm:$0xff]
    %v935 = vld [vmem:[%s5 + $0x5b0] sm:$0xff]
    %v936 = vld [vmem:[%s5 + $0x5b8] sm:$0xff]
    %v937 = vld [vmem:[%s5 + $0x5c0] sm:$0xff]
    %v938 = vld [vmem:[%s5 + $0x5c8] sm:$0xff]
    %v939 = vld [vmem:[%s5 + $0x5d0] sm:$0xff]
    %v940 = vld [vmem:[%s5 + $0x5d8] sm:$0xff]
    %v941 = vld [vmem:[%s5 + $0x5e0] sm:$0xff]
    %v942 = vld [vmem:[%s5 + $0x5e8] sm:$0xff]
    %v943 = vld [vmem:[%s5 + $0x5f0] sm:$0xff]
    %v944 = vld [vmem:[%s5 + $0x5f8] sm:$0xff]
    %v945 = vld [vmem:[%s5 + $0x600] sm:$0xff]
    %v946 = vld [vmem:[%s5 + $0x608] sm:$0xff]
    %v947 = vld [vmem:[%s5 + $0x610] sm:$0xff]
    %v948 = vld [vmem:[%s5 + $0x618] sm:$0xff]
    %v949 = vld [vmem:[%s5 + $0x620] sm:$0xff]
    %v950 = vld [vmem:[%s5 + $0x628] sm:$0xff]
    %v951 = vld [vmem:[%s5 + $0x630] sm:$0xff]
    %v952 = vld [vmem:[%s5 + $0x638] sm:$0xff]
    %v953 = vld [vmem:[%s5 + $0x640] sm:$0xff]
    %v954 = vld [vmem:[%s5 + $0x648] sm:$0xff]
    %v955 = vld [vmem:[%s5 + $0x650] sm:$0xff]
    %v956 = vld [vmem:[%s5 + $0x658] sm:$0xff]
    %v957 = vld [vmem:[%s5 + $0x660] sm:$0xff]
    %v958 = vld [vmem:[%s5 + $0x668] sm:$0xff]
    %v959 = vld [vmem:[%s5 + $0x670] sm:$0xff]
    %v960 = vld [vmem:[%s5 + $0x678] sm:$0xff]
    %v961 = vld [vmem:[%s5 + $0x680] sm:$0xff]
    %v962 = vld [vmem:[%s5 + $0x688] sm:$0xff]
    %v963 = vld [vmem:[%s5 + $0x690] sm:$0xff]
    %v964 = vld [vmem:[%s5 + $0x698] sm:$0xff]
    %v965 = vld [vmem:[%s5 + $0x6a0] sm:$0xff]
    %v966 = vld [vmem:[%s5 + $0x6a8] sm:$0xff]
    %v967 = vld [vmem:[%s5 + $0x6b0] sm:$0xff]
    %v968 = vld [vmem:[%s5 + $0x6b8] sm:$0xff]
    %v969 = vld [vmem:[%s5 + $0x6c0] sm:$0xff]
    %v970 = vld [vmem:[%s5 + $0x6c8] sm:$0xff]
    %v971 = vld [vmem:[%s5 + $0x6d0] sm:$0xff]
    %v972 = vld [vmem:[%s5 + $0x6d8] sm:$0xff]
    %v973 = vld [vmem:[%s5 + $0x6e0] sm:$0xff]
    %v974 = vld [vmem:[%s5 + $0x6e8] sm:$0xff]
    %v975 = vld [vmem:[%s5 + $0x6f0] sm:$0xff]
    %v976 = vld [vmem:[%s5 + $0x6f8] sm:$0xff]
    %v977 = vld [vmem:[%s5 + $0x700] sm:$0xff]
    %v978 = vld [vmem:[%s5 + $0x708] sm:$0xff]
    %v979 = vld [vmem:[%s5 + $0x710] sm:$0xff]
    %v980 = vld [vmem:[%s5 + $0x718] sm:$0xff]
    %v981 = vld [vmem:[%s5 + $0x720] sm:$0xff]
    %v982 = vld [vmem:[%s5 + $0x728] sm:$0xff]
    %v983 = vld [vmem:[%s5 + $0x730] sm:$0xff]
    %v984 = vld [vmem:[%s5 + $0x738] sm:$0xff]
    %v985 = vld [vmem:[%s5 + $0x740] sm:$0xff]
    %v986 = vld [vmem:[%s5 + $0x748] sm:$0xff]
    %v987 = vld [vmem:[%s5 + $0x750] sm:$0xff]
    %v988 = vld [vmem:[%s5 + $0x758] sm:$0xff]
    %v989 = vld [vmem:[%s5 + $0x760] sm:$0xff]
    %v990 = vld [vmem:[%s5 + $0x768] sm:$0xff]
    %v991 = vld [vmem:[%s5 + $0x770] sm:$0xff]
    %v992 = vld [vmem:[%s5 + $0x778] sm:$0xff]
    %v993 = vld [vmem:[%s5 + $0x780] sm:$0xff]
    %v994 = vld [vmem:[%s5 + $0x788] sm:$0xff]
    %v995 = vld [vmem:[%s5 + $0x790] sm:$0xff]
    %v996 = vld [vmem:[%s5 + $0x798] sm:$0xff]
    %v997 = vld [vmem:[%s5 + $0x7a0] sm:$0xff]
    %v998 = vld [vmem:[%s5 + $0x7a8] sm:$0xff]
    %v999 = vld [vmem:[%s5 + $0x7b0] sm:$0xff]
    %v1000 = vld [vmem:[%s5 + $0x7b8] sm:$0xff]
    %v1001 = vld [vmem:[%s5 + $0x7c0] sm:$0xff]
    %v1002 = vld [vmem:[%s5 + $0x7c8] sm:$0xff]
    %v1003 = vld [vmem:[%s5 + $0x7d0] sm:$0xff]
    %v1004 = vld [vmem:[%s5 + $0x7d8] sm:$0xff]
    %v1005 = vld [vmem:[%s5 + $0x7e0] sm:$0xff]
    %v1006 = vld [vmem:[%s5 + $0x7e8] sm:$0xff]
    %v1007 = vld [vmem:[%s5 + $0x7f0] sm:$0xff]
    %v1008 = vld [vmem:[%s5 + $0x7f8] sm:$0xff]
    %v1265 = vunpack.c.l.b16 %v753
    %v1266 = vunpack.c.h.b16 %v753
    %v1267 = vunpack.c.l.b16 %v754
    %v1268 = vunpack.c.h.b16 %v754
    %v1269 = vunpack.c.l.b16 %v755
    %v1270 = vunpack.c.h.b16 %v755
    %v1271 = vunpack.c.l.b16 %v756
    %v1272 = vunpack.c.h.b16 %v756
    %v1273 = vunpack.c.l.b16 %v757
    %v1274 = vunpack.c.h.b16 %v757
    %v1275 = vunpack.c.l.b16 %v758
    %v1276 = vunpack.c.h.b16 %v758
    %v1277 = vunpack.c.l.b16 %v759
    %v1278 = vunpack.c.h.b16 %v759
    %v1279 = vunpack.c.l.b16 %v760
    %v1280 = vunpack.c.h.b16 %v760
    %v1281 = vunpack.c.l.b16 %v761
    %v1282 = vunpack.c.h.b16 %v761
    %v1283 = vunpack.c.l.b16 %v762
    %v1284 = vunpack.c.h.b16 %v762
    %v1285 = vunpack.c.l.b16 %v763
    %v1286 = vunpack.c.h.b16 %v763
    %v1287 = vunpack.c.l.b16 %v764
    %v1288 = vunpack.c.h.b16 %v764
    %v1289 = vunpack.c.l.b16 %v765
    %v1290 = vunpack.c.h.b16 %v765
    %v1291 = vunpack.c.l.b16 %v766
    %v1292 = vunpack.c.h.b16 %v766
    %v1293 = vunpack.c.l.b16 %v767
    %v1294 = vunpack.c.h.b16 %v767
    %v1295 = vunpack.c.l.b16 %v768
    %v1296 = vunpack.c.h.b16 %v768
    %v1297 = vunpack.c.l.b16 %v769
    %v1298 = vunpack.c.h.b16 %v769
    %v1299 = vunpack.c.l.b16 %v770
    %v1300 = vunpack.c.h.b16 %v770
    %v1301 = vunpack.c.l.b16 %v771
    %v1302 = vunpack.c.h.b16 %v771
    %v1303 = vunpack.c.l.b16 %v772
    %v1304 = vunpack.c.h.b16 %v772
    %v1305 = vunpack.c.l.b16 %v773
    %v1306 = vunpack.c.h.b16 %v773
    %v1307 = vunpack.c.l.b16 %v774
    %v1308 = vunpack.c.h.b16 %v774
    %v1309 = vunpack.c.l.b16 %v775
    %v1310 = vunpack.c.h.b16 %v775
    %v1311 = vunpack.c.l.b16 %v776
    %v1312 = vunpack.c.h.b16 %v776
    %v1313 = vunpack.c.l.b16 %v777
    %v1314 = vunpack.c.h.b16 %v777
    %v1315 = vunpack.c.l.b16 %v778
    %v1316 = vunpack.c.h.b16 %v778
    %v1317 = vunpack.c.l.b16 %v779
    %v1318 = vunpack.c.h.b16 %v779
    %v1319 = vunpack.c.l.b16 %v780
    %v1320 = vunpack.c.h.b16 %v780
    %v1321 = vunpack.c.l.b16 %v781
    %v1322 = vunpack.c.h.b16 %v781
    %v1323 = vunpack.c.l.b16 %v782
    %v1324 = vunpack.c.h.b16 %v782
    %v1325 = vunpack.c.l.b16 %v783
    %v1326 = vunpack.c.h.b16 %v783
    %v1327 = vunpack.c.l.b16 %v784
    %v1328 = vunpack.c.h.b16 %v784
    %v1329 = vunpack.c.l.b16 %v785
    %v1330 = vunpack.c.h.b16 %v785
    %v1331 = vunpack.c.l.b16 %v786
    %v1332 = vunpack.c.h.b16 %v786
    %v1333 = vunpack.c.l.b16 %v787
    %v1334 = vunpack.c.h.b16 %v787
    %v1335 = vunpack.c.l.b16 %v788
    %v1336 = vunpack.c.h.b16 %v788
    %v1337 = vunpack.c.l.b16 %v789
    %v1338 = vunpack.c.h.b16 %v789
    %v1339 = vunpack.c.l.b16 %v790
    %v1340 = vunpack.c.h.b16 %v790
    %v1341 = vunpack.c.l.b16 %v791
    %v1342 = vunpack.c.h.b16 %v791
    %v1343 = vunpack.c.l.b16 %v792
    %v1344 = vunpack.c.h.b16 %v792
    %v1345 = vunpack.c.l.b16 %v793
    %v1346 = vunpack.c.h.b16 %v793
    %v1347 = vunpack.c.l.b16 %v794
    %v1348 = vunpack.c.h.b16 %v794
    %v1349 = vunpack.c.l.b16 %v795
    %v1350 = vunpack.c.h.b16 %v795
    %v1351 = vunpack.c.l.b16 %v796
    %v1352 = vunpack.c.h.b16 %v796
    %v1353 = vunpack.c.l.b16 %v797
    %v1354 = vunpack.c.h.b16 %v797
    %v1355 = vunpack.c.l.b16 %v798
    %v1356 = vunpack.c.h.b16 %v798
    %v1357 = vunpack.c.l.b16 %v799
    %v1358 = vunpack.c.h.b16 %v799
    %v1359 = vunpack.c.l.b16 %v800
    %v1360 = vunpack.c.h.b16 %v800
    %v1361 = vunpack.c.l.b16 %v801
    %v1362 = vunpack.c.h.b16 %v801
    %v1363 = vunpack.c.l.b16 %v802
    %v1364 = vunpack.c.h.b16 %v802
    %v1365 = vunpack.c.l.b16 %v803
    %v1366 = vunpack.c.h.b16 %v803
    %v1367 = vunpack.c.l.b16 %v804
    %v1368 = vunpack.c.h.b16 %v804
    %v1369 = vunpack.c.l.b16 %v805
    %v1370 = vunpack.c.h.b16 %v805
    %v1371 = vunpack.c.l.b16 %v806
    %v1372 = vunpack.c.h.b16 %v806
    %v1373 = vunpack.c.l.b16 %v807
    %v1374 = vunpack.c.h.b16 %v807
    %v1375 = vunpack.c.l.b16 %v808
    %v1376 = vunpack.c.h.b16 %v808
    %v1377 = vunpack.c.l.b16 %v809
    %v1378 = vunpack.c.h.b16 %v809
    %v1379 = vunpack.c.l.b16 %v810
    %v1380 = vunpack.c.h.b16 %v810
    %v1381 = vunpack.c.l.b16 %v811
    %v1382 = vunpack.c.h.b16 %v811
    %v1383 = vunpack.c.l.b16 %v812
    %v1384 = vunpack.c.h.b16 %v812
    %v1385 = vunpack.c.l.b16 %v813
    %v1386 = vunpack.c.h.b16 %v813
    %v1387 = vunpack.c.l.b16 %v814
    %v1388 = vunpack.c.h.b16 %v814
    %v1389 = vunpack.c.l.b16 %v815
    %v1390 = vunpack.c.h.b16 %v815
    %v1391 = vunpack.c.l.b16 %v816
    %v1392 = vunpack.c.h.b16 %v816
    %v1393 = vunpack.c.l.b16 %v817
    %v1394 = vunpack.c.h.b16 %v817
    %v1395 = vunpack.c.l.b16 %v818
    %v1396 = vunpack.c.h.b16 %v818
    %v1397 = vunpack.c.l.b16 %v819
    %v1398 = vunpack.c.h.b16 %v819
    %v1399 = vunpack.c.l.b16 %v820
    %v1400 = vunpack.c.h.b16 %v820
    %v1401 = vunpack.c.l.b16 %v821
    %v1402 = vunpack.c.h.b16 %v821
    %v1403 = vunpack.c.l.b16 %v822
    %v1404 = vunpack.c.h.b16 %v822
    %v1405 = vunpack.c.l.b16 %v823
    %v1406 = vunpack.c.h.b16 %v823
    %v1407 = vunpack.c.l.b16 %v824
    %v1408 = vunpack.c.h.b16 %v824
    %v1409 = vunpack.c.l.b16 %v825
    %v1410 = vunpack.c.h.b16 %v825
    %v1411 = vunpack.c.l.b16 %v826
    %v1412 = vunpack.c.h.b16 %v826
    %v1413 = vunpack.c.l.b16 %v827
    %v1414 = vunpack.c.h.b16 %v827
    %v1415 = vunpack.c.l.b16 %v828
    %v1416 = vunpack.c.h.b16 %v828
    %v1417 = vunpack.c.l.b16 %v829
    %v1418 = vunpack.c.h.b16 %v829
    %v1419 = vunpack.c.l.b16 %v830
    %v1420 = vunpack.c.h.b16 %v830
    %v1421 = vunpack.c.l.b16 %v831
    %v1422 = vunpack.c.h.b16 %v831
    %v1423 = vunpack.c.l.b16 %v832
    %v1424 = vunpack.c.h.b16 %v832
    %v1425 = vunpack.c.l.b16 %v833
    %v1426 = vunpack.c.h.b16 %v833
    %v1427 = vunpack.c.l.b16 %v834
    %v1428 = vunpack.c.h.b16 %v834
    %v1429 = vunpack.c.l.b16 %v835
    %v1430 = vunpack.c.h.b16 %v835
    %v1431 = vunpack.c.l.b16 %v836
    %v1432 = vunpack.c.h.b16 %v836
    %v1433 = vunpack.c.l.b16 %v837
    %v1434 = vunpack.c.h.b16 %v837
    %v1435 = vunpack.c.l.b16 %v838
    %v1436 = vunpack.c.h.b16 %v838
    %v1437 = vunpack.c.l.b16 %v839
    %v1438 = vunpack.c.h.b16 %v839
    %v1439 = vunpack.c.l.b16 %v840
    %v1440 = vunpack.c.h.b16 %v840
    %v1441 = vunpack.c.l.b16 %v841
    %v1442 = vunpack.c.h.b16 %v841
    %v1443 = vunpack.c.l.b16 %v842
    %v1444 = vunpack.c.h.b16 %v842
    %v1445 = vunpack.c.l.b16 %v843
    %v1446 = vunpack.c.h.b16 %v843
    %v1447 = vunpack.c.l.b16 %v844
    %v1448 = vunpack.c.h.b16 %v844
    %v1449 = vunpack.c.l.b16 %v845
    %v1450 = vunpack.c.h.b16 %v845
    %v1451 = vunpack.c.l.b16 %v846
    %v1452 = vunpack.c.h.b16 %v846
    %v1453 = vunpack.c.l.b16 %v847
    %v1454 = vunpack.c.h.b16 %v847
    %v1455 = vunpack.c.l.b16 %v848
    %v1456 = vunpack.c.h.b16 %v848
    %v1457 = vunpack.c.l.b16 %v849
    %v1458 = vunpack.c.h.b16 %v849
    %v1459 = vunpack.c.l.b16 %v850
    %v1460 = vunpack.c.h.b16 %v850
    %v1461 = vunpack.c.l.b16 %v851
    %v1462 = vunpack.c.h.b16 %v851
    %v1463 = vunpack.c.l.b16 %v852
    %v1464 = vunpack.c.h.b16 %v852
    %v1465 = vunpack.c.l.b16 %v853
    %v1466 = vunpack.c.h.b16 %v853
    %v1467 = vunpack.c.l.b16 %v854
    %v1468 = vunpack.c.h.b16 %v854
    %v1469 = vunpack.c.l.b16 %v855
    %v1470 = vunpack.c.h.b16 %v855
    %v1471 = vunpack.c.l.b16 %v856
    %v1472 = vunpack.c.h.b16 %v856
    %v1473 = vunpack.c.l.b16 %v857
    %v1474 = vunpack.c.h.b16 %v857
    %v1475 = vunpack.c.l.b16 %v858
    %v1476 = vunpack.c.h.b16 %v858
    %v1477 = vunpack.c.l.b16 %v859
    %v1478 = vunpack.c.h.b16 %v859
    %v1479 = vunpack.c.l.b16 %v860
    %v1480 = vunpack.c.h.b16 %v860
    %v1481 = vunpack.c.l.b16 %v861
    %v1482 = vunpack.c.h.b16 %v861
    %v1483 = vunpack.c.l.b16 %v862
    %v1484 = vunpack.c.h.b16 %v862
    %v1485 = vunpack.c.l.b16 %v863
    %v1486 = vunpack.c.h.b16 %v863
    %v1487 = vunpack.c.l.b16 %v864
    %v1488 = vunpack.c.h.b16 %v864
    %v1489 = vunpack.c.l.b16 %v865
    %v1490 = vunpack.c.h.b16 %v865
    %v1491 = vunpack.c.l.b16 %v866
    %v1492 = vunpack.c.h.b16 %v866
    %v1493 = vunpack.c.l.b16 %v867
    %v1494 = vunpack.c.h.b16 %v867
    %v1495 = vunpack.c.l.b16 %v868
    %v1496 = vunpack.c.h.b16 %v868
    %v1497 = vunpack.c.l.b16 %v869
    %v1498 = vunpack.c.h.b16 %v869
    %v1499 = vunpack.c.l.b16 %v870
    %v1500 = vunpack.c.h.b16 %v870
    %v1501 = vunpack.c.l.b16 %v871
    %v1502 = vunpack.c.h.b16 %v871
    %v1503 = vunpack.c.l.b16 %v872
    %v1504 = vunpack.c.h.b16 %v872
    %v1505 = vunpack.c.l.b16 %v873
    %v1506 = vunpack.c.h.b16 %v873
    %v1507 = vunpack.c.l.b16 %v874
    %v1508 = vunpack.c.h.b16 %v874
    %v1509 = vunpack.c.l.b16 %v875
    %v1510 = vunpack.c.h.b16 %v875
    %v1511 = vunpack.c.l.b16 %v876
    %v1512 = vunpack.c.h.b16 %v876
    %v1513 = vunpack.c.l.b16 %v877
    %v1514 = vunpack.c.h.b16 %v877
    %v1515 = vunpack.c.l.b16 %v878
    %v1516 = vunpack.c.h.b16 %v878
    %v1517 = vunpack.c.l.b16 %v879
    %v1518 = vunpack.c.h.b16 %v879
    %v1519 = vunpack.c.l.b16 %v880
    %v1520 = vunpack.c.h.b16 %v880
    %v1521 = vunpack.c.l.b16 %v881
    %v1522 = vunpack.c.h.b16 %v881
    %v1523 = vunpack.c.l.b16 %v882
    %v1524 = vunpack.c.h.b16 %v882
    %v1525 = vunpack.c.l.b16 %v883
    %v1526 = vunpack.c.h.b16 %v883
    %v1527 = vunpack.c.l.b16 %v884
    %v1528 = vunpack.c.h.b16 %v884
    %v1529 = vunpack.c.l.b16 %v885
    %v1530 = vunpack.c.h.b16 %v885
    %v1531 = vunpack.c.l.b16 %v886
    %v1532 = vunpack.c.h.b16 %v886
    %v1533 = vunpack.c.l.b16 %v887
    %v1534 = vunpack.c.h.b16 %v887
    %v1535 = vunpack.c.l.b16 %v888
    %v1536 = vunpack.c.h.b16 %v888
    %v1537 = vunpack.c.l.b16 %v889
    %v1538 = vunpack.c.h.b16 %v889
    %v1539 = vunpack.c.l.b16 %v890
    %v1540 = vunpack.c.h.b16 %v890
    %v1541 = vunpack.c.l.b16 %v891
    %v1542 = vunpack.c.h.b16 %v891
    %v1543 = vunpack.c.l.b16 %v892
    %v1544 = vunpack.c.h.b16 %v892
    %v1545 = vunpack.c.l.b16 %v893
    %v1546 = vunpack.c.h.b16 %v893
    %v1547 = vunpack.c.l.b16 %v894
    %v1548 = vunpack.c.h.b16 %v894
    %v1549 = vunpack.c.l.b16 %v895
    %v1550 = vunpack.c.h.b16 %v895
    %v1551 = vunpack.c.l.b16 %v896
    %v1552 = vunpack.c.h.b16 %v896
    %v1553 = vunpack.c.l.b16 %v897
    %v1554 = vunpack.c.h.b16 %v897
    %v1555 = vunpack.c.l.b16 %v898
    %v1556 = vunpack.c.h.b16 %v898
    %v1557 = vunpack.c.l.b16 %v899
    %v1558 = vunpack.c.h.b16 %v899
    %v1559 = vunpack.c.l.b16 %v900
    %v1560 = vunpack.c.h.b16 %v900
    %v1561 = vunpack.c.l.b16 %v901
    %v1562 = vunpack.c.h.b16 %v901
    %v1563 = vunpack.c.l.b16 %v902
    %v1564 = vunpack.c.h.b16 %v902
    %v1565 = vunpack.c.l.b16 %v903
    %v1566 = vunpack.c.h.b16 %v903
    %v1567 = vunpack.c.l.b16 %v904
    %v1568 = vunpack.c.h.b16 %v904
    %v1569 = vunpack.c.l.b16 %v905
    %v1570 = vunpack.c.h.b16 %v905
    %v1571 = vunpack.c.l.b16 %v906
    %v1572 = vunpack.c.h.b16 %v906
    %v1573 = vunpack.c.l.b16 %v907
    %v1574 = vunpack.c.h.b16 %v907
    %v1575 = vunpack.c.l.b16 %v908
    %v1576 = vunpack.c.h.b16 %v908
    %v1577 = vunpack.c.l.b16 %v909
    %v1578 = vunpack.c.h.b16 %v909
    %v1579 = vunpack.c.l.b16 %v910
    %v1580 = vunpack.c.h.b16 %v910
    %v1581 = vunpack.c.l.b16 %v911
    %v1582 = vunpack.c.h.b16 %v911
    %v1583 = vunpack.c.l.b16 %v912
    %v1584 = vunpack.c.h.b16 %v912
    %v1585 = vunpack.c.l.b16 %v913
    %v1586 = vunpack.c.h.b16 %v913
    %v1587 = vunpack.c.l.b16 %v914
    %v1588 = vunpack.c.h.b16 %v914
    %v1589 = vunpack.c.l.b16 %v915
    %v1590 = vunpack.c.h.b16 %v915
    %v1591 = vunpack.c.l.b16 %v916
    %v1592 = vunpack.c.h.b16 %v916
    %v1593 = vunpack.c.l.b16 %v917
    %v1594 = vunpack.c.h.b16 %v917
    %v1595 = vunpack.c.l.b16 %v918
    %v1596 = vunpack.c.h.b16 %v918
    %v1597 = vunpack.c.l.b16 %v919
    %v1598 = vunpack.c.h.b16 %v919
    %v1599 = vunpack.c.l.b16 %v920
    %v1600 = vunpack.c.h.b16 %v920
    %v1601 = vunpack.c.l.b16 %v921
    %v1602 = vunpack.c.h.b16 %v921
    %v1603 = vunpack.c.l.b16 %v922
    %v1604 = vunpack.c.h.b16 %v922
    %v1605 = vunpack.c.l.b16 %v923
    %v1606 = vunpack.c.h.b16 %v923
    %v1607 = vunpack.c.l.b16 %v924
    %v1608 = vunpack.c.h.b16 %v924
    %v1609 = vunpack.c.l.b16 %v925
    %v1610 = vunpack.c.h.b16 %v925
    %v1611 = vunpack.c.l.b16 %v926
    %v1612 = vunpack.c.h.b16 %v926
    %v1613 = vunpack.c.l.b16 %v927
    %v1614 = vunpack.c.h.b16 %v927
    %v1615 = vunpack.c.l.b16 %v928
    %v1616 = vunpack.c.h.b16 %v928
    %v1617 = vunpack.c.l.b16 %v929
    %v1618 = vunpack.c.h.b16 %v929
    %v1619 = vunpack.c.l.b16 %v930
    %v1620 = vunpack.c.h.b16 %v930
    %v1621 = vunpack.c.l.b16 %v931
    %v1622 = vunpack.c.h.b16 %v931
    %v1623 = vunpack.c.l.b16 %v932
    %v1624 = vunpack.c.h.b16 %v932
    %v1625 = vunpack.c.l.b16 %v933
    %v1626 = vunpack.c.h.b16 %v933
    %v1627 = vunpack.c.l.b16 %v934
    %v1628 = vunpack.c.h.b16 %v934
    %v1629 = vunpack.c.l.b16 %v935
    %v1630 = vunpack.c.h.b16 %v935
    %v1631 = vunpack.c.l.b16 %v936
    %v1632 = vunpack.c.h.b16 %v936
    %v1633 = vunpack.c.l.b16 %v937
    %v1634 = vunpack.c.h.b16 %v937
    %v1635 = vunpack.c.l.b16 %v938
    %v1636 = vunpack.c.h.b16 %v938
    %v1637 = vunpack.c.l.b16 %v939
    %v1638 = vunpack.c.h.b16 %v939
    %v1639 = vunpack.c.l.b16 %v940
    %v1640 = vunpack.c.h.b16 %v940
    %v1641 = vunpack.c.l.b16 %v941
    %v1642 = vunpack.c.h.b16 %v941
    %v1643 = vunpack.c.l.b16 %v942
    %v1644 = vunpack.c.h.b16 %v942
    %v1645 = vunpack.c.l.b16 %v943
    %v1646 = vunpack.c.h.b16 %v943
    %v1647 = vunpack.c.l.b16 %v944
    %v1648 = vunpack.c.h.b16 %v944
    %v1649 = vunpack.c.l.b16 %v945
    %v1650 = vunpack.c.h.b16 %v945
    %v1651 = vunpack.c.l.b16 %v946
    %v1652 = vunpack.c.h.b16 %v946
    %v1653 = vunpack.c.l.b16 %v947
    %v1654 = vunpack.c.h.b16 %v947
    %v1655 = vunpack.c.l.b16 %v948
    %v1656 = vunpack.c.h.b16 %v948
    %v1657 = vunpack.c.l.b16 %v949
    %v1658 = vunpack.c.h.b16 %v949
    %v1659 = vunpack.c.l.b16 %v950
    %v1660 = vunpack.c.h.b16 %v950
    %v1661 = vunpack.c.l.b16 %v951
    %v1662 = vunpack.c.h.b16 %v951
    %v1663 = vunpack.c.l.b16 %v952
    %v1664 = vunpack.c.h.b16 %v952
    %v1665 = vunpack.c.l.b16 %v953
    %v1666 = vunpack.c.h.b16 %v953
    %v1667 = vunpack.c.l.b16 %v954
    %v1668 = vunpack.c.h.b16 %v954
    %v1669 = vunpack.c.l.b16 %v955
    %v1670 = vunpack.c.h.b16 %v955
    %v1671 = vunpack.c.l.b16 %v956
    %v1672 = vunpack.c.h.b16 %v956
    %v1673 = vunpack.c.l.b16 %v957
    %v1674 = vunpack.c.h.b16 %v957
    %v1675 = vunpack.c.l.b16 %v958
    %v1676 = vunpack.c.h.b16 %v958
    %v1677 = vunpack.c.l.b16 %v959
    %v1678 = vunpack.c.h.b16 %v959
    %v1679 = vunpack.c.l.b16 %v960
    %v1680 = vunpack.c.h.b16 %v960
    %v1681 = vunpack.c.l.b16 %v961
    %v1682 = vunpack.c.h.b16 %v961
    %v1683 = vunpack.c.l.b16 %v962
    %v1684 = vunpack.c.h.b16 %v962
    %v1685 = vunpack.c.l.b16 %v963
    %v1686 = vunpack.c.h.b16 %v963
    %v1687 = vunpack.c.l.b16 %v964
    %v1688 = vunpack.c.h.b16 %v964
    %v1689 = vunpack.c.l.b16 %v965
    %v1690 = vunpack.c.h.b16 %v965
    %v1691 = vunpack.c.l.b16 %v966
    %v1692 = vunpack.c.h.b16 %v966
    %v1693 = vunpack.c.l.b16 %v967
    %v1694 = vunpack.c.h.b16 %v967
    %v1695 = vunpack.c.l.b16 %v968
    %v1696 = vunpack.c.h.b16 %v968
    %v1697 = vunpack.c.l.b16 %v969
    %v1698 = vunpack.c.h.b16 %v969
    %v1699 = vunpack.c.l.b16 %v970
    %v1700 = vunpack.c.h.b16 %v970
    %v1701 = vunpack.c.l.b16 %v971
    %v1702 = vunpack.c.h.b16 %v971
    %v1703 = vunpack.c.l.b16 %v972
    %v1704 = vunpack.c.h.b16 %v972
    %v1705 = vunpack.c.l.b16 %v973
    %v1706 = vunpack.c.h.b16 %v973
    %v1707 = vunpack.c.l.b16 %v974
    %v1708 = vunpack.c.h.b16 %v974
    %v1709 = vunpack.c.l.b16 %v975
    %v1710 = vunpack.c.h.b16 %v975
    %v1711 = vunpack.c.l.b16 %v976
    %v1712 = vunpack.c.h.b16 %v976
    %v1713 = vunpack.c.l.b16 %v977
    %v1714 = vunpack.c.h.b16 %v977
    %v1715 = vunpack.c.l.b16 %v978
    %v1716 = vunpack.c.h.b16 %v978
    %v1717 = vunpack.c.l.b16 %v979
    %v1718 = vunpack.c.h.b16 %v979
    %v1719 = vunpack.c.l.b16 %v980
    %v1720 = vunpack.c.h.b16 %v980
    %v1721 = vunpack.c.l.b16 %v981
    %v1722 = vunpack.c.h.b16 %v981
    %v1723 = vunpack.c.l.b16 %v982
    %v1724 = vunpack.c.h.b16 %v982
    %v1725 = vunpack.c.l.b16 %v983
    %v1726 = vunpack.c.h.b16 %v983
    %v1727 = vunpack.c.l.b16 %v984
    %v1728 = vunpack.c.h.b16 %v984
    %v1729 = vunpack.c.l.b16 %v985
    %v1730 = vunpack.c.h.b16 %v985
    %v1731 = vunpack.c.l.b16 %v986
    %v1732 = vunpack.c.h.b16 %v986
    %v1733 = vunpack.c.l.b16 %v987
    %v1734 = vunpack.c.h.b16 %v987
    %v1735 = vunpack.c.l.b16 %v988
    %v1736 = vunpack.c.h.b16 %v988
    %v1737 = vunpack.c.l.b16 %v989
    %v1738 = vunpack.c.h.b16 %v989
    %v1739 = vunpack.c.l.b16 %v990
    %v1740 = vunpack.c.h.b16 %v990
    %v1741 = vunpack.c.l.b16 %v991
    %v1742 = vunpack.c.h.b16 %v991
    %v1743 = vunpack.c.l.b16 %v992
    %v1744 = vunpack.c.h.b16 %v992
    %v1745 = vunpack.c.l.b16 %v993
    %v1746 = vunpack.c.h.b16 %v993
    %v1747 = vunpack.c.l.b16 %v994
    %v1748 = vunpack.c.h.b16 %v994
    %v1749 = vunpack.c.l.b16 %v995
    %v1750 = vunpack.c.h.b16 %v995
    %v1751 = vunpack.c.l.b16 %v996
    %v1752 = vunpack.c.h.b16 %v996
    %v1753 = vunpack.c.l.b16 %v997
    %v1754 = vunpack.c.h.b16 %v997
    %v1755 = vunpack.c.l.b16 %v998
    %v1756 = vunpack.c.h.b16 %v998
    %v1757 = vunpack.c.l.b16 %v999
    %v1758 = vunpack.c.h.b16 %v999
    %v1759 = vunpack.c.l.b16 %v1000
    %v1760 = vunpack.c.h.b16 %v1000
    %v1761 = vunpack.c.l.b16 %v1001
    %v1762 = vunpack.c.h.b16 %v1001
    %v1763 = vunpack.c.l.b16 %v1002
    %v1764 = vunpack.c.h.b16 %v1002
    %v1765 = vunpack.c.l.b16 %v1003
    %v1766 = vunpack.c.h.b16 %v1003
    %v1767 = vunpack.c.l.b16 %v1004
    %v1768 = vunpack.c.h.b16 %v1004
    %v1769 = vunpack.c.l.b16 %v1005
    %v1770 = vunpack.c.h.b16 %v1005
    %v1771 = vunpack.c.l.b16 %v1006
    %v1772 = vunpack.c.h.b16 %v1006
    %v1773 = vunpack.c.l.b16 %v1007
    %v1774 = vunpack.c.h.b16 %v1007
    %v1775 = vunpack.c.l.b16 %v1008
    %v1776 = vunpack.c.h.b16 %v1008
    %v1777 = vpack.c.b16 %v1273, %v1265
    %v1778 = vpack.c.b16 %v1274, %v1266
    %v1779 = vpack.c.b16 %v1275, %v1267
    %v1780 = vpack.c.b16 %v1276, %v1268
    %v1781 = vpack.c.b16 %v1277, %v1269
    %v1782 = vpack.c.b16 %v1278, %v1270
    %v1783 = vpack.c.b16 %v1279, %v1271
    %v1784 = vpack.c.b16 %v1280, %v1272
    %v1785 = vpack.c.b16 %v1289, %v1281
    %v1786 = vpack.c.b16 %v1290, %v1282
    %v1787 = vpack.c.b16 %v1291, %v1283
    %v1788 = vpack.c.b16 %v1292, %v1284
    %v1789 = vpack.c.b16 %v1293, %v1285
    %v1790 = vpack.c.b16 %v1294, %v1286
    %v1791 = vpack.c.b16 %v1295, %v1287
    %v1792 = vpack.c.b16 %v1296, %v1288
    %v1793 = vpack.c.b16 %v1305, %v1297
    %v1794 = vpack.c.b16 %v1306, %v1298
    %v1795 = vpack.c.b16 %v1307, %v1299
    %v1796 = vpack.c.b16 %v1308, %v1300
    %v1797 = vpack.c.b16 %v1309, %v1301
    %v1798 = vpack.c.b16 %v1310, %v1302
    %v1799 = vpack.c.b16 %v1311, %v1303
    %v1800 = vpack.c.b16 %v1312, %v1304
    %v1801 = vpack.c.b16 %v1321, %v1313
    %v1802 = vpack.c.b16 %v1322, %v1314
    %v1803 = vpack.c.b16 %v1323, %v1315
    %v1804 = vpack.c.b16 %v1324, %v1316
    %v1805 = vpack.c.b16 %v1325, %v1317
    %v1806 = vpack.c.b16 %v1326, %v1318
    %v1807 = vpack.c.b16 %v1327, %v1319
    %v1808 = vpack.c.b16 %v1328, %v1320
    %v1809 = vpack.c.b16 %v1337, %v1329
    %v1810 = vpack.c.b16 %v1338, %v1330
    %v1811 = vpack.c.b16 %v1339, %v1331
    %v1812 = vpack.c.b16 %v1340, %v1332
    %v1813 = vpack.c.b16 %v1341, %v1333
    %v1814 = vpack.c.b16 %v1342, %v1334
    %v1815 = vpack.c.b16 %v1343, %v1335
    %v1816 = vpack.c.b16 %v1344, %v1336
    %v1817 = vpack.c.b16 %v1353, %v1345
    %v1818 = vpack.c.b16 %v1354, %v1346
    %v1819 = vpack.c.b16 %v1355, %v1347
    %v1820 = vpack.c.b16 %v1356, %v1348
    %v1821 = vpack.c.b16 %v1357, %v1349
    %v1822 = vpack.c.b16 %v1358, %v1350
    %v1823 = vpack.c.b16 %v1359, %v1351
    %v1824 = vpack.c.b16 %v1360, %v1352
    %v1825 = vpack.c.b16 %v1369, %v1361
    %v1826 = vpack.c.b16 %v1370, %v1362
    %v1827 = vpack.c.b16 %v1371, %v1363
    %v1828 = vpack.c.b16 %v1372, %v1364
    %v1829 = vpack.c.b16 %v1373, %v1365
    %v1830 = vpack.c.b16 %v1374, %v1366
    %v1831 = vpack.c.b16 %v1375, %v1367
    %v1832 = vpack.c.b16 %v1376, %v1368
    %v1833 = vpack.c.b16 %v1385, %v1377
    %v1834 = vpack.c.b16 %v1386, %v1378
    %v1835 = vpack.c.b16 %v1387, %v1379
    %v1836 = vpack.c.b16 %v1388, %v1380
    %v1837 = vpack.c.b16 %v1389, %v1381
    %v1838 = vpack.c.b16 %v1390, %v1382
    %v1839 = vpack.c.b16 %v1391, %v1383
    %v1840 = vpack.c.b16 %v1392, %v1384
    %v1841 = vpack.c.b16 %v1401, %v1393
    %v1842 = vpack.c.b16 %v1402, %v1394
    %v1843 = vpack.c.b16 %v1403, %v1395
    %v1844 = vpack.c.b16 %v1404, %v1396
    %v1845 = vpack.c.b16 %v1405, %v1397
    %v1846 = vpack.c.b16 %v1406, %v1398
    %v1847 = vpack.c.b16 %v1407, %v1399
    %v1848 = vpack.c.b16 %v1408, %v1400
    %v1849 = vpack.c.b16 %v1417, %v1409
    %v1850 = vpack.c.b16 %v1418, %v1410
    %v1851 = vpack.c.b16 %v1419, %v1411
    %v1852 = vpack.c.b16 %v1420, %v1412
    %v1853 = vpack.c.b16 %v1421, %v1413
    %v1854 = vpack.c.b16 %v1422, %v1414
    %v1855 = vpack.c.b16 %v1423, %v1415
    %v1856 = vpack.c.b16 %v1424, %v1416
    %v1857 = vpack.c.b16 %v1433, %v1425
    %v1858 = vpack.c.b16 %v1434, %v1426
    %v1859 = vpack.c.b16 %v1435, %v1427
    %v1860 = vpack.c.b16 %v1436, %v1428
    %v1861 = vpack.c.b16 %v1437, %v1429
    %v1862 = vpack.c.b16 %v1438, %v1430
    %v1863 = vpack.c.b16 %v1439, %v1431
    %v1864 = vpack.c.b16 %v1440, %v1432
    %v1865 = vpack.c.b16 %v1449, %v1441
    %v1866 = vpack.c.b16 %v1450, %v1442
    %v1867 = vpack.c.b16 %v1451, %v1443
    %v1868 = vpack.c.b16 %v1452, %v1444
    %v1869 = vpack.c.b16 %v1453, %v1445
    %v1870 = vpack.c.b16 %v1454, %v1446
    %v1871 = vpack.c.b16 %v1455, %v1447
    %v1872 = vpack.c.b16 %v1456, %v1448
    %v1873 = vpack.c.b16 %v1465, %v1457
    %v1874 = vpack.c.b16 %v1466, %v1458
    %v1875 = vpack.c.b16 %v1467, %v1459
    %v1876 = vpack.c.b16 %v1468, %v1460
    %v1877 = vpack.c.b16 %v1469, %v1461
    %v1878 = vpack.c.b16 %v1470, %v1462
    %v1879 = vpack.c.b16 %v1471, %v1463
    %v1880 = vpack.c.b16 %v1472, %v1464
    %v1881 = vpack.c.b16 %v1481, %v1473
    %v1882 = vpack.c.b16 %v1482, %v1474
    %v1883 = vpack.c.b16 %v1483, %v1475
    %v1884 = vpack.c.b16 %v1484, %v1476
    %v1885 = vpack.c.b16 %v1485, %v1477
    %v1886 = vpack.c.b16 %v1486, %v1478
    %v1887 = vpack.c.b16 %v1487, %v1479
    %v1888 = vpack.c.b16 %v1488, %v1480
    %v1889 = vpack.c.b16 %v1497, %v1489
    %v1890 = vpack.c.b16 %v1498, %v1490
    %v1891 = vpack.c.b16 %v1499, %v1491
    %v1892 = vpack.c.b16 %v1500, %v1492
    %v1893 = vpack.c.b16 %v1501, %v1493
    %v1894 = vpack.c.b16 %v1502, %v1494
    %v1895 = vpack.c.b16 %v1503, %v1495
    %v1896 = vpack.c.b16 %v1504, %v1496
    %v1897 = vpack.c.b16 %v1513, %v1505
    %v1898 = vpack.c.b16 %v1514, %v1506
    %v1899 = vpack.c.b16 %v1515, %v1507
    %v1900 = vpack.c.b16 %v1516, %v1508
    %v1901 = vpack.c.b16 %v1517, %v1509
    %v1902 = vpack.c.b16 %v1518, %v1510
    %v1903 = vpack.c.b16 %v1519, %v1511
    %v1904 = vpack.c.b16 %v1520, %v1512
    %v1905 = vpack.c.b16 %v1529, %v1521
    %v1906 = vpack.c.b16 %v1530, %v1522
    %v1907 = vpack.c.b16 %v1531, %v1523
    %v1908 = vpack.c.b16 %v1532, %v1524
    %v1909 = vpack.c.b16 %v1533, %v1525
    %v1910 = vpack.c.b16 %v1534, %v1526
    %v1911 = vpack.c.b16 %v1535, %v1527
    %v1912 = vpack.c.b16 %v1536, %v1528
    %v1913 = vpack.c.b16 %v1545, %v1537
    %v1914 = vpack.c.b16 %v1546, %v1538
    %v1915 = vpack.c.b16 %v1547, %v1539
    %v1916 = vpack.c.b16 %v1548, %v1540
    %v1917 = vpack.c.b16 %v1549, %v1541
    %v1918 = vpack.c.b16 %v1550, %v1542
    %v1919 = vpack.c.b16 %v1551, %v1543
    %v1920 = vpack.c.b16 %v1552, %v1544
    %v1921 = vpack.c.b16 %v1561, %v1553
    %v1922 = vpack.c.b16 %v1562, %v1554
    %v1923 = vpack.c.b16 %v1563, %v1555
    %v1924 = vpack.c.b16 %v1564, %v1556
    %v1925 = vpack.c.b16 %v1565, %v1557
    %v1926 = vpack.c.b16 %v1566, %v1558
    %v1927 = vpack.c.b16 %v1567, %v1559
    %v1928 = vpack.c.b16 %v1568, %v1560
    %v1929 = vpack.c.b16 %v1577, %v1569
    %v1930 = vpack.c.b16 %v1578, %v1570
    %v1931 = vpack.c.b16 %v1579, %v1571
    %v1932 = vpack.c.b16 %v1580, %v1572
    %v1933 = vpack.c.b16 %v1581, %v1573
    %v1934 = vpack.c.b16 %v1582, %v1574
    %v1935 = vpack.c.b16 %v1583, %v1575
    %v1936 = vpack.c.b16 %v1584, %v1576
    %v1937 = vpack.c.b16 %v1593, %v1585
    %v1938 = vpack.c.b16 %v1594, %v1586
    %v1939 = vpack.c.b16 %v1595, %v1587
    %v1940 = vpack.c.b16 %v1596, %v1588
    %v1941 = vpack.c.b16 %v1597, %v1589
    %v1942 = vpack.c.b16 %v1598, %v1590
    %v1943 = vpack.c.b16 %v1599, %v1591
    %v1944 = vpack.c.b16 %v1600, %v1592
    %v1945 = vpack.c.b16 %v1609, %v1601
    %v1946 = vpack.c.b16 %v1610, %v1602
    %v1947 = vpack.c.b16 %v1611, %v1603
    %v1948 = vpack.c.b16 %v1612, %v1604
    %v1949 = vpack.c.b16 %v1613, %v1605
    %v1950 = vpack.c.b16 %v1614, %v1606
    %v1951 = vpack.c.b16 %v1615, %v1607
    %v1952 = vpack.c.b16 %v1616, %v1608
    %v1953 = vpack.c.b16 %v1625, %v1617
    %v1954 = vpack.c.b16 %v1626, %v1618
    %v1955 = vpack.c.b16 %v1627, %v1619
    %v1956 = vpack.c.b16 %v1628, %v1620
    %v1957 = vpack.c.b16 %v1629, %v1621
    %v1958 = vpack.c.b16 %v1630, %v1622
    %v1959 = vpack.c.b16 %v1631, %v1623
    %v1960 = vpack.c.b16 %v1632, %v1624
    %v1961 = vpack.c.b16 %v1641, %v1633
    %v1962 = vpack.c.b16 %v1642, %v1634
    %v1963 = vpack.c.b16 %v1643, %v1635
    %v1964 = vpack.c.b16 %v1644, %v1636
    %v1965 = vpack.c.b16 %v1645, %v1637
    %v1966 = vpack.c.b16 %v1646, %v1638
    %v1967 = vpack.c.b16 %v1647, %v1639
    %v1968 = vpack.c.b16 %v1648, %v1640
    %v1969 = vpack.c.b16 %v1657, %v1649
    %v1970 = vpack.c.b16 %v1658, %v1650
    %v1971 = vpack.c.b16 %v1659, %v1651
    %v1972 = vpack.c.b16 %v1660, %v1652
    %v1973 = vpack.c.b16 %v1661, %v1653
    %v1974 = vpack.c.b16 %v1662, %v1654
    %v1975 = vpack.c.b16 %v1663, %v1655
    %v1976 = vpack.c.b16 %v1664, %v1656
    %v1977 = vpack.c.b16 %v1673, %v1665
    %v1978 = vpack.c.b16 %v1674, %v1666
    %v1979 = vpack.c.b16 %v1675, %v1667
    %v1980 = vpack.c.b16 %v1676, %v1668
    %v1981 = vpack.c.b16 %v1677, %v1669
    %v1982 = vpack.c.b16 %v1678, %v1670
    %v1983 = vpack.c.b16 %v1679, %v1671
    %v1984 = vpack.c.b16 %v1680, %v1672
    %v1985 = vpack.c.b16 %v1689, %v1681
    %v1986 = vpack.c.b16 %v1690, %v1682
    %v1987 = vpack.c.b16 %v1691, %v1683
    %v1988 = vpack.c.b16 %v1692, %v1684
    %v1989 = vpack.c.b16 %v1693, %v1685
    %v1990 = vpack.c.b16 %v1694, %v1686
    %v1991 = vpack.c.b16 %v1695, %v1687
    %v1992 = vpack.c.b16 %v1696, %v1688
    %v1993 = vpack.c.b16 %v1705, %v1697
    %v1994 = vpack.c.b16 %v1706, %v1698
    %v1995 = vpack.c.b16 %v1707, %v1699
    %v1996 = vpack.c.b16 %v1708, %v1700
    %v1997 = vpack.c.b16 %v1709, %v1701
    %v1998 = vpack.c.b16 %v1710, %v1702
    %v1999 = vpack.c.b16 %v1711, %v1703
    %v2000 = vpack.c.b16 %v1712, %v1704
    %v2001 = vpack.c.b16 %v1721, %v1713
    %v2002 = vpack.c.b16 %v1722, %v1714
    %v2003 = vpack.c.b16 %v1723, %v1715
    %v2004 = vpack.c.b16 %v1724, %v1716
    %v2005 = vpack.c.b16 %v1725, %v1717
    %v2006 = vpack.c.b16 %v1726, %v1718
    %v2007 = vpack.c.b16 %v1727, %v1719
    %v2008 = vpack.c.b16 %v1728, %v1720
    %v2009 = vpack.c.b16 %v1737, %v1729
    %v2010 = vpack.c.b16 %v1738, %v1730
    %v2011 = vpack.c.b16 %v1739, %v1731
    %v2012 = vpack.c.b16 %v1740, %v1732
    %v2013 = vpack.c.b16 %v1741, %v1733
    %v2014 = vpack.c.b16 %v1742, %v1734
    %v2015 = vpack.c.b16 %v1743, %v1735
    %v2016 = vpack.c.b16 %v1744, %v1736
    %v2017 = vpack.c.b16 %v1753, %v1745
    %v2018 = vpack.c.b16 %v1754, %v1746
    %v2019 = vpack.c.b16 %v1755, %v1747
    %v2020 = vpack.c.b16 %v1756, %v1748
    %v2021 = vpack.c.b16 %v1757, %v1749
    %v2022 = vpack.c.b16 %v1758, %v1750
    %v2023 = vpack.c.b16 %v1759, %v1751
    %v2024 = vpack.c.b16 %v1760, %v1752
    %v2025 = vpack.c.b16 %v1769, %v1761
    %v2026 = vpack.c.b16 %v1770, %v1762
    %v2027 = vpack.c.b16 %v1771, %v1763
    %v2028 = vpack.c.b16 %v1772, %v1764
    %v2029 = vpack.c.b16 %v1773, %v1765
    %v2030 = vpack.c.b16 %v1774, %v1766
    %v2031 = vpack.c.b16 %v1775, %v1767
    %v2032 = vpack.c.b16 %v1776, %v1768
    %2289 = vmatprep.subr.bf16.mxu0 %v1834
    %2290 = vmatpush1.bf16.msra.mxu0 %v1833
    %2291 = vmatprep.subr.bf16.mxu0 %v1826
    %2292 = vmatpush1.bf16.msra.mxu0 %v1825
    %2293 = vmatprep.subr.bf16.mxu0 %v1818
    %2294 = vmatpush1.bf16.msra.mxu0 %v1817
    %2295 = vmatprep.subr.bf16.mxu0 %v1810
    %2296 = vmatpush1.bf16.msra.mxu0 %v1809
    %2297 = vmatprep.subr.bf16.mxu0 %v1802
    %2298 = vmatpush1.bf16.msra.mxu0 %v1801
    %2299 = vmatprep.subr.bf16.mxu0 %v1794
    %2300 = vmatpush1.bf16.msra.mxu0 %v1793
    %2301 = vmatprep.subr.bf16.mxu0 %v1786
    %2302 = vmatpush1.bf16.msra.mxu0 %v1785
    %2303 = vmatprep.subr.bf16.mxu0 %v1778
    %2304 = vmatpush1.bf16.msra.mxu0 %v1777
    %2305 = vmatprep.subr.bf16.mxu0 %v1898
    %2306 = vmatpush2.bf16.msra.mxu0 %v1897
    %2307 = vmatprep.subr.bf16.mxu0 %v1890
    %2308 = vmatpush2.bf16.msra.mxu0 %v1889
    %2309 = vmatprep.subr.bf16.mxu0 %v1882
    %2310 = vmatpush2.bf16.msra.mxu0 %v1881
    %2311 = vmatprep.subr.bf16.mxu0 %v1874
    %2312 = vmatpush2.bf16.msra.mxu0 %v1873
    %2313 = vmatprep.subr.bf16.mxu0 %v1866
    %2314 = vmatpush2.bf16.msra.mxu0 %v1865
    %2315 = vmatprep.subr.bf16.mxu0 %v1858
    %2316 = vmatpush2.bf16.msra.mxu0 %v1857
    %2317 = vmatprep.subr.bf16.mxu0 %v1850
    %2318 = vmatpush2.bf16.msra.mxu0 %v1849
    %2319 = vmatprep.subr.bf16.mxu0 %v1842
    %2320 = vmatpush2.bf16.msra.mxu0 %v1841
    %2321 = vmatprep.mubr.bf16.mxu0 %v750
    %2322 = vmatmul.mubr.bf16.gmra.mxu0 %v749
    %v2323 = vpop.f32.mrf.mxu0
    %v2324 = vadd.f32 0.0, %v2323
    %v2325 = vpop.f32.mrf.mxu0
    %v2326 = vadd.f32 0.0, %v2325
    %v2327 = vpop.f32.mrf.mxu0
    %v2328 = vadd.f32 0.0, %v2327
    %v2329 = vpop.f32.mrf.mxu0
    %v2330 = vadd.f32 0.0, %v2329
    %2331 = vdwg.mxu0
    %2332 = vmatprep.subr.bf16.mxu0 %v1962
    %2333 = vmatpush1.bf16.msra.mxu0 %v1961
    %2334 = vmatprep.subr.bf16.mxu0 %v1954
    %2335 = vmatpush1.bf16.msra.mxu0 %v1953
    %2336 = vmatprep.subr.bf16.mxu0 %v1946
    %2337 = vmatpush1.bf16.msra.mxu0 %v1945
    %2338 = vmatprep.subr.bf16.mxu0 %v1938
    %2339 = vmatpush1.bf16.msra.mxu0 %v1937
    %2340 = vmatprep.subr.bf16.mxu0 %v1930
    %2341 = vmatpush1.bf16.msra.mxu0 %v1929
    %2342 = vmatprep.subr.bf16.mxu0 %v1922
    %2343 = vmatpush1.bf16.msra.mxu0 %v1921
    %2344 = vmatprep.subr.bf16.mxu0 %v1914
    %2345 = vmatpush1.bf16.msra.mxu0 %v1913
    %2346 = vmatprep.subr.bf16.mxu0 %v1906
    %2347 = vmatpush1.bf16.msra.mxu0 %v1905
    %2348 = vmatprep.subr.bf16.mxu0 %v2026
    %2349 = vmatpush2.bf16.msra.mxu0 %v2025
    %2350 = vmatprep.subr.bf16.mxu0 %v2018
    %2351 = vmatpush2.bf16.msra.mxu0 %v2017
    %2352 = vmatprep.subr.bf16.mxu0 %v2010
    %2353 = vmatpush2.bf16.msra.mxu0 %v2009
    %2354 = vmatprep.subr.bf16.mxu0 %v2002
    %2355 = vmatpush2.bf16.msra.mxu0 %v2001
    %2356 = vmatprep.subr.bf16.mxu0 %v1994
    %2357 = vmatpush2.bf16.msra.mxu0 %v1993
    %2358 = vmatprep.subr.bf16.mxu0 %v1986
    %2359 = vmatpush2.bf16.msra.mxu0 %v1985
    %2360 = vmatprep.subr.bf16.mxu0 %v1978
    %2361 = vmatpush2.bf16.msra.mxu0 %v1977
    %2362 = vmatprep.subr.bf16.mxu0 %v1970
    %2363 = vmatpush2.bf16.msra.mxu0 %v1969
    %2364 = vmatprep.mubr.bf16.mxu0 %v752
    %2365 = vmatmul.mubr.bf16.gmra.mxu0 %v751
    %v2366 = vpop.f32.mrf.mxu0
    %v2367 = vadd.f32 %v2324, %v2366
    %v2368 = vpop.f32.mrf.mxu0
    %v2369 = vadd.f32 %v2326, %v2368
    %v2370 = vpop.f32.mrf.mxu0
    %v2371 = vadd.f32 %v2328, %v2370
    %v2372 = vpop.f32.mrf.mxu0
    %v2373 = vadd.f32 %v2330, %v2372
    %2374 = vdwg.mxu0
    %2375 = vmatprep.subr.bf16.mxu0 %v1836
    %2376 = vmatpush1.bf16.msra.mxu0 %v1835
    %2377 = vmatprep.subr.bf16.mxu0 %v1828
    %2378 = vmatpush1.bf16.msra.mxu0 %v1827
    %2379 = vmatprep.subr.bf16.mxu0 %v1820
    %2380 = vmatpush1.bf16.msra.mxu0 %v1819
    %2381 = vmatprep.subr.bf16.mxu0 %v1812
    %2382 = vmatpush1.bf16.msra.mxu0 %v1811
    %2383 = vmatprep.subr.bf16.mxu0 %v1804
    %2384 = vmatpush1.bf16.msra.mxu0 %v1803
    %2385 = vmatprep.subr.bf16.mxu0 %v1796
    %2386 = vmatpush1.bf16.msra.mxu0 %v1795
    %2387 = vmatprep.subr.bf16.mxu0 %v1788
    %2388 = vmatpush1.bf16.msra.mxu0 %v1787
    %2389 = vmatprep.subr.bf16.mxu0 %v1780
    %2390 = vmatpush1.bf16.msra.mxu0 %v1779
    %2391 = vmatprep.subr.bf16.mxu0 %v1900
    %2392 = vmatpush2.bf16.msra.mxu0 %v1899
    %2393 = vmatprep.subr.bf16.mxu0 %v1892
    %2394 = vmatpush2.bf16.msra.mxu0 %v1891
    %2395 = vmatprep.subr.bf16.mxu0 %v1884
    %2396 = vmatpush2.bf16.msra.mxu0 %v1883
    %2397 = vmatprep.subr.bf16.mxu0 %v1876
    %2398 = vmatpush2.bf16.msra.mxu0 %v1875
    %2399 = vmatprep.subr.bf16.mxu0 %v1868
    %2400 = vmatpush2.bf16.msra.mxu0 %v1867
    %2401 = vmatprep.subr.bf16.mxu0 %v1860
    %2402 = vmatpush2.bf16.msra.mxu0 %v1859
    %2403 = vmatprep.subr.bf16.mxu0 %v1852
    %2404 = vmatpush2.bf16.msra.mxu0 %v1851
    %2405 = vmatprep.subr.bf16.mxu0 %v1844
    %2406 = vmatpush2.bf16.msra.mxu0 %v1843
    %2407 = vmatprep.mubr.bf16.mxu0 %v750
    %2408 = vmatmul.mubr.bf16.gmra.mxu0 %v749
    %v2409 = vpop.f32.mrf.mxu0
    %v2410 = vadd.f32 0.0, %v2409
    %v2411 = vpop.f32.mrf.mxu0
    %v2412 = vadd.f32 0.0, %v2411
    %v2413 = vpop.f32.mrf.mxu0
    %v2414 = vadd.f32 0.0, %v2413
    %v2415 = vpop.f32.mrf.mxu0
    %v2416 = vadd.f32 0.0, %v2415
    %2417 = vdwg.mxu0
    %2418 = vmatprep.subr.bf16.mxu0 %v1964
    %2419 = vmatpush1.bf16.msra.mxu0 %v1963
    %2420 = vmatprep.subr.bf16.mxu0 %v1956
    %2421 = vmatpush1.bf16.msra.mxu0 %v1955
    %2422 = vmatprep.subr.bf16.mxu0 %v1948
    %2423 = vmatpush1.bf16.msra.mxu0 %v1947
    %2424 = vmatprep.subr.bf16.mxu0 %v1940
    %2425 = vmatpush1.bf16.msra.mxu0 %v1939
    %2426 = vmatprep.subr.bf16.mxu0 %v1932
    %2427 = vmatpush1.bf16.msra.mxu0 %v1931
    %2428 = vmatprep.subr.bf16.mxu0 %v1924
    %2429 = vmatpush1.bf16.msra.mxu0 %v1923
    %2430 = vmatprep.subr.bf16.mxu0 %v1916
    %2431 = vmatpush1.bf16.msra.mxu0 %v1915
    %2432 = vmatprep.subr.bf16.mxu0 %v1908
    %2433 = vmatpush1.bf16.msra.mxu0 %v1907
    %2434 = vmatprep.subr.bf16.mxu0 %v2028
    %2435 = vmatpush2.bf16.msra.mxu0 %v2027
    %2436 = vmatprep.subr.bf16.mxu0 %v2020
    %2437 = vmatpush2.bf16.msra.mxu0 %v2019
    %2438 = vmatprep.subr.bf16.mxu0 %v2012
    %2439 = vmatpush2.bf16.msra.mxu0 %v2011
    %2440 = vmatprep.subr.bf16.mxu0 %v2004
    %2441 = vmatpush2.bf16.msra.mxu0 %v2003
    %2442 = vmatprep.subr.bf16.mxu0 %v1996
    %2443 = vmatpush2.bf16.msra.mxu0 %v1995
    %2444 = vmatprep.subr.bf16.mxu0 %v1988
    %2445 = vmatpush2.bf16.msra.mxu0 %v1987
    %2446 = vmatprep.subr.bf16.mxu0 %v1980
    %2447 = vmatpush2.bf16.msra.mxu0 %v1979
    %2448 = vmatprep.subr.bf16.mxu0 %v1972
    %2449 = vmatpush2.bf16.msra.mxu0 %v1971
    %2450 = vmatprep.mubr.bf16.mxu0 %v752
    %2451 = vmatmul.mubr.bf16.gmra.mxu0 %v751
    %v2452 = vpop.f32.mrf.mxu0
    %v2453 = vadd.f32 %v2410, %v2452
    %v2454 = vpop.f32.mrf.mxu0
    %v2455 = vadd.f32 %v2412, %v2454
    %v2456 = vpop.f32.mrf.mxu0
    %v2457 = vadd.f32 %v2414, %v2456
    %v2458 = vpop.f32.mrf.mxu0
    %v2459 = vadd.f32 %v2416, %v2458
    %2460 = vdwg.mxu0
    %2461 = vmatprep.subr.bf16.mxu0 %v1838
    %2462 = vmatpush1.bf16.msra.mxu0 %v1837
    %2463 = vmatprep.subr.bf16.mxu0 %v1830
    %2464 = vmatpush1.bf16.msra.mxu0 %v1829
    %2465 = vmatprep.subr.bf16.mxu0 %v1822
    %2466 = vmatpush1.bf16.msra.mxu0 %v1821
    %2467 = vmatprep.subr.bf16.mxu0 %v1814
    %2468 = vmatpush1.bf16.msra.mxu0 %v1813
    %2469 = vmatprep.subr.bf16.mxu0 %v1806
    %2470 = vmatpush1.bf16.msra.mxu0 %v1805
    %2471 = vmatprep.subr.bf16.mxu0 %v1798
    %2472 = vmatpush1.bf16.msra.mxu0 %v1797
    %2473 = vmatprep.subr.bf16.mxu0 %v1790
    %2474 = vmatpush1.bf16.msra.mxu0 %v1789
    %2475 = vmatprep.subr.bf16.mxu0 %v1782
    %2476 = vmatpush1.bf16.msra.mxu0 %v1781
    %2477 = vmatprep.subr.bf16.mxu0 %v1902
    %2478 = vmatpush2.bf16.msra.mxu0 %v1901
    %2479 = vmatprep.subr.bf16.mxu0 %v1894
    %2480 = vmatpush2.bf16.msra.mxu0 %v1893
    %2481 = vmatprep.subr.bf16.mxu0 %v1886
    %2482 = vmatpush2.bf16.msra.mxu0 %v1885
    %2483 = vmatprep.subr.bf16.mxu0 %v1878
    %2484 = vmatpush2.bf16.msra.mxu0 %v1877
    %2485 = vmatprep.subr.bf16.mxu0 %v1870
    %2486 = vmatpush2.bf16.msra.mxu0 %v1869
    %2487 = vmatprep.subr.bf16.mxu0 %v1862
    %2488 = vmatpush2.bf16.msra.mxu0 %v1861
    %2489 = vmatprep.subr.bf16.mxu0 %v1854
    %2490 = vmatpush2.bf16.msra.mxu0 %v1853
    %2491 = vmatprep.subr.bf16.mxu0 %v1846
    %2492 = vmatpush2.bf16.msra.mxu0 %v1845
    %2493 = vmatprep.mubr.bf16.mxu0 %v750
    %2494 = vmatmul.mubr.bf16.gmra.mxu0 %v749
    %v2495 = vpop.f32.mrf.mxu0
    %v2496 = vadd.f32 0.0, %v2495
    %v2497 = vpop.f32.mrf.mxu0
    %v2498 = vadd.f32 0.0, %v2497
    %v2499 = vpop.f32.mrf.mxu0
    %v2500 = vadd.f32 0.0, %v2499
    %v2501 = vpop.f32.mrf.mxu0
    %v2502 = vadd.f32 0.0, %v2501
    %2503 = vdwg.mxu0
    %2504 = vmatprep.subr.bf16.mxu0 %v1966
    %2505 = vmatpush1.bf16.msra.mxu0 %v1965
    %2506 = vmatprep.subr.bf16.mxu0 %v1958
    %2507 = vmatpush1.bf16.msra.mxu0 %v1957
    %2508 = vmatprep.subr.bf16.mxu0 %v1950
    %2509 = vmatpush1.bf16.msra.mxu0 %v1949
    %2510 = vmatprep.subr.bf16.mxu0 %v1942
    %2511 = vmatpush1.bf16.msra.mxu0 %v1941
    %2512 = vmatprep.subr.bf16.mxu0 %v1934
    %2513 = vmatpush1.bf16.msra.mxu0 %v1933
    %2514 = vmatprep.subr.bf16.mxu0 %v1926
    %2515 = vmatpush1.bf16.msra.mxu0 %v1925
    %2516 = vmatprep.subr.bf16.mxu0 %v1918
    %2517 = vmatpush1.bf16.msra.mxu0 %v1917
    %2518 = vmatprep.subr.bf16.mxu0 %v1910
    %2519 = vmatpush1.bf16.msra.mxu0 %v1909
    %2520 = vmatprep.subr.bf16.mxu0 %v2030
    %2521 = vmatpush2.bf16.msra.mxu0 %v2029
    %2522 = vmatprep.subr.bf16.mxu0 %v2022
    %2523 = vmatpush2.bf16.msra.mxu0 %v2021
    %2524 = vmatprep.subr.bf16.mxu0 %v2014
    %2525 = vmatpush2.bf16.msra.mxu0 %v2013
    %2526 = vmatprep.subr.bf16.mxu0 %v2006
    %2527 = vmatpush2.bf16.msra.mxu0 %v2005
    %2528 = vmatprep.subr.bf16.mxu0 %v1998
    %2529 = vmatpush2.bf16.msra.mxu0 %v1997
    %2530 = vmatprep.subr.bf16.mxu0 %v1990
    %2531 = vmatpush2.bf16.msra.mxu0 %v1989
    %2532 = vmatprep.subr.bf16.mxu0 %v1982
    %2533 = vmatpush2.bf16.msra.mxu0 %v1981
    %2534 = vmatprep.subr.bf16.mxu0 %v1974
    %2535 = vmatpush2.bf16.msra.mxu0 %v1973
    %2536 = vmatprep.mubr.bf16.mxu0 %v752
    %2537 = vmatmul.mubr.bf16.gmra.mxu0 %v751
    %v2538 = vpop.f32.mrf.mxu0
    %v2539 = vadd.f32 %v2496, %v2538
    %v2540 = vpop.f32.mrf.mxu0
    %v2541 = vadd.f32 %v2498, %v2540
    %v2542 = vpop.f32.mrf.mxu0
    %v2543 = vadd.f32 %v2500, %v2542
    %v2544 = vpop.f32.mrf.mxu0
    %v2545 = vadd.f32 %v2502, %v2544
    %2546 = vdwg.mxu0
    %2547 = vmatprep.subr.bf16.mxu0 %v1840
    %2548 = vmatpush1.bf16.msra.mxu0 %v1839
    %2549 = vmatprep.subr.bf16.mxu0 %v1832
    %2550 = vmatpush1.bf16.msra.mxu0 %v1831
    %2551 = vmatprep.subr.bf16.mxu0 %v1824
    %2552 = vmatpush1.bf16.msra.mxu0 %v1823
    %2553 = vmatprep.subr.bf16.mxu0 %v1816
    %2554 = vmatpush1.bf16.msra.mxu0 %v1815
    %2555 = vmatprep.subr.bf16.mxu0 %v1808
    %2556 = vmatpush1.bf16.msra.mxu0 %v1807
    %2557 = vmatprep.subr.bf16.mxu0 %v1800
    %2558 = vmatpush1.bf16.msra.mxu0 %v1799
    %2559 = vmatprep.subr.bf16.mxu0 %v1792
    %2560 = vmatpush1.bf16.msra.mxu0 %v1791
    %2561 = vmatprep.subr.bf16.mxu0 %v1784
    %2562 = vmatpush1.bf16.msra.mxu0 %v1783
    %2563 = vmatprep.subr.bf16.mxu0 %v1904
    %2564 = vmatpush2.bf16.msra.mxu0 %v1903
    %2565 = vmatprep.subr.bf16.mxu0 %v1896
    %2566 = vmatpush2.bf16.msra.mxu0 %v1895
    %2567 = vmatprep.subr.bf16.mxu0 %v1888
    %2568 = vmatpush2.bf16.msra.mxu0 %v1887
    %2569 = vmatprep.subr.bf16.mxu0 %v1880
    %2570 = vmatpush2.bf16.msra.mxu0 %v1879
    %2571 = vmatprep.subr.bf16.mxu0 %v1872
    %2572 = vmatpush2.bf16.msra.mxu0 %v1871
    %2573 = vmatprep.subr.bf16.mxu0 %v1864
    %2574 = vmatpush2.bf16.msra.mxu0 %v1863
    %2575 = vmatprep.subr.bf16.mxu0 %v1856
    %2576 = vmatpush2.bf16.msra.mxu0 %v1855
    %2577 = vmatprep.subr.bf16.mxu0 %v1848
    %2578 = vmatpush2.bf16.msra.mxu0 %v1847
    %2579 = vmatprep.mubr.bf16.mxu0 %v750
    %2580 = vmatmul.mubr.bf16.gmra.mxu0 %v749
    %v2581 = vpop.f32.mrf.mxu0
    %v2582 = vadd.f32 0.0, %v2581
    %v2583 = vpop.f32.mrf.mxu0
    %v2584 = vadd.f32 0.0, %v2583
    %v2585 = vpop.f32.mrf.mxu0
    %v2586 = vadd.f32 0.0, %v2585
    %v2587 = vpop.f32.mrf.mxu0
    %v2588 = vadd.f32 0.0, %v2587
    %2589 = vdwg.mxu0
    %2590 = vmatprep.subr.bf16.mxu0 %v1968
    %2591 = vmatpush1.bf16.msra.mxu0 %v1967
    %2592 = vmatprep.subr.bf16.mxu0 %v1960
    %2593 = vmatpush1.bf16.msra.mxu0 %v1959
    %2594 = vmatprep.subr.bf16.mxu0 %v1952
    %2595 = vmatpush1.bf16.msra.mxu0 %v1951
    %2596 = vmatprep.subr.bf16.mxu0 %v1944
    %2597 = vmatpush1.bf16.msra.mxu0 %v1943
    %2598 = vmatprep.subr.bf16.mxu0 %v1936
    %2599 = vmatpush1.bf16.msra.mxu0 %v1935
    %2600 = vmatprep.subr.bf16.mxu0 %v1928
    %2601 = vmatpush1.bf16.msra.mxu0 %v1927
    %2602 = vmatprep.subr.bf16.mxu0 %v1920
    %2603 = vmatpush1.bf16.msra.mxu0 %v1919
    %2604 = vmatprep.subr.bf16.mxu0 %v1912
    %2605 = vmatpush1.bf16.msra.mxu0 %v1911
    %2606 = vmatprep.subr.bf16.mxu0 %v2032
    %2607 = vmatpush2.bf16.msra.mxu0 %v2031
    %2608 = vmatprep.subr.bf16.mxu0 %v2024
    %2609 = vmatpush2.bf16.msra.mxu0 %v2023
    %2610 = vmatprep.subr.bf16.mxu0 %v2016
    %2611 = vmatpush2.bf16.msra.mxu0 %v2015
    %2612 = vmatprep.subr.bf16.mxu0 %v2008
    %2613 = vmatpush2.bf16.msra.mxu0 %v2007
    %2614 = vmatprep.subr.bf16.mxu0 %v2000
    %2615 = vmatpush2.bf16.msra.mxu0 %v1999
    %2616 = vmatprep.subr.bf16.mxu0 %v1992
    %2617 = vmatpush2.bf16.msra.mxu0 %v1991
    %2618 = vmatprep.subr.bf16.mxu0 %v1984
    %2619 = vmatpush2.bf16.msra.mxu0 %v1983
    %2620 = vmatprep.subr.bf16.mxu0 %v1976
    %2621 = vmatpush2.bf16.msra.mxu0 %v1975
    %2622 = vmatprep.mubr.bf16.mxu0 %v752
    %2623 = vmatmul.mubr.bf16.gmra.mxu0 %v751
    %v2624 = vpop.f32.mrf.mxu0
    %v2625 = vadd.f32 %v2582, %v2624
    %v2626 = vpop.f32.mrf.mxu0
    %v2627 = vadd.f32 %v2584, %v2626
    %v2628 = vpop.f32.mrf.mxu0
    %v2629 = vadd.f32 %v2586, %v2628
    %v2630 = vpop.f32.mrf.mxu0
    %v2631 = vadd.f32 %v2588, %v2630
    %2632 = vdwg.mxu0
    %v2633 = vpack.c.bf16 %v2371, %v2367
    %v2634 = vpack.c.bf16 %v2373, %v2369
    %v2635 = vpack.c.bf16 %v2457, %v2453
    %v2636 = vpack.c.bf16 %v2459, %v2455
    %v2637 = vpack.c.bf16 %v2543, %v2539
    %v2638 = vpack.c.bf16 %v2545, %v2541
    %v2639 = vpack.c.bf16 %v2629, %v2625
    %v2640 = vpack.c.bf16 %v2631, %v2627
    %v2641 = vld [vmem:[%s6] sm:$0xff]
    %v2643 = vlaneseq
    %v2644 = vshrl.u32 %v2643, 7
    %v2645 = vsub.s32 0, %v2644
    %v2646 = vrot.slane %v2641, %v2645
    %v2647 = vlaneseq
    %v2648 = vshrl.u32 %v2647, 7
    %v2649 = vsub.s32 1, %v2648
    %v2650 = vrot.slane %v2641, %v2649
    %v2651 = vlaneseq
    %v2652 = vshrl.u32 %v2651, 7
    %v2653 = vsub.s32 2, %v2652
    %v2654 = vrot.slane %v2641, %v2653
    %v2655 = vlaneseq
    %v2656 = vshrl.u32 %v2655, 7
    %v2657 = vsub.s32 3, %v2656
    %v2658 = vrot.slane %v2641, %v2657
    %v2659 = vlaneseq
    %v2660 = vshrl.u32 %v2659, 7
    %v2661 = vsub.s32 4, %v2660
    %v2662 = vrot.slane %v2641, %v2661
    %v2663 = vlaneseq
    %v2664 = vshrl.u32 %v2663, 7
    %v2665 = vsub.s32 5, %v2664
    %v2666 = vrot.slane %v2641, %v2665
    %v2667 = vlaneseq
    %v2668 = vshrl.u32 %v2667, 7
    %v2669 = vsub.s32 6, %v2668
    %v2670 = vrot.slane %v2641, %v2669
    %v2671 = vlaneseq
    %v2672 = vshrl.u32 %v2671, 7
    %v2673 = vsub.s32 7, %v2672
    %v2674 = vrot.slane %v2641, %v2673
    %v2683 = vpack.c.bf16 %v2646, %v2646
    %v2684 = vpack.c.bf16 %v2650, %v2650
    %v2685 = vpack.c.bf16 %v2654, %v2654
    %v2686 = vpack.c.bf16 %v2658, %v2658
    %v2687 = vpack.c.bf16 %v2662, %v2662
    %v2688 = vpack.c.bf16 %v2666, %v2666
    %v2689 = vpack.c.bf16 %v2670, %v2670
    %v2690 = vpack.c.bf16 %v2674, %v2674
    %v2692 = vpack.i.b16 %v2683, %v2683
    %v2694 = vlaneseq
    %v2695 = vshrl.u32 %v2694, 7
    %v2696 = vsub.s32 0, %v2695
    %v2697 = vrot.slane %v2692, %v2696
    %v2699 = vpack.i.b16 %v2684, %v2684
    %v2701 = vlaneseq
    %v2702 = vshrl.u32 %v2701, 7
    %v2703 = vsub.s32 0, %v2702
    %v2704 = vrot.slane %v2699, %v2703
    %v2706 = vpack.i.b16 %v2685, %v2685
    %v2708 = vlaneseq
    %v2709 = vshrl.u32 %v2708, 7
    %v2710 = vsub.s32 0, %v2709
    %v2711 = vrot.slane %v2706, %v2710
    %v2713 = vpack.i.b16 %v2686, %v2686
    %v2715 = vlaneseq
    %v2716 = vshrl.u32 %v2715, 7
    %v2717 = vsub.s32 0, %v2716
    %v2718 = vrot.slane %v2713, %v2717
    %v2720 = vpack.i.b16 %v2687, %v2687
    %v2722 = vlaneseq
    %v2723 = vshrl.u32 %v2722, 7
    %v2724 = vsub.s32 0, %v2723
    %v2725 = vrot.slane %v2720, %v2724
    %v2727 = vpack.i.b16 %v2688, %v2688
    %v2729 = vlaneseq
    %v2730 = vshrl.u32 %v2729, 7
    %v2731 = vsub.s32 0, %v2730
    %v2732 = vrot.slane %v2727, %v2731
    %v2734 = vpack.i.b16 %v2689, %v2689
    %v2736 = vlaneseq
    %v2737 = vshrl.u32 %v2736, 7
    %v2738 = vsub.s32 0, %v2737
    %v2739 = vrot.slane %v2734, %v2738
    %v2741 = vpack.i.b16 %v2690, %v2690
    %v2743 = vlaneseq
    %v2744 = vshrl.u32 %v2743, 7
    %v2745 = vsub.s32 0, %v2744
    %v2746 = vrot.slane %v2741, %v2745
    %v2747 = vadd.bf16 %v2633, %v2697
    %v2748 = vadd.bf16 %v2634, %v2704
    %v2749 = vadd.bf16 %v2635, %v2711
    %v2750 = vadd.bf16 %v2636, %v2718
    %v2751 = vadd.bf16 %v2637, %v2725
    %v2752 = vadd.bf16 %v2638, %v2732
    %v2753 = vadd.bf16 %v2639, %v2739
    %v2754 = vadd.bf16 %v2640, %v2746
    %v2755 = vmul.bf16 %v2747, 1045249613
    %v2756 = vmul.bf16 %v2748, 1045249613
    %v2757 = vmul.bf16 %v2749, 1045249613
    %v2758 = vmul.bf16 %v2750, 1045249613
    %v2759 = vmul.bf16 %v2751, 1045249613
    %v2760 = vmul.bf16 %v2752, 1045249613
    %v2761 = vmul.bf16 %v2753, 1045249613
    %v2762 = vmul.bf16 %v2754, 1045249613
    %v2763 = vmax.bf16 %v2747, %v2755
    %v2764 = vmax.bf16 %v2748, %v2756
    %v2765 = vmax.bf16 %v2749, %v2757
    %v2766 = vmax.bf16 %v2750, %v2758
    %v2767 = vmax.bf16 %v2751, %v2759
    %v2768 = vmax.bf16 %v2752, %v2760
    %v2769 = vmax.bf16 %v2753, %v2761
    %v2770 = vmax.bf16 %v2754, %v2762
    %v2771 = vld [vmem:[%s7] sm:$0xff]
    %v2772 = vld [vmem:[%s7 + $0x8] sm:$0xff]
    %v2773 = vld [vmem:[%s7 + $0x10] sm:$0xff]
    %v2774 = vld [vmem:[%s7 + $0x18] sm:$0xf]
    %v2775 = vld [vmem:[%s7 + $0x1c] sm:$0xff]
    %v2776 = vld [vmem:[%s7 + $0x24] sm:$0xff]
    %v2777 = vld [vmem:[%s7 + $0x2c] sm:$0xff]
    %v2778 = vld [vmem:[%s7 + $0x34] sm:$0xf]
    %v2779 = vld [vmem:[%s7 + $0x38] sm:$0xff]
    %v2780 = vld [vmem:[%s7 + $0x40] sm:$0xff]
    %v2781 = vld [vmem:[%s7 + $0x48] sm:$0xff]
    %v2782 = vld [vmem:[%s7 + $0x50] sm:$0xf]
    %v2783 = vld [vmem:[%s7 + $0x54] sm:$0xff]
    %v2784 = vld [vmem:[%s7 + $0x5c] sm:$0xff]
    %v2785 = vld [vmem:[%s7 + $0x64] sm:$0xff]
    %v2786 = vld [vmem:[%s7 + $0x6c] sm:$0xf]
    %v2787 = vld [vmem:[%s7 + $0x70] sm:$0xff]
    %v2788 = vld [vmem:[%s7 + $0x78] sm:$0xff]
    %v2789 = vld [vmem:[%s7 + $0x80] sm:$0xff]
    %v2790 = vld [vmem:[%s7 + $0x88] sm:$0xf]
    %v2791 = vld [vmem:[%s7 + $0x8c] sm:$0xff]
    %v2792 = vld [vmem:[%s7 + $0x94] sm:$0xff]
    %v2793 = vld [vmem:[%s7 + $0x9c] sm:$0xff]
    %v2794 = vld [vmem:[%s7 + $0xa4] sm:$0xf]
    %v2795 = vld [vmem:[%s7 + $0xa8] sm:$0xff]
    %v2796 = vld [vmem:[%s7 + $0xb0] sm:$0xff]
    %v2797 = vld [vmem:[%s7 + $0xb8] sm:$0xff]
    %v2798 = vld [vmem:[%s7 + $0xc0] sm:$0xf]
    %v2799 = vld [vmem:[%s7 + $0xc4] sm:$0xff]
    %v2800 = vld [vmem:[%s7 + $0xcc] sm:$0xff]
    %v2801 = vld [vmem:[%s7 + $0xd4] sm:$0xff]
    %v2802 = vld [vmem:[%s7 + $0xdc] sm:$0xf]
    %v2803 = vld [vmem:[%s7 + $0xe0] sm:$0xff]
    %v2804 = vld [vmem:[%s7 + $0xe8] sm:$0xff]
    %v2805 = vld [vmem:[%s7 + $0xf0] sm:$0xff]
    %v2806 = vld [vmem:[%s7 + $0xf8] sm:$0xf]
    %v2807 = vld [vmem:[%s7 + $0xfc] sm:$0xff]
    %v2808 = vld [vmem:[%s7 + $0x104] sm:$0xff]
    %v2809 = vld [vmem:[%s7 + $0x10c] sm:$0xff]
    %v2810 = vld [vmem:[%s7 + $0x114] sm:$0xf]
    %v2811 = vld [vmem:[%s7 + $0x118] sm:$0xff]
    %v2812 = vld [vmem:[%s7 + $0x120] sm:$0xff]
    %v2813 = vld [vmem:[%s7 + $0x128] sm:$0xff]
    %v2814 = vld [vmem:[%s7 + $0x130] sm:$0xf]
    %v2815 = vld [vmem:[%s7 + $0x134] sm:$0xff]
    %v2816 = vld [vmem:[%s7 + $0x13c] sm:$0xff]
    %v2817 = vld [vmem:[%s7 + $0x144] sm:$0xff]
    %v2818 = vld [vmem:[%s7 + $0x14c] sm:$0xf]
    %v2819 = vld [vmem:[%s7 + $0x150] sm:$0xff]
    %v2820 = vld [vmem:[%s7 + $0x158] sm:$0xff]
    %v2821 = vld [vmem:[%s7 + $0x160] sm:$0xff]
    %v2822 = vld [vmem:[%s7 + $0x168] sm:$0xf]
    %v2823 = vld [vmem:[%s7 + $0x16c] sm:$0xff]
    %v2824 = vld [vmem:[%s7 + $0x174] sm:$0xff]
    %v2825 = vld [vmem:[%s7 + $0x17c] sm:$0xff]
    %v2826 = vld [vmem:[%s7 + $0x184] sm:$0xf]
    %v2827 = vld [vmem:[%s7 + $0x188] sm:$0xff]
    %v2828 = vld [vmem:[%s7 + $0x190] sm:$0xff]
    %v2829 = vld [vmem:[%s7 + $0x198] sm:$0xff]
    %v2830 = vld [vmem:[%s7 + $0x1a0] sm:$0xf]
    %v2831 = vld [vmem:[%s7 + $0x1a4] sm:$0xff]
    %v2832 = vld [vmem:[%s7 + $0x1ac] sm:$0xff]
    %v2833 = vld [vmem:[%s7 + $0x1b4] sm:$0xff]
    %v2834 = vld [vmem:[%s7 + $0x1bc] sm:$0xf]
    %v2835 = vld [vmem:[%s7 + $0x1c0] sm:$0xff]
    %v2836 = vld [vmem:[%s7 + $0x1c8] sm:$0xff]
    %v2837 = vld [vmem:[%s7 + $0x1d0] sm:$0xff]
    %v2838 = vld [vmem:[%s7 + $0x1d8] sm:$0xf]
    %v2839 = vld [vmem:[%s7 + $0x1dc] sm:$0xff]
    %v2840 = vld [vmem:[%s7 + $0x1e4] sm:$0xff]
    %v2841 = vld [vmem:[%s7 + $0x1ec] sm:$0xff]
    %v2842 = vld [vmem:[%s7 + $0x1f4] sm:$0xf]
    %v2843 = vld [vmem:[%s7 + $0x1f8] sm:$0xff]
    %v2844 = vld [vmem:[%s7 + $0x200] sm:$0xff]
    %v2845 = vld [vmem:[%s7 + $0x208] sm:$0xff]
    %v2846 = vld [vmem:[%s7 + $0x210] sm:$0xf]
    %v2847 = vld [vmem:[%s7 + $0x214] sm:$0xff]
    %v2848 = vld [vmem:[%s7 + $0x21c] sm:$0xff]
    %v2849 = vld [vmem:[%s7 + $0x224] sm:$0xff]
    %v2850 = vld [vmem:[%s7 + $0x22c] sm:$0xf]
    %v2851 = vld [vmem:[%s7 + $0x230] sm:$0xff]
    %v2852 = vld [vmem:[%s7 + $0x238] sm:$0xff]
    %v2853 = vld [vmem:[%s7 + $0x240] sm:$0xff]
    %v2854 = vld [vmem:[%s7 + $0x248] sm:$0xf]
    %v2855 = vld [vmem:[%s7 + $0x24c] sm:$0xff]
    %v2856 = vld [vmem:[%s7 + $0x254] sm:$0xff]
    %v2857 = vld [vmem:[%s7 + $0x25c] sm:$0xff]
    %v2858 = vld [vmem:[%s7 + $0x264] sm:$0xf]
    %v2859 = vld [vmem:[%s7 + $0x268] sm:$0xff]
    %v2860 = vld [vmem:[%s7 + $0x270] sm:$0xff]
    %v2861 = vld [vmem:[%s7 + $0x278] sm:$0xff]
    %v2862 = vld [vmem:[%s7 + $0x280] sm:$0xf]
    %v2863 = vld [vmem:[%s7 + $0x284] sm:$0xff]
    %v2864 = vld [vmem:[%s7 + $0x28c] sm:$0xff]
    %v2865 = vld [vmem:[%s7 + $0x294] sm:$0xff]
    %v2866 = vld [vmem:[%s7 + $0x29c] sm:$0xf]
    %v2867 = vld [vmem:[%s7 + $0x2a0] sm:$0xff]
    %v2868 = vld [vmem:[%s7 + $0x2a8] sm:$0xff]
    %v2869 = vld [vmem:[%s7 + $0x2b0] sm:$0xff]
    %v2870 = vld [vmem:[%s7 + $0x2b8] sm:$0xf]
    %v2871 = vld [vmem:[%s7 + $0x2bc] sm:$0xff]
    %v2872 = vld [vmem:[%s7 + $0x2c4] sm:$0xff]
    %v2873 = vld [vmem:[%s7 + $0x2cc] sm:$0xff]
    %v2874 = vld [vmem:[%s7 + $0x2d4] sm:$0xf]
    %v2875 = vld [vmem:[%s7 + $0x2d8] sm:$0xff]
    %v2876 = vld [vmem:[%s7 + $0x2e0] sm:$0xff]
    %v2877 = vld [vmem:[%s7 + $0x2e8] sm:$0xff]
    %v2878 = vld [vmem:[%s7 + $0x2f0] sm:$0xf]
    %v2879 = vld [vmem:[%s7 + $0x2f4] sm:$0xff]
    %v2880 = vld [vmem:[%s7 + $0x2fc] sm:$0xff]
    %v2881 = vld [vmem:[%s7 + $0x304] sm:$0xff]
    %v2882 = vld [vmem:[%s7 + $0x30c] sm:$0xf]
    %v2883 = vld [vmem:[%s7 + $0x310] sm:$0xff]
    %v2884 = vld [vmem:[%s7 + $0x318] sm:$0xff]
    %v2885 = vld [vmem:[%s7 + $0x320] sm:$0xff]
    %v2886 = vld [vmem:[%s7 + $0x328] sm:$0xf]
    %v2887 = vld [vmem:[%s7 + $0x32c] sm:$0xff]
    %v2888 = vld [vmem:[%s7 + $0x334] sm:$0xff]
    %v2889 = vld [vmem:[%s7 + $0x33c] sm:$0xff]
    %v2890 = vld [vmem:[%s7 + $0x344] sm:$0xf]
    %v2891 = vld [vmem:[%s7 + $0x348] sm:$0xff]
    %v2892 = vld [vmem:[%s7 + $0x350] sm:$0xff]
    %v2893 = vld [vmem:[%s7 + $0x358] sm:$0xff]
    %v2894 = vld [vmem:[%s7 + $0x360] sm:$0xf]
    %v2895 = vld [vmem:[%s7 + $0x364] sm:$0xff]
    %v2896 = vld [vmem:[%s7 + $0x36c] sm:$0xff]
    %v2897 = vld [vmem:[%s7 + $0x374] sm:$0xff]
    %v2898 = vld [vmem:[%s7 + $0x37c] sm:$0xf]
    %v2899 = vld [vmem:[%s7 + $0x380] sm:$0xff]
    %v2900 = vld [vmem:[%s7 + $0x388] sm:$0xff]
    %v2901 = vld [vmem:[%s7 + $0x390] sm:$0xff]
    %v2902 = vld [vmem:[%s7 + $0x398] sm:$0xf]
    %v2903 = vld [vmem:[%s7 + $0x39c] sm:$0xff]
    %v2904 = vld [vmem:[%s7 + $0x3a4] sm:$0xff]
    %v2905 = vld [vmem:[%s7 + $0x3ac] sm:$0xff]
    %v2906 = vld [vmem:[%s7 + $0x3b4] sm:$0xf]
    %v2907 = vld [vmem:[%s7 + $0x3b8] sm:$0xff]
    %v2908 = vld [vmem:[%s7 + $0x3c0] sm:$0xff]
    %v2909 = vld [vmem:[%s7 + $0x3c8] sm:$0xff]
    %v2910 = vld [vmem:[%s7 + $0x3d0] sm:$0xf]
    %v2911 = vld [vmem:[%s7 + $0x3d4] sm:$0xff]
    %v2912 = vld [vmem:[%s7 + $0x3dc] sm:$0xff]
    %v2913 = vld [vmem:[%s7 + $0x3e4] sm:$0xff]
    %v2914 = vld [vmem:[%s7 + $0x3ec] sm:$0xf]
    %v2915 = vld [vmem:[%s7 + $0x3f0] sm:$0xff]
    %v2916 = vld [vmem:[%s7 + $0x3f8] sm:$0xff]
    %v2917 = vld [vmem:[%s7 + $0x400] sm:$0xff]
    %v2918 = vld [vmem:[%s7 + $0x408] sm:$0xf]
    %v2919 = vld [vmem:[%s7 + $0x40c] sm:$0xff]
    %v2920 = vld [vmem:[%s7 + $0x414] sm:$0xff]
    %v2921 = vld [vmem:[%s7 + $0x41c] sm:$0xff]
    %v2922 = vld [vmem:[%s7 + $0x424] sm:$0xf]
    %v2923 = vld [vmem:[%s7 + $0x428] sm:$0xff]
    %v2924 = vld [vmem:[%s7 + $0x430] sm:$0xff]
    %v2925 = vld [vmem:[%s7 + $0x438] sm:$0xff]
    %v2926 = vld [vmem:[%s7 + $0x440] sm:$0xf]
    %v2927 = vld [vmem:[%s7 + $0x444] sm:$0xff]
    %v2928 = vld [vmem:[%s7 + $0x44c] sm:$0xff]
    %v2929 = vld [vmem:[%s7 + $0x454] sm:$0xff]
    %v2930 = vld [vmem:[%s7 + $0x45c] sm:$0xf]
    %v2931 = vld [vmem:[%s7 + $0x460] sm:$0xff]
    %v2932 = vld [vmem:[%s7 + $0x468] sm:$0xff]
    %v2933 = vld [vmem:[%s7 + $0x470] sm:$0xff]
    %v2934 = vld [vmem:[%s7 + $0x478] sm:$0xf]
    %v2935 = vld [vmem:[%s7 + $0x47c] sm:$0xff]
    %v2936 = vld [vmem:[%s7 + $0x484] sm:$0xff]
    %v2937 = vld [vmem:[%s7 + $0x48c] sm:$0xff]
    %v2938 = vld [vmem:[%s7 + $0x494] sm:$0xf]
    %v2939 = vld [vmem:[%s7 + $0x498] sm:$0xff]
    %v2940 = vld [vmem:[%s7 + $0x4a0] sm:$0xff]
    %v2941 = vld [vmem:[%s7 + $0x4a8] sm:$0xff]
    %v2942 = vld [vmem:[%s7 + $0x4b0] sm:$0xf]
    %v2943 = vld [vmem:[%s7 + $0x4b4] sm:$0xff]
    %v2944 = vld [vmem:[%s7 + $0x4bc] sm:$0xff]
    %v2945 = vld [vmem:[%s7 + $0x4c4] sm:$0xff]
    %v2946 = vld [vmem:[%s7 + $0x4cc] sm:$0xf]
    %v2947 = vld [vmem:[%s7 + $0x4d0] sm:$0xff]
    %v2948 = vld [vmem:[%s7 + $0x4d8] sm:$0xff]
    %v2949 = vld [vmem:[%s7 + $0x4e0] sm:$0xff]
    %v2950 = vld [vmem:[%s7 + $0x4e8] sm:$0xf]
    %v2951 = vld [vmem:[%s7 + $0x4ec] sm:$0xff]
    %v2952 = vld [vmem:[%s7 + $0x4f4] sm:$0xff]
    %v2953 = vld [vmem:[%s7 + $0x4fc] sm:$0xff]
    %v2954 = vld [vmem:[%s7 + $0x504] sm:$0xf]
    %v2955 = vld [vmem:[%s7 + $0x508] sm:$0xff]
    %v2956 = vld [vmem:[%s7 + $0x510] sm:$0xff]
    %v2957 = vld [vmem:[%s7 + $0x518] sm:$0xff]
    %v2958 = vld [vmem:[%s7 + $0x520] sm:$0xf]
    %v2959 = vld [vmem:[%s7 + $0x524] sm:$0xff]
    %v2960 = vld [vmem:[%s7 + $0x52c] sm:$0xff]
    %v2961 = vld [vmem:[%s7 + $0x534] sm:$0xff]
    %v2962 = vld [vmem:[%s7 + $0x53c] sm:$0xf]
    %v2963 = vld [vmem:[%s7 + $0x540] sm:$0xff]
    %v2964 = vld [vmem:[%s7 + $0x548] sm:$0xff]
    %v2965 = vld [vmem:[%s7 + $0x550] sm:$0xff]
    %v2966 = vld [vmem:[%s7 + $0x558] sm:$0xf]
    %v2967 = vld [vmem:[%s7 + $0x55c] sm:$0xff]
    %v2968 = vld [vmem:[%s7 + $0x564] sm:$0xff]
    %v2969 = vld [vmem:[%s7 + $0x56c] sm:$0xff]
    %v2970 = vld [vmem:[%s7 + $0x574] sm:$0xf]
    %v2971 = vld [vmem:[%s7 + $0x578] sm:$0xff]
    %v2972 = vld [vmem:[%s7 + $0x580] sm:$0xff]
    %v2973 = vld [vmem:[%s7 + $0x588] sm:$0xff]
    %v2974 = vld [vmem:[%s7 + $0x590] sm:$0xf]
    %v2975 = vld [vmem:[%s7 + $0x594] sm:$0xff]
    %v2976 = vld [vmem:[%s7 + $0x59c] sm:$0xff]
    %v2977 = vld [vmem:[%s7 + $0x5a4] sm:$0xff]
    %v2978 = vld [vmem:[%s7 + $0x5ac] sm:$0xf]
    %v2979 = vld [vmem:[%s7 + $0x5b0] sm:$0xff]
    %v2980 = vld [vmem:[%s7 + $0x5b8] sm:$0xff]
    %v2981 = vld [vmem:[%s7 + $0x5c0] sm:$0xff]
    %v2982 = vld [vmem:[%s7 + $0x5c8] sm:$0xf]
    %v2983 = vld [vmem:[%s7 + $0x5cc] sm:$0xff]
    %v2984 = vld [vmem:[%s7 + $0x5d4] sm:$0xff]
    %v2985 = vld [vmem:[%s7 + $0x5dc] sm:$0xff]
    %v2986 = vld [vmem:[%s7 + $0x5e4] sm:$0xf]
    %v2987 = vld [vmem:[%s7 + $0x5e8] sm:$0xff]
    %v2988 = vld [vmem:[%s7 + $0x5f0] sm:$0xff]
    %v2989 = vld [vmem:[%s7 + $0x5f8] sm:$0xff]
    %v2990 = vld [vmem:[%s7 + $0x600] sm:$0xf]
    %v2991 = vld [vmem:[%s7 + $0x604] sm:$0xff]
    %v2992 = vld [vmem:[%s7 + $0x60c] sm:$0xff]
    %v2993 = vld [vmem:[%s7 + $0x614] sm:$0xff]
    %v2994 = vld [vmem:[%s7 + $0x61c] sm:$0xf]
    %v2995 = vld [vmem:[%s7 + $0x620] sm:$0xff]
    %v2996 = vld [vmem:[%s7 + $0x628] sm:$0xff]
    %v2997 = vld [vmem:[%s7 + $0x630] sm:$0xff]
    %v2998 = vld [vmem:[%s7 + $0x638] sm:$0xf]
    %v2999 = vld [vmem:[%s7 + $0x63c] sm:$0xff]
    %v3000 = vld [vmem:[%s7 + $0x644] sm:$0xff]
    %v3001 = vld [vmem:[%s7 + $0x64c] sm:$0xff]
    %v3002 = vld [vmem:[%s7 + $0x654] sm:$0xf]
    %v3003 = vld [vmem:[%s7 + $0x658] sm:$0xff]
    %v3004 = vld [vmem:[%s7 + $0x660] sm:$0xff]
    %v3005 = vld [vmem:[%s7 + $0x668] sm:$0xff]
    %v3006 = vld [vmem:[%s7 + $0x670] sm:$0xf]
    %v3007 = vld [vmem:[%s7 + $0x674] sm:$0xff]
    %v3008 = vld [vmem:[%s7 + $0x67c] sm:$0xff]
    %v3009 = vld [vmem:[%s7 + $0x684] sm:$0xff]
    %v3010 = vld [vmem:[%s7 + $0x68c] sm:$0xf]
    %v3011 = vld [vmem:[%s7 + $0x690] sm:$0xff]
    %v3012 = vld [vmem:[%s7 + $0x698] sm:$0xff]
    %v3013 = vld [vmem:[%s7 + $0x6a0] sm:$0xff]
    %v3014 = vld [vmem:[%s7 + $0x6a8] sm:$0xf]
    %v3015 = vld [vmem:[%s7 + $0x6ac] sm:$0xff]
    %v3016 = vld [vmem:[%s7 + $0x6b4] sm:$0xff]
    %v3017 = vld [vmem:[%s7 + $0x6bc] sm:$0xff]
    %v3018 = vld [vmem:[%s7 + $0x6c4] sm:$0xf]
    %v3019 = vld [vmem:[%s7 + $0x6c8] sm:$0xff]
    %v3020 = vld [vmem:[%s7 + $0x6d0] sm:$0xff]
    %v3021 = vld [vmem:[%s7 + $0x6d8] sm:$0xff]
    %v3022 = vld [vmem:[%s7 + $0x6e0] sm:$0xf]
    %v3023 = vld [vmem:[%s7 + $0x6e4] sm:$0xff]
    %v3024 = vld [vmem:[%s7 + $0x6ec] sm:$0xff]
    %v3025 = vld [vmem:[%s7 + $0x6f4] sm:$0xff]
    %v3026 = vld [vmem:[%s7 + $0x6fc] sm:$0xf]
    %v3027 = vld [vmem:[%s7 + $0x700] sm:$0xff]
    %v3028 = vld [vmem:[%s7 + $0x708] sm:$0xff]
    %v3029 = vld [vmem:[%s7 + $0x710] sm:$0xff]
    %v3030 = vld [vmem:[%s7 + $0x718] sm:$0xf]
    %v3031 = vld [vmem:[%s7 + $0x71c] sm:$0xff]
    %v3032 = vld [vmem:[%s7 + $0x724] sm:$0xff]
    %v3033 = vld [vmem:[%s7 + $0x72c] sm:$0xff]
    %v3034 = vld [vmem:[%s7 + $0x734] sm:$0xf]
    %v3035 = vld [vmem:[%s7 + $0x738] sm:$0xff]
    %v3036 = vld [vmem:[%s7 + $0x740] sm:$0xff]
    %v3037 = vld [vmem:[%s7 + $0x748] sm:$0xff]
    %v3038 = vld [vmem:[%s7 + $0x750] sm:$0xf]
    %v3039 = vld [vmem:[%s7 + $0x754] sm:$0xff]
    %v3040 = vld [vmem:[%s7 + $0x75c] sm:$0xff]
    %v3041 = vld [vmem:[%s7 + $0x764] sm:$0xff]
    %v3042 = vld [vmem:[%s7 + $0x76c] sm:$0xf]
    %v3043 = vld [vmem:[%s7 + $0x770] sm:$0xff]
    %v3044 = vld [vmem:[%s7 + $0x778] sm:$0xff]
    %v3045 = vld [vmem:[%s7 + $0x780] sm:$0xff]
    %v3046 = vld [vmem:[%s7 + $0x788] sm:$0xf]
    %v3047 = vld [vmem:[%s7 + $0x78c] sm:$0xff]
    %v3048 = vld [vmem:[%s7 + $0x794] sm:$0xff]
    %v3049 = vld [vmem:[%s7 + $0x79c] sm:$0xff]
    %v3050 = vld [vmem:[%s7 + $0x7a4] sm:$0xf]
    %v3051 = vld [vmem:[%s7 + $0x7a8] sm:$0xff]
    %v3052 = vld [vmem:[%s7 + $0x7b0] sm:$0xff]
    %v3053 = vld [vmem:[%s7 + $0x7b8] sm:$0xff]
    %v3054 = vld [vmem:[%s7 + $0x7c0] sm:$0xf]
    %v3055 = vld [vmem:[%s7 + $0x7c4] sm:$0xff]
    %v3056 = vld [vmem:[%s7 + $0x7cc] sm:$0xff]
    %v3057 = vld [vmem:[%s7 + $0x7d4] sm:$0xff]
    %v3058 = vld [vmem:[%s7 + $0x7dc] sm:$0xf]
    %v3059 = vld [vmem:[%s7 + $0x7e0] sm:$0xff]
    %v3060 = vld [vmem:[%s7 + $0x7e8] sm:$0xff]
    %v3061 = vld [vmem:[%s7 + $0x7f0] sm:$0xff]
    %v3062 = vld [vmem:[%s7 + $0x7f8] sm:$0xf]
    %v3063 = vld [vmem:[%s7 + $0x7fc] sm:$0xff]
    %v3064 = vld [vmem:[%s7 + $0x804] sm:$0xff]
    %v3065 = vld [vmem:[%s7 + $0x80c] sm:$0xff]
    %v3066 = vld [vmem:[%s7 + $0x814] sm:$0xf]
    %v3067 = vld [vmem:[%s7 + $0x818] sm:$0xff]
    %v3068 = vld [vmem:[%s7 + $0x820] sm:$0xff]
    %v3069 = vld [vmem:[%s7 + $0x828] sm:$0xff]
    %v3070 = vld [vmem:[%s7 + $0x830] sm:$0xf]
    %v3071 = vld [vmem:[%s7 + $0x834] sm:$0xff]
    %v3072 = vld [vmem:[%s7 + $0x83c] sm:$0xff]
    %v3073 = vld [vmem:[%s7 + $0x844] sm:$0xff]
    %v3074 = vld [vmem:[%s7 + $0x84c] sm:$0xf]
    %v3075 = vld [vmem:[%s7 + $0x850] sm:$0xff]
    %v3076 = vld [vmem:[%s7 + $0x858] sm:$0xff]
    %v3077 = vld [vmem:[%s7 + $0x860] sm:$0xff]
    %v3078 = vld [vmem:[%s7 + $0x868] sm:$0xf]
    %v3079 = vld [vmem:[%s7 + $0x86c] sm:$0xff]
    %v3080 = vld [vmem:[%s7 + $0x874] sm:$0xff]
    %v3081 = vld [vmem:[%s7 + $0x87c] sm:$0xff]
    %v3082 = vld [vmem:[%s7 + $0x884] sm:$0xf]
    %v3083 = vld [vmem:[%s7 + $0x888] sm:$0xff]
    %v3084 = vld [vmem:[%s7 + $0x890] sm:$0xff]
    %v3085 = vld [vmem:[%s7 + $0x898] sm:$0xff]
    %v3086 = vld [vmem:[%s7 + $0x8a0] sm:$0xf]
    %v3087 = vld [vmem:[%s7 + $0x8a4] sm:$0xff]
    %v3088 = vld [vmem:[%s7 + $0x8ac] sm:$0xff]
    %v3089 = vld [vmem:[%s7 + $0x8b4] sm:$0xff]
    %v3090 = vld [vmem:[%s7 + $0x8bc] sm:$0xf]
    %v3091 = vld [vmem:[%s7 + $0x8c0] sm:$0xff]
    %v3092 = vld [vmem:[%s7 + $0x8c8] sm:$0xff]
    %v3093 = vld [vmem:[%s7 + $0x8d0] sm:$0xff]
    %v3094 = vld [vmem:[%s7 + $0x8d8] sm:$0xf]
    %v3095 = vld [vmem:[%s7 + $0x8dc] sm:$0xff]
    %v3096 = vld [vmem:[%s7 + $0x8e4] sm:$0xff]
    %v3097 = vld [vmem:[%s7 + $0x8ec] sm:$0xff]
    %v3098 = vld [vmem:[%s7 + $0x8f4] sm:$0xf]
    %v3099 = vld [vmem:[%s7 + $0x8f8] sm:$0xff]
    %v3100 = vld [vmem:[%s7 + $0x900] sm:$0xff]
    %v3101 = vld [vmem:[%s7 + $0x908] sm:$0xff]
    %v3102 = vld [vmem:[%s7 + $0x910] sm:$0xf]
    %v3103 = vld [vmem:[%s7 + $0x914] sm:$0xff]
    %v3104 = vld [vmem:[%s7 + $0x91c] sm:$0xff]
    %v3105 = vld [vmem:[%s7 + $0x924] sm:$0xff]
    %v3106 = vld [vmem:[%s7 + $0x92c] sm:$0xf]
    %v3107 = vld [vmem:[%s7 + $0x930] sm:$0xff]
    %v3108 = vld [vmem:[%s7 + $0x938] sm:$0xff]
    %v3109 = vld [vmem:[%s7 + $0x940] sm:$0xff]
    %v3110 = vld [vmem:[%s7 + $0x948] sm:$0xf]
    %v3111 = vld [vmem:[%s7 + $0x94c] sm:$0xff]
    %v3112 = vld [vmem:[%s7 + $0x954] sm:$0xff]
    %v3113 = vld [vmem:[%s7 + $0x95c] sm:$0xff]
    %v3114 = vld [vmem:[%s7 + $0x964] sm:$0xf]
    %v3115 = vld [vmem:[%s7 + $0x968] sm:$0xff]
    %v3116 = vld [vmem:[%s7 + $0x970] sm:$0xff]
    %v3117 = vld [vmem:[%s7 + $0x978] sm:$0xff]
    %v3118 = vld [vmem:[%s7 + $0x980] sm:$0xf]
    %v3119 = vld [vmem:[%s7 + $0x984] sm:$0xff]
    %v3120 = vld [vmem:[%s7 + $0x98c] sm:$0xff]
    %v3121 = vld [vmem:[%s7 + $0x994] sm:$0xff]
    %v3122 = vld [vmem:[%s7 + $0x99c] sm:$0xf]
    %v3123 = vld [vmem:[%s7 + $0x9a0] sm:$0xff]
    %v3124 = vld [vmem:[%s7 + $0x9a8] sm:$0xff]
    %v3125 = vld [vmem:[%s7 + $0x9b0] sm:$0xff]
    %v3126 = vld [vmem:[%s7 + $0x9b8] sm:$0xf]
    %v3127 = vld [vmem:[%s7 + $0x9bc] sm:$0xff]
    %v3128 = vld [vmem:[%s7 + $0x9c4] sm:$0xff]
    %v3129 = vld [vmem:[%s7 + $0x9cc] sm:$0xff]
    %v3130 = vld [vmem:[%s7 + $0x9d4] sm:$0xf]
    %v3131 = vld [vmem:[%s7 + $0x9d8] sm:$0xff]
    %v3132 = vld [vmem:[%s7 + $0x9e0] sm:$0xff]
    %v3133 = vld [vmem:[%s7 + $0x9e8] sm:$0xff]
    %v3134 = vld [vmem:[%s7 + $0x9f0] sm:$0xf]
    %v3135 = vld [vmem:[%s7 + $0x9f4] sm:$0xff]
    %v3136 = vld [vmem:[%s7 + $0x9fc] sm:$0xff]
    %v3137 = vld [vmem:[%s7 + $0xa04] sm:$0xff]
    %v3138 = vld [vmem:[%s7 + $0xa0c] sm:$0xf]
    %v3139 = vld [vmem:[%s7 + $0xa10] sm:$0xff]
    %v3140 = vld [vmem:[%s7 + $0xa18] sm:$0xff]
    %v3141 = vld [vmem:[%s7 + $0xa20] sm:$0xff]
    %v3142 = vld [vmem:[%s7 + $0xa28] sm:$0xf]
    %v3143 = vld [vmem:[%s7 + $0xa2c] sm:$0xff]
    %v3144 = vld [vmem:[%s7 + $0xa34] sm:$0xff]
    %v3145 = vld [vmem:[%s7 + $0xa3c] sm:$0xff]
    %v3146 = vld [vmem:[%s7 + $0xa44] sm:$0xf]
    %v3147 = vld [vmem:[%s7 + $0xa48] sm:$0xff]
    %v3148 = vld [vmem:[%s7 + $0xa50] sm:$0xff]
    %v3149 = vld [vmem:[%s7 + $0xa58] sm:$0xff]
    %v3150 = vld [vmem:[%s7 + $0xa60] sm:$0xf]
    %v3151 = vld [vmem:[%s7 + $0xa64] sm:$0xff]
    %v3152 = vld [vmem:[%s7 + $0xa6c] sm:$0xff]
    %v3153 = vld [vmem:[%s7 + $0xa74] sm:$0xff]
    %v3154 = vld [vmem:[%s7 + $0xa7c] sm:$0xf]
    %v3155 = vld [vmem:[%s7 + $0xa80] sm:$0xff]
    %v3156 = vld [vmem:[%s7 + $0xa88] sm:$0xff]
    %v3157 = vld [vmem:[%s7 + $0xa90] sm:$0xff]
    %v3158 = vld [vmem:[%s7 + $0xa98] sm:$0xf]
    %v3159 = vld [vmem:[%s7 + $0xa9c] sm:$0xff]
    %v3160 = vld [vmem:[%s7 + $0xaa4] sm:$0xff]
    %v3161 = vld [vmem:[%s7 + $0xaac] sm:$0xff]
    %v3162 = vld [vmem:[%s7 + $0xab4] sm:$0xf]
    %v3163 = vld [vmem:[%s7 + $0xab8] sm:$0xff]
    %v3164 = vld [vmem:[%s7 + $0xac0] sm:$0xff]
    %v3165 = vld [vmem:[%s7 + $0xac8] sm:$0xff]
    %v3166 = vld [vmem:[%s7 + $0xad0] sm:$0xf]
    %v3167 = vld [vmem:[%s7 + $0xad4] sm:$0xff]
    %v3168 = vld [vmem:[%s7 + $0xadc] sm:$0xff]
    %v3169 = vld [vmem:[%s7 + $0xae4] sm:$0xff]
    %v3170 = vld [vmem:[%s7 + $0xaec] sm:$0xf]
    %v3171 = vld [vmem:[%s7 + $0xaf0] sm:$0xff]
    %v3172 = vld [vmem:[%s7 + $0xaf8] sm:$0xff]
    %v3173 = vld [vmem:[%s7 + $0xb00] sm:$0xff]
    %v3174 = vld [vmem:[%s7 + $0xb08] sm:$0xf]
    %v3175 = vld [vmem:[%s7 + $0xb0c] sm:$0xff]
    %v3176 = vld [vmem:[%s7 + $0xb14] sm:$0xff]
    %v3177 = vld [vmem:[%s7 + $0xb1c] sm:$0xff]
    %v3178 = vld [vmem:[%s7 + $0xb24] sm:$0xf]
    %v3179 = vld [vmem:[%s7 + $0xb28] sm:$0xff]
    %v3180 = vld [vmem:[%s7 + $0xb30] sm:$0xff]
    %v3181 = vld [vmem:[%s7 + $0xb38] sm:$0xff]
    %v3182 = vld [vmem:[%s7 + $0xb40] sm:$0xf]
    %v3183 = vld [vmem:[%s7 + $0xb44] sm:$0xff]
    %v3184 = vld [vmem:[%s7 + $0xb4c] sm:$0xff]
    %v3185 = vld [vmem:[%s7 + $0xb54] sm:$0xff]
    %v3186 = vld [vmem:[%s7 + $0xb5c] sm:$0xf]
    %v3187 = vld [vmem:[%s7 + $0xb60] sm:$0xff]
    %v3188 = vld [vmem:[%s7 + $0xb68] sm:$0xff]
    %v3189 = vld [vmem:[%s7 + $0xb70] sm:$0xff]
    %v3190 = vld [vmem:[%s7 + $0xb78] sm:$0xf]
    %v3191 = vld [vmem:[%s7 + $0xb7c] sm:$0xff]
    %v3192 = vld [vmem:[%s7 + $0xb84] sm:$0xff]
    %v3193 = vld [vmem:[%s7 + $0xb8c] sm:$0xff]
    %v3194 = vld [vmem:[%s7 + $0xb94] sm:$0xf]
    %v3195 = vld [vmem:[%s7 + $0xb98] sm:$0xff]
    %v3196 = vld [vmem:[%s7 + $0xba0] sm:$0xff]
    %v3197 = vld [vmem:[%s7 + $0xba8] sm:$0xff]
    %v3198 = vld [vmem:[%s7 + $0xbb0] sm:$0xf]
    %v3199 = vld [vmem:[%s7 + $0xbb4] sm:$0xff]
    %v3200 = vld [vmem:[%s7 + $0xbbc] sm:$0xff]
    %v3201 = vld [vmem:[%s7 + $0xbc4] sm:$0xff]
    %v3202 = vld [vmem:[%s7 + $0xbcc] sm:$0xf]
    %v3203 = vld [vmem:[%s7 + $0xbd0] sm:$0xff]
    %v3204 = vld [vmem:[%s7 + $0xbd8] sm:$0xff]
    %v3205 = vld [vmem:[%s7 + $0xbe0] sm:$0xff]
    %v3206 = vld [vmem:[%s7 + $0xbe8] sm:$0xf]
    %v3207 = vld [vmem:[%s7 + $0xbec] sm:$0xff]
    %v3208 = vld [vmem:[%s7 + $0xbf4] sm:$0xff]
    %v3209 = vld [vmem:[%s7 + $0xbfc] sm:$0xff]
    %v3210 = vld [vmem:[%s7 + $0xc04] sm:$0xf]
    %v3211 = vld [vmem:[%s7 + $0xc08] sm:$0xff]
    %v3212 = vld [vmem:[%s7 + $0xc10] sm:$0xff]
    %v3213 = vld [vmem:[%s7 + $0xc18] sm:$0xff]
    %v3214 = vld [vmem:[%s7 + $0xc20] sm:$0xf]
    %v3215 = vld [vmem:[%s7 + $0xc24] sm:$0xff]
    %v3216 = vld [vmem:[%s7 + $0xc2c] sm:$0xff]
    %v3217 = vld [vmem:[%s7 + $0xc34] sm:$0xff]
    %v3218 = vld [vmem:[%s7 + $0xc3c] sm:$0xf]
    %v3219 = vld [vmem:[%s7 + $0xc40] sm:$0xff]
    %v3220 = vld [vmem:[%s7 + $0xc48] sm:$0xff]
    %v3221 = vld [vmem:[%s7 + $0xc50] sm:$0xff]
    %v3222 = vld [vmem:[%s7 + $0xc58] sm:$0xf]
    %v3223 = vld [vmem:[%s7 + $0xc5c] sm:$0xff]
    %v3224 = vld [vmem:[%s7 + $0xc64] sm:$0xff]
    %v3225 = vld [vmem:[%s7 + $0xc6c] sm:$0xff]
    %v3226 = vld [vmem:[%s7 + $0xc74] sm:$0xf]
    %v3227 = vld [vmem:[%s7 + $0xc78] sm:$0xff]
    %v3228 = vld [vmem:[%s7 + $0xc80] sm:$0xff]
    %v3229 = vld [vmem:[%s7 + $0xc88] sm:$0xff]
    %v3230 = vld [vmem:[%s7 + $0xc90] sm:$0xf]
    %v3231 = vld [vmem:[%s7 + $0xc94] sm:$0xff]
    %v3232 = vld [vmem:[%s7 + $0xc9c] sm:$0xff]
    %v3233 = vld [vmem:[%s7 + $0xca4] sm:$0xff]
    %v3234 = vld [vmem:[%s7 + $0xcac] sm:$0xf]
    %v3235 = vld [vmem:[%s7 + $0xcb0] sm:$0xff]
    %v3236 = vld [vmem:[%s7 + $0xcb8] sm:$0xff]
    %v3237 = vld [vmem:[%s7 + $0xcc0] sm:$0xff]
    %v3238 = vld [vmem:[%s7 + $0xcc8] sm:$0xf]
    %v3239 = vld [vmem:[%s7 + $0xccc] sm:$0xff]
    %v3240 = vld [vmem:[%s7 + $0xcd4] sm:$0xff]
    %v3241 = vld [vmem:[%s7 + $0xcdc] sm:$0xff]
    %v3242 = vld [vmem:[%s7 + $0xce4] sm:$0xf]
    %v3243 = vld [vmem:[%s7 + $0xce8] sm:$0xff]
    %v3244 = vld [vmem:[%s7 + $0xcf0] sm:$0xff]
    %v3245 = vld [vmem:[%s7 + $0xcf8] sm:$0xff]
    %v3246 = vld [vmem:[%s7 + $0xd00] sm:$0xf]
    %v3247 = vld [vmem:[%s7 + $0xd04] sm:$0xff]
    %v3248 = vld [vmem:[%s7 + $0xd0c] sm:$0xff]
    %v3249 = vld [vmem:[%s7 + $0xd14] sm:$0xff]
    %v3250 = vld [vmem:[%s7 + $0xd1c] sm:$0xf]
    %v3251 = vld [vmem:[%s7 + $0xd20] sm:$0xff]
    %v3252 = vld [vmem:[%s7 + $0xd28] sm:$0xff]
    %v3253 = vld [vmem:[%s7 + $0xd30] sm:$0xff]
    %v3254 = vld [vmem:[%s7 + $0xd38] sm:$0xf]
    %v3255 = vld [vmem:[%s7 + $0xd3c] sm:$0xff]
    %v3256 = vld [vmem:[%s7 + $0xd44] sm:$0xff]
    %v3257 = vld [vmem:[%s7 + $0xd4c] sm:$0xff]
    %v3258 = vld [vmem:[%s7 + $0xd54] sm:$0xf]
    %v3259 = vld [vmem:[%s7 + $0xd58] sm:$0xff]
    %v3260 = vld [vmem:[%s7 + $0xd60] sm:$0xff]
    %v3261 = vld [vmem:[%s7 + $0xd68] sm:$0xff]
    %v3262 = vld [vmem:[%s7 + $0xd70] sm:$0xf]
    %v3263 = vld [vmem:[%s7 + $0xd74] sm:$0xff]
    %v3264 = vld [vmem:[%s7 + $0xd7c] sm:$0xff]
    %v3265 = vld [vmem:[%s7 + $0xd84] sm:$0xff]
    %v3266 = vld [vmem:[%s7 + $0xd8c] sm:$0xf]
    %v3267 = vld [vmem:[%s7 + $0xd90] sm:$0xff]
    %v3268 = vld [vmem:[%s7 + $0xd98] sm:$0xff]
    %v3269 = vld [vmem:[%s7 + $0xda0] sm:$0xff]
    %v3270 = vld [vmem:[%s7 + $0xda8] sm:$0xf]
    %v3271 = vld [vmem:[%s7 + $0xdac] sm:$0xff]
    %v3272 = vld [vmem:[%s7 + $0xdb4] sm:$0xff]
    %v3273 = vld [vmem:[%s7 + $0xdbc] sm:$0xff]
    %v3274 = vld [vmem:[%s7 + $0xdc4] sm:$0xf]
    %v3275 = vld [vmem:[%s7 + $0xdc8] sm:$0xff]
    %v3276 = vld [vmem:[%s7 + $0xdd0] sm:$0xff]
    %v3277 = vld [vmem:[%s7 + $0xdd8] sm:$0xff]
    %v3278 = vld [vmem:[%s7 + $0xde0] sm:$0xf]
    %v3279 = vld [vmem:[%s7 + $0xde4] sm:$0xff]
    %v3280 = vld [vmem:[%s7 + $0xdec] sm:$0xff]
    %v3281 = vld [vmem:[%s7 + $0xdf4] sm:$0xff]
    %v3282 = vld [vmem:[%s7 + $0xdfc] sm:$0xf]
    %v3795 = vunpack.c.l.b16 %v2771
    %v3796 = vunpack.c.h.b16 %v2771
    %v3797 = vunpack.c.l.b16 %v2772
    %v3798 = vunpack.c.h.b16 %v2772
    %v3799 = vunpack.c.l.b16 %v2773
    %v3800 = vunpack.c.h.b16 %v2773
    %v3801 = vunpack.c.l.b16 %v2774
    %v3802 = vunpack.c.l.b16 %v2775
    %v3803 = vunpack.c.h.b16 %v2775
    %v3804 = vunpack.c.l.b16 %v2776
    %v3805 = vunpack.c.h.b16 %v2776
    %v3806 = vunpack.c.l.b16 %v2777
    %v3807 = vunpack.c.h.b16 %v2777
    %v3808 = vunpack.c.l.b16 %v2778
    %v3809 = vunpack.c.l.b16 %v2779
    %v3810 = vunpack.c.h.b16 %v2779
    %v3811 = vunpack.c.l.b16 %v2780
    %v3812 = vunpack.c.h.b16 %v2780
    %v3813 = vunpack.c.l.b16 %v2781
    %v3814 = vunpack.c.h.b16 %v2781
    %v3815 = vunpack.c.l.b16 %v2782
    %v3816 = vunpack.c.l.b16 %v2783
    %v3817 = vunpack.c.h.b16 %v2783
    %v3818 = vunpack.c.l.b16 %v2784
    %v3819 = vunpack.c.h.b16 %v2784
    %v3820 = vunpack.c.l.b16 %v2785
    %v3821 = vunpack.c.h.b16 %v2785
    %v3822 = vunpack.c.l.b16 %v2786
    %v3823 = vunpack.c.l.b16 %v2787
    %v3824 = vunpack.c.h.b16 %v2787
    %v3825 = vunpack.c.l.b16 %v2788
    %v3826 = vunpack.c.h.b16 %v2788
    %v3827 = vunpack.c.l.b16 %v2789
    %v3828 = vunpack.c.h.b16 %v2789
    %v3829 = vunpack.c.l.b16 %v2790
    %v3830 = vunpack.c.l.b16 %v2791
    %v3831 = vunpack.c.h.b16 %v2791
    %v3832 = vunpack.c.l.b16 %v2792
    %v3833 = vunpack.c.h.b16 %v2792
    %v3834 = vunpack.c.l.b16 %v2793
    %v3835 = vunpack.c.h.b16 %v2793
    %v3836 = vunpack.c.l.b16 %v2794
    %v3837 = vunpack.c.l.b16 %v2795
    %v3838 = vunpack.c.h.b16 %v2795
    %v3839 = vunpack.c.l.b16 %v2796
    %v3840 = vunpack.c.h.b16 %v2796
    %v3841 = vunpack.c.l.b16 %v2797
    %v3842 = vunpack.c.h.b16 %v2797
    %v3843 = vunpack.c.l.b16 %v2798
    %v3844 = vunpack.c.l.b16 %v2799
    %v3845 = vunpack.c.h.b16 %v2799
    %v3846 = vunpack.c.l.b16 %v2800
    %v3847 = vunpack.c.h.b16 %v2800
    %v3848 = vunpack.c.l.b16 %v2801
    %v3849 = vunpack.c.h.b16 %v2801
    %v3850 = vunpack.c.l.b16 %v2802
    %v3851 = vunpack.c.l.b16 %v2803
    %v3852 = vunpack.c.h.b16 %v2803
    %v3853 = vunpack.c.l.b16 %v2804
    %v3854 = vunpack.c.h.b16 %v2804
    %v3855 = vunpack.c.l.b16 %v2805
    %v3856 = vunpack.c.h.b16 %v2805
    %v3857 = vunpack.c.l.b16 %v2806
    %v3858 = vunpack.c.l.b16 %v2807
    %v3859 = vunpack.c.h.b16 %v2807
    %v3860 = vunpack.c.l.b16 %v2808
    %v3861 = vunpack.c.h.b16 %v2808
    %v3862 = vunpack.c.l.b16 %v2809
    %v3863 = vunpack.c.h.b16 %v2809
    %v3864 = vunpack.c.l.b16 %v2810
    %v3865 = vunpack.c.l.b16 %v2811
    %v3866 = vunpack.c.h.b16 %v2811
    %v3867 = vunpack.c.l.b16 %v2812
    %v3868 = vunpack.c.h.b16 %v2812
    %v3869 = vunpack.c.l.b16 %v2813
    %v3870 = vunpack.c.h.b16 %v2813
    %v3871 = vunpack.c.l.b16 %v2814
    %v3872 = vunpack.c.l.b16 %v2815
    %v3873 = vunpack.c.h.b16 %v2815
    %v3874 = vunpack.c.l.b16 %v2816
    %v3875 = vunpack.c.h.b16 %v2816
    %v3876 = vunpack.c.l.b16 %v2817
    %v3877 = vunpack.c.h.b16 %v2817
    %v3878 = vunpack.c.l.b16 %v2818
    %v3879 = vunpack.c.l.b16 %v2819
    %v3880 = vunpack.c.h.b16 %v2819
    %v3881 = vunpack.c.l.b16 %v2820
    %v3882 = vunpack.c.h.b16 %v2820
    %v3883 = vunpack.c.l.b16 %v2821
    %v3884 = vunpack.c.h.b16 %v2821
    %v3885 = vunpack.c.l.b16 %v2822
    %v3886 = vunpack.c.l.b16 %v2823
    %v3887 = vunpack.c.h.b16 %v2823
    %v3888 = vunpack.c.l.b16 %v2824
    %v3889 = vunpack.c.h.b16 %v2824
    %v3890 = vunpack.c.l.b16 %v2825
    %v3891 = vunpack.c.h.b16 %v2825
    %v3892 = vunpack.c.l.b16 %v2826
    %v3893 = vunpack.c.l.b16 %v2827
    %v3894 = vunpack.c.h.b16 %v2827
    %v3895 = vunpack.c.l.b16 %v2828
    %v3896 = vunpack.c.h.b16 %v2828
    %v3897 = vunpack.c.l.b16 %v2829
    %v3898 = vunpack.c.h.b16 %v2829
    %v3899 = vunpack.c.l.b16 %v2830
    %v3900 = vunpack.c.l.b16 %v2831
    %v3901 = vunpack.c.h.b16 %v2831
    %v3902 = vunpack.c.l.b16 %v2832
    %v3903 = vunpack.c.h.b16 %v2832
    %v3904 = vunpack.c.l.b16 %v2833
    %v3905 = vunpack.c.h.b16 %v2833
    %v3906 = vunpack.c.l.b16 %v2834
    %v3907 = vunpack.c.l.b16 %v2835
    %v3908 = vunpack.c.h.b16 %v2835
    %v3909 = vunpack.c.l.b16 %v2836
    %v3910 = vunpack.c.h.b16 %v2836
    %v3911 = vunpack.c.l.b16 %v2837
    %v3912 = vunpack.c.h.b16 %v2837
    %v3913 = vunpack.c.l.b16 %v2838
    %v3914 = vunpack.c.l.b16 %v2839
    %v3915 = vunpack.c.h.b16 %v2839
    %v3916 = vunpack.c.l.b16 %v2840
    %v3917 = vunpack.c.h.b16 %v2840
    %v3918 = vunpack.c.l.b16 %v2841
    %v3919 = vunpack.c.h.b16 %v2841
    %v3920 = vunpack.c.l.b16 %v2842
    %v3921 = vunpack.c.l.b16 %v2843
    %v3922 = vunpack.c.h.b16 %v2843
    %v3923 = vunpack.c.l.b16 %v2844
    %v3924 = vunpack.c.h.b16 %v2844
    %v3925 = vunpack.c.l.b16 %v2845
    %v3926 = vunpack.c.h.b16 %v2845
    %v3927 = vunpack.c.l.b16 %v2846
    %v3928 = vunpack.c.l.b16 %v2847
    %v3929 = vunpack.c.h.b16 %v2847
    %v3930 = vunpack.c.l.b16 %v2848
    %v3931 = vunpack.c.h.b16 %v2848
    %v3932 = vunpack.c.l.b16 %v2849
    %v3933 = vunpack.c.h.b16 %v2849
    %v3934 = vunpack.c.l.b16 %v2850
    %v3935 = vunpack.c.l.b16 %v2851
    %v3936 = vunpack.c.h.b16 %v2851
    %v3937 = vunpack.c.l.b16 %v2852
    %v3938 = vunpack.c.h.b16 %v2852
    %v3939 = vunpack.c.l.b16 %v2853
    %v3940 = vunpack.c.h.b16 %v2853
    %v3941 = vunpack.c.l.b16 %v2854
    %v3942 = vunpack.c.l.b16 %v2855
    %v3943 = vunpack.c.h.b16 %v2855
    %v3944 = vunpack.c.l.b16 %v2856
    %v3945 = vunpack.c.h.b16 %v2856
    %v3946 = vunpack.c.l.b16 %v2857
    %v3947 = vunpack.c.h.b16 %v2857
    %v3948 = vunpack.c.l.b16 %v2858
    %v3949 = vunpack.c.l.b16 %v2859
    %v3950 = vunpack.c.h.b16 %v2859
    %v3951 = vunpack.c.l.b16 %v2860
    %v3952 = vunpack.c.h.b16 %v2860
    %v3953 = vunpack.c.l.b16 %v2861
    %v3954 = vunpack.c.h.b16 %v2861
    %v3955 = vunpack.c.l.b16 %v2862
    %v3956 = vunpack.c.l.b16 %v2863
    %v3957 = vunpack.c.h.b16 %v2863
    %v3958 = vunpack.c.l.b16 %v2864
    %v3959 = vunpack.c.h.b16 %v2864
    %v3960 = vunpack.c.l.b16 %v2865
    %v3961 = vunpack.c.h.b16 %v2865
    %v3962 = vunpack.c.l.b16 %v2866
    %v3963 = vunpack.c.l.b16 %v2867
    %v3964 = vunpack.c.h.b16 %v2867
    %v3965 = vunpack.c.l.b16 %v2868
    %v3966 = vunpack.c.h.b16 %v2868
    %v3967 = vunpack.c.l.b16 %v2869
    %v3968 = vunpack.c.h.b16 %v2869
    %v3969 = vunpack.c.l.b16 %v2870
    %v3970 = vunpack.c.l.b16 %v2871
    %v3971 = vunpack.c.h.b16 %v2871
    %v3972 = vunpack.c.l.b16 %v2872
    %v3973 = vunpack.c.h.b16 %v2872
    %v3974 = vunpack.c.l.b16 %v2873
    %v3975 = vunpack.c.h.b16 %v2873
    %v3976 = vunpack.c.l.b16 %v2874
    %v3977 = vunpack.c.l.b16 %v2875
    %v3978 = vunpack.c.h.b16 %v2875
    %v3979 = vunpack.c.l.b16 %v2876
    %v3980 = vunpack.c.h.b16 %v2876
    %v3981 = vunpack.c.l.b16 %v2877
    %v3982 = vunpack.c.h.b16 %v2877
    %v3983 = vunpack.c.l.b16 %v2878
    %v3984 = vunpack.c.l.b16 %v2879
    %v3985 = vunpack.c.h.b16 %v2879
    %v3986 = vunpack.c.l.b16 %v2880
    %v3987 = vunpack.c.h.b16 %v2880
    %v3988 = vunpack.c.l.b16 %v2881
    %v3989 = vunpack.c.h.b16 %v2881
    %v3990 = vunpack.c.l.b16 %v2882
    %v3991 = vunpack.c.l.b16 %v2883
    %v3992 = vunpack.c.h.b16 %v2883
    %v3993 = vunpack.c.l.b16 %v2884
    %v3994 = vunpack.c.h.b16 %v2884
    %v3995 = vunpack.c.l.b16 %v2885
    %v3996 = vunpack.c.h.b16 %v2885
    %v3997 = vunpack.c.l.b16 %v2886
    %v3998 = vunpack.c.l.b16 %v2887
    %v3999 = vunpack.c.h.b16 %v2887
    %v4000 = vunpack.c.l.b16 %v2888
    %v4001 = vunpack.c.h.b16 %v2888
    %v4002 = vunpack.c.l.b16 %v2889
    %v4003 = vunpack.c.h.b16 %v2889
    %v4004 = vunpack.c.l.b16 %v2890
    %v4005 = vunpack.c.l.b16 %v2891
    %v4006 = vunpack.c.h.b16 %v2891
    %v4007 = vunpack.c.l.b16 %v2892
    %v4008 = vunpack.c.h.b16 %v2892
    %v4009 = vunpack.c.l.b16 %v2893
    %v4010 = vunpack.c.h.b16 %v2893
    %v4011 = vunpack.c.l.b16 %v2894
    %v4012 = vunpack.c.l.b16 %v2895
    %v4013 = vunpack.c.h.b16 %v2895
    %v4014 = vunpack.c.l.b16 %v2896
    %v4015 = vunpack.c.h.b16 %v2896
    %v4016 = vunpack.c.l.b16 %v2897
    %v4017 = vunpack.c.h.b16 %v2897
    %v4018 = vunpack.c.l.b16 %v2898
    %v4019 = vunpack.c.l.b16 %v2899
    %v4020 = vunpack.c.h.b16 %v2899
    %v4021 = vunpack.c.l.b16 %v2900
    %v4022 = vunpack.c.h.b16 %v2900
    %v4023 = vunpack.c.l.b16 %v2901
    %v4024 = vunpack.c.h.b16 %v2901
    %v4025 = vunpack.c.l.b16 %v2902
    %v4026 = vunpack.c.l.b16 %v2903
    %v4027 = vunpack.c.h.b16 %v2903
    %v4028 = vunpack.c.l.b16 %v2904
    %v4029 = vunpack.c.h.b16 %v2904
    %v4030 = vunpack.c.l.b16 %v2905
    %v4031 = vunpack.c.h.b16 %v2905
    %v4032 = vunpack.c.l.b16 %v2906
    %v4033 = vunpack.c.l.b16 %v2907
    %v4034 = vunpack.c.h.b16 %v2907
    %v4035 = vunpack.c.l.b16 %v2908
    %v4036 = vunpack.c.h.b16 %v2908
    %v4037 = vunpack.c.l.b16 %v2909
    %v4038 = vunpack.c.h.b16 %v2909
    %v4039 = vunpack.c.l.b16 %v2910
    %v4040 = vunpack.c.l.b16 %v2911
    %v4041 = vunpack.c.h.b16 %v2911
    %v4042 = vunpack.c.l.b16 %v2912
    %v4043 = vunpack.c.h.b16 %v2912
    %v4044 = vunpack.c.l.b16 %v2913
    %v4045 = vunpack.c.h.b16 %v2913
    %v4046 = vunpack.c.l.b16 %v2914
    %v4047 = vunpack.c.l.b16 %v2915
    %v4048 = vunpack.c.h.b16 %v2915
    %v4049 = vunpack.c.l.b16 %v2916
    %v4050 = vunpack.c.h.b16 %v2916
    %v4051 = vunpack.c.l.b16 %v2917
    %v4052 = vunpack.c.h.b16 %v2917
    %v4053 = vunpack.c.l.b16 %v2918
    %v4054 = vunpack.c.l.b16 %v2919
    %v4055 = vunpack.c.h.b16 %v2919
    %v4056 = vunpack.c.l.b16 %v2920
    %v4057 = vunpack.c.h.b16 %v2920
    %v4058 = vunpack.c.l.b16 %v2921
    %v4059 = vunpack.c.h.b16 %v2921
    %v4060 = vunpack.c.l.b16 %v2922
    %v4061 = vunpack.c.l.b16 %v2923
    %v4062 = vunpack.c.h.b16 %v2923
    %v4063 = vunpack.c.l.b16 %v2924
    %v4064 = vunpack.c.h.b16 %v2924
    %v4065 = vunpack.c.l.b16 %v2925
    %v4066 = vunpack.c.h.b16 %v2925
    %v4067 = vunpack.c.l.b16 %v2926
    %v4068 = vunpack.c.l.b16 %v2927
    %v4069 = vunpack.c.h.b16 %v2927
    %v4070 = vunpack.c.l.b16 %v2928
    %v4071 = vunpack.c.h.b16 %v2928
    %v4072 = vunpack.c.l.b16 %v2929
    %v4073 = vunpack.c.h.b16 %v2929
    %v4074 = vunpack.c.l.b16 %v2930
    %v4075 = vunpack.c.l.b16 %v2931
    %v4076 = vunpack.c.h.b16 %v2931
    %v4077 = vunpack.c.l.b16 %v2932
    %v4078 = vunpack.c.h.b16 %v2932
    %v4079 = vunpack.c.l.b16 %v2933
    %v4080 = vunpack.c.h.b16 %v2933
    %v4081 = vunpack.c.l.b16 %v2934
    %v4082 = vunpack.c.l.b16 %v2935
    %v4083 = vunpack.c.h.b16 %v2935
    %v4084 = vunpack.c.l.b16 %v2936
    %v4085 = vunpack.c.h.b16 %v2936
    %v4086 = vunpack.c.l.b16 %v2937
    %v4087 = vunpack.c.h.b16 %v2937
    %v4088 = vunpack.c.l.b16 %v2938
    %v4089 = vunpack.c.l.b16 %v2939
    %v4090 = vunpack.c.h.b16 %v2939
    %v4091 = vunpack.c.l.b16 %v2940
    %v4092 = vunpack.c.h.b16 %v2940
    %v4093 = vunpack.c.l.b16 %v2941
    %v4094 = vunpack.c.h.b16 %v2941
    %v4095 = vunpack.c.l.b16 %v2942
    %v4096 = vunpack.c.l.b16 %v2943
    %v4097 = vunpack.c.h.b16 %v2943
    %v4098 = vunpack.c.l.b16 %v2944
    %v4099 = vunpack.c.h.b16 %v2944
    %v4100 = vunpack.c.l.b16 %v2945
    %v4101 = vunpack.c.h.b16 %v2945
    %v4102 = vunpack.c.l.b16 %v2946
    %v4103 = vunpack.c.l.b16 %v2947
    %v4104 = vunpack.c.h.b16 %v2947
    %v4105 = vunpack.c.l.b16 %v2948
    %v4106 = vunpack.c.h.b16 %v2948
    %v4107 = vunpack.c.l.b16 %v2949
    %v4108 = vunpack.c.h.b16 %v2949
    %v4109 = vunpack.c.l.b16 %v2950
    %v4110 = vunpack.c.l.b16 %v2951
    %v4111 = vunpack.c.h.b16 %v2951
    %v4112 = vunpack.c.l.b16 %v2952
    %v4113 = vunpack.c.h.b16 %v2952
    %v4114 = vunpack.c.l.b16 %v2953
    %v4115 = vunpack.c.h.b16 %v2953
    %v4116 = vunpack.c.l.b16 %v2954
    %v4117 = vunpack.c.l.b16 %v2955
    %v4118 = vunpack.c.h.b16 %v2955
    %v4119 = vunpack.c.l.b16 %v2956
    %v4120 = vunpack.c.h.b16 %v2956
    %v4121 = vunpack.c.l.b16 %v2957
    %v4122 = vunpack.c.h.b16 %v2957
    %v4123 = vunpack.c.l.b16 %v2958
    %v4124 = vunpack.c.l.b16 %v2959
    %v4125 = vunpack.c.h.b16 %v2959
    %v4126 = vunpack.c.l.b16 %v2960
    %v4127 = vunpack.c.h.b16 %v2960
    %v4128 = vunpack.c.l.b16 %v2961
    %v4129 = vunpack.c.h.b16 %v2961
    %v4130 = vunpack.c.l.b16 %v2962
    %v4131 = vunpack.c.l.b16 %v2963
    %v4132 = vunpack.c.h.b16 %v2963
    %v4133 = vunpack.c.l.b16 %v2964
    %v4134 = vunpack.c.h.b16 %v2964
    %v4135 = vunpack.c.l.b16 %v2965
    %v4136 = vunpack.c.h.b16 %v2965
    %v4137 = vunpack.c.l.b16 %v2966
    %v4138 = vunpack.c.l.b16 %v2967
    %v4139 = vunpack.c.h.b16 %v2967
    %v4140 = vunpack.c.l.b16 %v2968
    %v4141 = vunpack.c.h.b16 %v2968
    %v4142 = vunpack.c.l.b16 %v2969
    %v4143 = vunpack.c.h.b16 %v2969
    %v4144 = vunpack.c.l.b16 %v2970
    %v4145 = vunpack.c.l.b16 %v2971
    %v4146 = vunpack.c.h.b16 %v2971
    %v4147 = vunpack.c.l.b16 %v2972
    %v4148 = vunpack.c.h.b16 %v2972
    %v4149 = vunpack.c.l.b16 %v2973
    %v4150 = vunpack.c.h.b16 %v2973
    %v4151 = vunpack.c.l.b16 %v2974
    %v4152 = vunpack.c.l.b16 %v2975
    %v4153 = vunpack.c.h.b16 %v2975
    %v4154 = vunpack.c.l.b16 %v2976
    %v4155 = vunpack.c.h.b16 %v2976
    %v4156 = vunpack.c.l.b16 %v2977
    %v4157 = vunpack.c.h.b16 %v2977
    %v4158 = vunpack.c.l.b16 %v2978
    %v4159 = vunpack.c.l.b16 %v2979
    %v4160 = vunpack.c.h.b16 %v2979
    %v4161 = vunpack.c.l.b16 %v2980
    %v4162 = vunpack.c.h.b16 %v2980
    %v4163 = vunpack.c.l.b16 %v2981
    %v4164 = vunpack.c.h.b16 %v2981
    %v4165 = vunpack.c.l.b16 %v2982
    %v4166 = vunpack.c.l.b16 %v2983
    %v4167 = vunpack.c.h.b16 %v2983
    %v4168 = vunpack.c.l.b16 %v2984
    %v4169 = vunpack.c.h.b16 %v2984
    %v4170 = vunpack.c.l.b16 %v2985
    %v4171 = vunpack.c.h.b16 %v2985
    %v4172 = vunpack.c.l.b16 %v2986
    %v4173 = vunpack.c.l.b16 %v2987
    %v4174 = vunpack.c.h.b16 %v2987
    %v4175 = vunpack.c.l.b16 %v2988
    %v4176 = vunpack.c.h.b16 %v2988
    %v4177 = vunpack.c.l.b16 %v2989
    %v4178 = vunpack.c.h.b16 %v2989
    %v4179 = vunpack.c.l.b16 %v2990
    %v4180 = vunpack.c.l.b16 %v2991
    %v4181 = vunpack.c.h.b16 %v2991
    %v4182 = vunpack.c.l.b16 %v2992
    %v4183 = vunpack.c.h.b16 %v2992
    %v4184 = vunpack.c.l.b16 %v2993
    %v4185 = vunpack.c.h.b16 %v2993
    %v4186 = vunpack.c.l.b16 %v2994
    %v4187 = vunpack.c.l.b16 %v2995
    %v4188 = vunpack.c.h.b16 %v2995
    %v4189 = vunpack.c.l.b16 %v2996
    %v4190 = vunpack.c.h.b16 %v2996
    %v4191 = vunpack.c.l.b16 %v2997
    %v4192 = vunpack.c.h.b16 %v2997
    %v4193 = vunpack.c.l.b16 %v2998
    %v4194 = vunpack.c.l.b16 %v2999
    %v4195 = vunpack.c.h.b16 %v2999
    %v4196 = vunpack.c.l.b16 %v3000
    %v4197 = vunpack.c.h.b16 %v3000
    %v4198 = vunpack.c.l.b16 %v3001
    %v4199 = vunpack.c.h.b16 %v3001
    %v4200 = vunpack.c.l.b16 %v3002
    %v4201 = vunpack.c.l.b16 %v3003
    %v4202 = vunpack.c.h.b16 %v3003
    %v4203 = vunpack.c.l.b16 %v3004
    %v4204 = vunpack.c.h.b16 %v3004
    %v4205 = vunpack.c.l.b16 %v3005
    %v4206 = vunpack.c.h.b16 %v3005
    %v4207 = vunpack.c.l.b16 %v3006
    %v4208 = vunpack.c.l.b16 %v3007
    %v4209 = vunpack.c.h.b16 %v3007
    %v4210 = vunpack.c.l.b16 %v3008
    %v4211 = vunpack.c.h.b16 %v3008
    %v4212 = vunpack.c.l.b16 %v3009
    %v4213 = vunpack.c.h.b16 %v3009
    %v4214 = vunpack.c.l.b16 %v3010
    %v4215 = vunpack.c.l.b16 %v3011
    %v4216 = vunpack.c.h.b16 %v3011
    %v4217 = vunpack.c.l.b16 %v3012
    %v4218 = vunpack.c.h.b16 %v3012
    %v4219 = vunpack.c.l.b16 %v3013
    %v4220 = vunpack.c.h.b16 %v3013
    %v4221 = vunpack.c.l.b16 %v3014
    %v4222 = vunpack.c.l.b16 %v3015
    %v4223 = vunpack.c.h.b16 %v3015
    %v4224 = vunpack.c.l.b16 %v3016
    %v4225 = vunpack.c.h.b16 %v3016
    %v4226 = vunpack.c.l.b16 %v3017
    %v4227 = vunpack.c.h.b16 %v3017
    %v4228 = vunpack.c.l.b16 %v3018
    %v4229 = vunpack.c.l.b16 %v3019
    %v4230 = vunpack.c.h.b16 %v3019
    %v4231 = vunpack.c.l.b16 %v3020
    %v4232 = vunpack.c.h.b16 %v3020
    %v4233 = vunpack.c.l.b16 %v3021
    %v4234 = vunpack.c.h.b16 %v3021
    %v4235 = vunpack.c.l.b16 %v3022
    %v4236 = vunpack.c.l.b16 %v3023
    %v4237 = vunpack.c.h.b16 %v3023
    %v4238 = vunpack.c.l.b16 %v3024
    %v4239 = vunpack.c.h.b16 %v3024
    %v4240 = vunpack.c.l.b16 %v3025
    %v4241 = vunpack.c.h.b16 %v3025
    %v4242 = vunpack.c.l.b16 %v3026
    %v4243 = vunpack.c.l.b16 %v3027
    %v4244 = vunpack.c.h.b16 %v3027
    %v4245 = vunpack.c.l.b16 %v3028
    %v4246 = vunpack.c.h.b16 %v3028
    %v4247 = vunpack.c.l.b16 %v3029
    %v4248 = vunpack.c.h.b16 %v3029
    %v4249 = vunpack.c.l.b16 %v3030
    %v4250 = vunpack.c.l.b16 %v3031
    %v4251 = vunpack.c.h.b16 %v3031
    %v4252 = vunpack.c.l.b16 %v3032
    %v4253 = vunpack.c.h.b16 %v3032
    %v4254 = vunpack.c.l.b16 %v3033
    %v4255 = vunpack.c.h.b16 %v3033
    %v4256 = vunpack.c.l.b16 %v3034
    %v4257 = vunpack.c.l.b16 %v3035
    %v4258 = vunpack.c.h.b16 %v3035
    %v4259 = vunpack.c.l.b16 %v3036
    %v4260 = vunpack.c.h.b16 %v3036
    %v4261 = vunpack.c.l.b16 %v3037
    %v4262 = vunpack.c.h.b16 %v3037
    %v4263 = vunpack.c.l.b16 %v3038
    %v4264 = vunpack.c.l.b16 %v3039
    %v4265 = vunpack.c.h.b16 %v3039
    %v4266 = vunpack.c.l.b16 %v3040
    %v4267 = vunpack.c.h.b16 %v3040
    %v4268 = vunpack.c.l.b16 %v3041
    %v4269 = vunpack.c.h.b16 %v3041
    %v4270 = vunpack.c.l.b16 %v3042
    %v4271 = vunpack.c.l.b16 %v3043
    %v4272 = vunpack.c.h.b16 %v3043
    %v4273 = vunpack.c.l.b16 %v3044
    %v4274 = vunpack.c.h.b16 %v3044
    %v4275 = vunpack.c.l.b16 %v3045
    %v4276 = vunpack.c.h.b16 %v3045
    %v4277 = vunpack.c.l.b16 %v3046
    %v4278 = vunpack.c.l.b16 %v3047
    %v4279 = vunpack.c.h.b16 %v3047
    %v4280 = vunpack.c.l.b16 %v3048
    %v4281 = vunpack.c.h.b16 %v3048
    %v4282 = vunpack.c.l.b16 %v3049
    %v4283 = vunpack.c.h.b16 %v3049
    %v4284 = vunpack.c.l.b16 %v3050
    %v4285 = vunpack.c.l.b16 %v3051
    %v4286 = vunpack.c.h.b16 %v3051
    %v4287 = vunpack.c.l.b16 %v3052
    %v4288 = vunpack.c.h.b16 %v3052
    %v4289 = vunpack.c.l.b16 %v3053
    %v4290 = vunpack.c.h.b16 %v3053
    %v4291 = vunpack.c.l.b16 %v3054
    %v4292 = vunpack.c.l.b16 %v3055
    %v4293 = vunpack.c.h.b16 %v3055
    %v4294 = vunpack.c.l.b16 %v3056
    %v4295 = vunpack.c.h.b16 %v3056
    %v4296 = vunpack.c.l.b16 %v3057
    %v4297 = vunpack.c.h.b16 %v3057
    %v4298 = vunpack.c.l.b16 %v3058
    %v4299 = vunpack.c.l.b16 %v3059
    %v4300 = vunpack.c.h.b16 %v3059
    %v4301 = vunpack.c.l.b16 %v3060
    %v4302 = vunpack.c.h.b16 %v3060
    %v4303 = vunpack.c.l.b16 %v3061
    %v4304 = vunpack.c.h.b16 %v3061
    %v4305 = vunpack.c.l.b16 %v3062
    %v4306 = vunpack.c.l.b16 %v3063
    %v4307 = vunpack.c.h.b16 %v3063
    %v4308 = vunpack.c.l.b16 %v3064
    %v4309 = vunpack.c.h.b16 %v3064
    %v4310 = vunpack.c.l.b16 %v3065
    %v4311 = vunpack.c.h.b16 %v3065
    %v4312 = vunpack.c.l.b16 %v3066
    %v4313 = vunpack.c.l.b16 %v3067
    %v4314 = vunpack.c.h.b16 %v3067
    %v4315 = vunpack.c.l.b16 %v3068
    %v4316 = vunpack.c.h.b16 %v3068
    %v4317 = vunpack.c.l.b16 %v3069
    %v4318 = vunpack.c.h.b16 %v3069
    %v4319 = vunpack.c.l.b16 %v3070
    %v4320 = vunpack.c.l.b16 %v3071
    %v4321 = vunpack.c.h.b16 %v3071
    %v4322 = vunpack.c.l.b16 %v3072
    %v4323 = vunpack.c.h.b16 %v3072
    %v4324 = vunpack.c.l.b16 %v3073
    %v4325 = vunpack.c.h.b16 %v3073
    %v4326 = vunpack.c.l.b16 %v3074
    %v4327 = vunpack.c.l.b16 %v3075
    %v4328 = vunpack.c.h.b16 %v3075
    %v4329 = vunpack.c.l.b16 %v3076
    %v4330 = vunpack.c.h.b16 %v3076
    %v4331 = vunpack.c.l.b16 %v3077
    %v4332 = vunpack.c.h.b16 %v3077
    %v4333 = vunpack.c.l.b16 %v3078
    %v4334 = vunpack.c.l.b16 %v3079
    %v4335 = vunpack.c.h.b16 %v3079
    %v4336 = vunpack.c.l.b16 %v3080
    %v4337 = vunpack.c.h.b16 %v3080
    %v4338 = vunpack.c.l.b16 %v3081
    %v4339 = vunpack.c.h.b16 %v3081
    %v4340 = vunpack.c.l.b16 %v3082
    %v4341 = vunpack.c.l.b16 %v3083
    %v4342 = vunpack.c.h.b16 %v3083
    %v4343 = vunpack.c.l.b16 %v3084
    %v4344 = vunpack.c.h.b16 %v3084
    %v4345 = vunpack.c.l.b16 %v3085
    %v4346 = vunpack.c.h.b16 %v3085
    %v4347 = vunpack.c.l.b16 %v3086
    %v4348 = vunpack.c.l.b16 %v3087
    %v4349 = vunpack.c.h.b16 %v3087
    %v4350 = vunpack.c.l.b16 %v3088
    %v4351 = vunpack.c.h.b16 %v3088
    %v4352 = vunpack.c.l.b16 %v3089
    %v4353 = vunpack.c.h.b16 %v3089
    %v4354 = vunpack.c.l.b16 %v3090
    %v4355 = vunpack.c.l.b16 %v3091
    %v4356 = vunpack.c.h.b16 %v3091
    %v4357 = vunpack.c.l.b16 %v3092
    %v4358 = vunpack.c.h.b16 %v3092
    %v4359 = vunpack.c.l.b16 %v3093
    %v4360 = vunpack.c.h.b16 %v3093
    %v4361 = vunpack.c.l.b16 %v3094
    %v4362 = vunpack.c.l.b16 %v3095
    %v4363 = vunpack.c.h.b16 %v3095
    %v4364 = vunpack.c.l.b16 %v3096
    %v4365 = vunpack.c.h.b16 %v3096
    %v4366 = vunpack.c.l.b16 %v3097
    %v4367 = vunpack.c.h.b16 %v3097
    %v4368 = vunpack.c.l.b16 %v3098
    %v4369 = vunpack.c.l.b16 %v3099
    %v4370 = vunpack.c.h.b16 %v3099
    %v4371 = vunpack.c.l.b16 %v3100
    %v4372 = vunpack.c.h.b16 %v3100
    %v4373 = vunpack.c.l.b16 %v3101
    %v4374 = vunpack.c.h.b16 %v3101
    %v4375 = vunpack.c.l.b16 %v3102
    %v4376 = vunpack.c.l.b16 %v3103
    %v4377 = vunpack.c.h.b16 %v3103
    %v4378 = vunpack.c.l.b16 %v3104
    %v4379 = vunpack.c.h.b16 %v3104
    %v4380 = vunpack.c.l.b16 %v3105
    %v4381 = vunpack.c.h.b16 %v3105
    %v4382 = vunpack.c.l.b16 %v3106
    %v4383 = vunpack.c.l.b16 %v3107
    %v4384 = vunpack.c.h.b16 %v3107
    %v4385 = vunpack.c.l.b16 %v3108
    %v4386 = vunpack.c.h.b16 %v3108
    %v4387 = vunpack.c.l.b16 %v3109
    %v4388 = vunpack.c.h.b16 %v3109
    %v4389 = vunpack.c.l.b16 %v3110
    %v4390 = vunpack.c.l.b16 %v3111
    %v4391 = vunpack.c.h.b16 %v3111
    %v4392 = vunpack.c.l.b16 %v3112
    %v4393 = vunpack.c.h.b16 %v3112
    %v4394 = vunpack.c.l.b16 %v3113
    %v4395 = vunpack.c.h.b16 %v3113
    %v4396 = vunpack.c.l.b16 %v3114
    %v4397 = vunpack.c.l.b16 %v3115
    %v4398 = vunpack.c.h.b16 %v3115
    %v4399 = vunpack.c.l.b16 %v3116
    %v4400 = vunpack.c.h.b16 %v3116
    %v4401 = vunpack.c.l.b16 %v3117
    %v4402 = vunpack.c.h.b16 %v3117
    %v4403 = vunpack.c.l.b16 %v3118
    %v4404 = vunpack.c.l.b16 %v3119
    %v4405 = vunpack.c.h.b16 %v3119
    %v4406 = vunpack.c.l.b16 %v3120
    %v4407 = vunpack.c.h.b16 %v3120
    %v4408 = vunpack.c.l.b16 %v3121
    %v4409 = vunpack.c.h.b16 %v3121
    %v4410 = vunpack.c.l.b16 %v3122
    %v4411 = vunpack.c.l.b16 %v3123
    %v4412 = vunpack.c.h.b16 %v3123
    %v4413 = vunpack.c.l.b16 %v3124
    %v4414 = vunpack.c.h.b16 %v3124
    %v4415 = vunpack.c.l.b16 %v3125
    %v4416 = vunpack.c.h.b16 %v3125
    %v4417 = vunpack.c.l.b16 %v3126
    %v4418 = vunpack.c.l.b16 %v3127
    %v4419 = vunpack.c.h.b16 %v3127
    %v4420 = vunpack.c.l.b16 %v3128
    %v4421 = vunpack.c.h.b16 %v3128
    %v4422 = vunpack.c.l.b16 %v3129
    %v4423 = vunpack.c.h.b16 %v3129
    %v4424 = vunpack.c.l.b16 %v3130
    %v4425 = vunpack.c.l.b16 %v3131
    %v4426 = vunpack.c.h.b16 %v3131
    %v4427 = vunpack.c.l.b16 %v3132
    %v4428 = vunpack.c.h.b16 %v3132
    %v4429 = vunpack.c.l.b16 %v3133
    %v4430 = vunpack.c.h.b16 %v3133
    %v4431 = vunpack.c.l.b16 %v3134
    %v4432 = vunpack.c.l.b16 %v3135
    %v4433 = vunpack.c.h.b16 %v3135
    %v4434 = vunpack.c.l.b16 %v3136
    %v4435 = vunpack.c.h.b16 %v3136
    %v4436 = vunpack.c.l.b16 %v3137
    %v4437 = vunpack.c.h.b16 %v3137
    %v4438 = vunpack.c.l.b16 %v3138
    %v4439 = vunpack.c.l.b16 %v3139
    %v4440 = vunpack.c.h.b16 %v3139
    %v4441 = vunpack.c.l.b16 %v3140
    %v4442 = vunpack.c.h.b16 %v3140
    %v4443 = vunpack.c.l.b16 %v3141
    %v4444 = vunpack.c.h.b16 %v3141
    %v4445 = vunpack.c.l.b16 %v3142
    %v4446 = vunpack.c.l.b16 %v3143
    %v4447 = vunpack.c.h.b16 %v3143
    %v4448 = vunpack.c.l.b16 %v3144
    %v4449 = vunpack.c.h.b16 %v3144
    %v4450 = vunpack.c.l.b16 %v3145
    %v4451 = vunpack.c.h.b16 %v3145
    %v4452 = vunpack.c.l.b16 %v3146
    %v4453 = vunpack.c.l.b16 %v3147
    %v4454 = vunpack.c.h.b16 %v3147
    %v4455 = vunpack.c.l.b16 %v3148
    %v4456 = vunpack.c.h.b16 %v3148
    %v4457 = vunpack.c.l.b16 %v3149
    %v4458 = vunpack.c.h.b16 %v3149
    %v4459 = vunpack.c.l.b16 %v3150
    %v4460 = vunpack.c.l.b16 %v3151
    %v4461 = vunpack.c.h.b16 %v3151
    %v4462 = vunpack.c.l.b16 %v3152
    %v4463 = vunpack.c.h.b16 %v3152
    %v4464 = vunpack.c.l.b16 %v3153
    %v4465 = vunpack.c.h.b16 %v3153
    %v4466 = vunpack.c.l.b16 %v3154
    %v4467 = vunpack.c.l.b16 %v3155
    %v4468 = vunpack.c.h.b16 %v3155
    %v4469 = vunpack.c.l.b16 %v3156
    %v4470 = vunpack.c.h.b16 %v3156
    %v4471 = vunpack.c.l.b16 %v3157
    %v4472 = vunpack.c.h.b16 %v3157
    %v4473 = vunpack.c.l.b16 %v3158
    %v4474 = vunpack.c.l.b16 %v3159
    %v4475 = vunpack.c.h.b16 %v3159
    %v4476 = vunpack.c.l.b16 %v3160
    %v4477 = vunpack.c.h.b16 %v3160
    %v4478 = vunpack.c.l.b16 %v3161
    %v4479 = vunpack.c.h.b16 %v3161
    %v4480 = vunpack.c.l.b16 %v3162
    %v4481 = vunpack.c.l.b16 %v3163
    %v4482 = vunpack.c.h.b16 %v3163
    %v4483 = vunpack.c.l.b16 %v3164
    %v4484 = vunpack.c.h.b16 %v3164
    %v4485 = vunpack.c.l.b16 %v3165
    %v4486 = vunpack.c.h.b16 %v3165
    %v4487 = vunpack.c.l.b16 %v3166
    %v4488 = vunpack.c.l.b16 %v3167
    %v4489 = vunpack.c.h.b16 %v3167
    %v4490 = vunpack.c.l.b16 %v3168
    %v4491 = vunpack.c.h.b16 %v3168
    %v4492 = vunpack.c.l.b16 %v3169
    %v4493 = vunpack.c.h.b16 %v3169
    %v4494 = vunpack.c.l.b16 %v3170
    %v4495 = vunpack.c.l.b16 %v3171
    %v4496 = vunpack.c.h.b16 %v3171
    %v4497 = vunpack.c.l.b16 %v3172
    %v4498 = vunpack.c.h.b16 %v3172
    %v4499 = vunpack.c.l.b16 %v3173
    %v4500 = vunpack.c.h.b16 %v3173
    %v4501 = vunpack.c.l.b16 %v3174
    %v4502 = vunpack.c.l.b16 %v3175
    %v4503 = vunpack.c.h.b16 %v3175
    %v4504 = vunpack.c.l.b16 %v3176
    %v4505 = vunpack.c.h.b16 %v3176
    %v4506 = vunpack.c.l.b16 %v3177
    %v4507 = vunpack.c.h.b16 %v3177
    %v4508 = vunpack.c.l.b16 %v3178
    %v4509 = vunpack.c.l.b16 %v3179
    %v4510 = vunpack.c.h.b16 %v3179
    %v4511 = vunpack.c.l.b16 %v3180
    %v4512 = vunpack.c.h.b16 %v3180
    %v4513 = vunpack.c.l.b16 %v3181
    %v4514 = vunpack.c.h.b16 %v3181
    %v4515 = vunpack.c.l.b16 %v3182
    %v4516 = vunpack.c.l.b16 %v3183
    %v4517 = vunpack.c.h.b16 %v3183
    %v4518 = vunpack.c.l.b16 %v3184
    %v4519 = vunpack.c.h.b16 %v3184
    %v4520 = vunpack.c.l.b16 %v3185
    %v4521 = vunpack.c.h.b16 %v3185
    %v4522 = vunpack.c.l.b16 %v3186
    %v4523 = vunpack.c.l.b16 %v3187
    %v4524 = vunpack.c.h.b16 %v3187
    %v4525 = vunpack.c.l.b16 %v3188
    %v4526 = vunpack.c.h.b16 %v3188
    %v4527 = vunpack.c.l.b16 %v3189
    %v4528 = vunpack.c.h.b16 %v3189
    %v4529 = vunpack.c.l.b16 %v3190
    %v4530 = vunpack.c.l.b16 %v3191
    %v4531 = vunpack.c.h.b16 %v3191
    %v4532 = vunpack.c.l.b16 %v3192
    %v4533 = vunpack.c.h.b16 %v3192
    %v4534 = vunpack.c.l.b16 %v3193
    %v4535 = vunpack.c.h.b16 %v3193
    %v4536 = vunpack.c.l.b16 %v3194
    %v4537 = vunpack.c.l.b16 %v3195
    %v4538 = vunpack.c.h.b16 %v3195
    %v4539 = vunpack.c.l.b16 %v3196
    %v4540 = vunpack.c.h.b16 %v3196
    %v4541 = vunpack.c.l.b16 %v3197
    %v4542 = vunpack.c.h.b16 %v3197
    %v4543 = vunpack.c.l.b16 %v3198
    %v4544 = vunpack.c.l.b16 %v3199
    %v4545 = vunpack.c.h.b16 %v3199
    %v4546 = vunpack.c.l.b16 %v3200
    %v4547 = vunpack.c.h.b16 %v3200
    %v4548 = vunpack.c.l.b16 %v3201
    %v4549 = vunpack.c.h.b16 %v3201
    %v4550 = vunpack.c.l.b16 %v3202
    %v4551 = vunpack.c.l.b16 %v3203
    %v4552 = vunpack.c.h.b16 %v3203
    %v4553 = vunpack.c.l.b16 %v3204
    %v4554 = vunpack.c.h.b16 %v3204
    %v4555 = vunpack.c.l.b16 %v3205
    %v4556 = vunpack.c.h.b16 %v3205
    %v4557 = vunpack.c.l.b16 %v3206
    %v4558 = vunpack.c.l.b16 %v3207
    %v4559 = vunpack.c.h.b16 %v3207
    %v4560 = vunpack.c.l.b16 %v3208
    %v4561 = vunpack.c.h.b16 %v3208
    %v4562 = vunpack.c.l.b16 %v3209
    %v4563 = vunpack.c.h.b16 %v3209
    %v4564 = vunpack.c.l.b16 %v3210
    %v4565 = vunpack.c.l.b16 %v3211
    %v4566 = vunpack.c.h.b16 %v3211
    %v4567 = vunpack.c.l.b16 %v3212
    %v4568 = vunpack.c.h.b16 %v3212
    %v4569 = vunpack.c.l.b16 %v3213
    %v4570 = vunpack.c.h.b16 %v3213
    %v4571 = vunpack.c.l.b16 %v3214
    %v4572 = vunpack.c.l.b16 %v3215
    %v4573 = vunpack.c.h.b16 %v3215
    %v4574 = vunpack.c.l.b16 %v3216
    %v4575 = vunpack.c.h.b16 %v3216
    %v4576 = vunpack.c.l.b16 %v3217
    %v4577 = vunpack.c.h.b16 %v3217
    %v4578 = vunpack.c.l.b16 %v3218
    %v4579 = vunpack.c.l.b16 %v3219
    %v4580 = vunpack.c.h.b16 %v3219
    %v4581 = vunpack.c.l.b16 %v3220
    %v4582 = vunpack.c.h.b16 %v3220
    %v4583 = vunpack.c.l.b16 %v3221
    %v4584 = vunpack.c.h.b16 %v3221
    %v4585 = vunpack.c.l.b16 %v3222
    %v4586 = vunpack.c.l.b16 %v3223
    %v4587 = vunpack.c.h.b16 %v3223
    %v4588 = vunpack.c.l.b16 %v3224
    %v4589 = vunpack.c.h.b16 %v3224
    %v4590 = vunpack.c.l.b16 %v3225
    %v4591 = vunpack.c.h.b16 %v3225
    %v4592 = vunpack.c.l.b16 %v3226
    %v4593 = vunpack.c.l.b16 %v3227
    %v4594 = vunpack.c.h.b16 %v3227
    %v4595 = vunpack.c.l.b16 %v3228
    %v4596 = vunpack.c.h.b16 %v3228
    %v4597 = vunpack.c.l.b16 %v3229
    %v4598 = vunpack.c.h.b16 %v3229
    %v4599 = vunpack.c.l.b16 %v3230
    %v4600 = vunpack.c.l.b16 %v3231
    %v4601 = vunpack.c.h.b16 %v3231
    %v4602 = vunpack.c.l.b16 %v3232
    %v4603 = vunpack.c.h.b16 %v3232
    %v4604 = vunpack.c.l.b16 %v3233
    %v4605 = vunpack.c.h.b16 %v3233
    %v4606 = vunpack.c.l.b16 %v3234
    %v4607 = vunpack.c.l.b16 %v3235
    %v4608 = vunpack.c.h.b16 %v3235
    %v4609 = vunpack.c.l.b16 %v3236
    %v4610 = vunpack.c.h.b16 %v3236
    %v4611 = vunpack.c.l.b16 %v3237
    %v4612 = vunpack.c.h.b16 %v3237
    %v4613 = vunpack.c.l.b16 %v3238
    %v4614 = vunpack.c.l.b16 %v3239
    %v4615 = vunpack.c.h.b16 %v3239
    %v4616 = vunpack.c.l.b16 %v3240
    %v4617 = vunpack.c.h.b16 %v3240
    %v4618 = vunpack.c.l.b16 %v3241
    %v4619 = vunpack.c.h.b16 %v3241
    %v4620 = vunpack.c.l.b16 %v3242
    %v4621 = vunpack.c.l.b16 %v3243
    %v4622 = vunpack.c.h.b16 %v3243
    %v4623 = vunpack.c.l.b16 %v3244
    %v4624 = vunpack.c.h.b16 %v3244
    %v4625 = vunpack.c.l.b16 %v3245
    %v4626 = vunpack.c.h.b16 %v3245
    %v4627 = vunpack.c.l.b16 %v3246
    %v4628 = vunpack.c.l.b16 %v3247
    %v4629 = vunpack.c.h.b16 %v3247
    %v4630 = vunpack.c.l.b16 %v3248
    %v4631 = vunpack.c.h.b16 %v3248
    %v4632 = vunpack.c.l.b16 %v3249
    %v4633 = vunpack.c.h.b16 %v3249
    %v4634 = vunpack.c.l.b16 %v3250
    %v4635 = vunpack.c.l.b16 %v3251
    %v4636 = vunpack.c.h.b16 %v3251
    %v4637 = vunpack.c.l.b16 %v3252
    %v4638 = vunpack.c.h.b16 %v3252
    %v4639 = vunpack.c.l.b16 %v3253
    %v4640 = vunpack.c.h.b16 %v3253
    %v4641 = vunpack.c.l.b16 %v3254
    %v4642 = vunpack.c.l.b16 %v3255
    %v4643 = vunpack.c.h.b16 %v3255
    %v4644 = vunpack.c.l.b16 %v3256
    %v4645 = vunpack.c.h.b16 %v3256
    %v4646 = vunpack.c.l.b16 %v3257
    %v4647 = vunpack.c.h.b16 %v3257
    %v4648 = vunpack.c.l.b16 %v3258
    %v4649 = vunpack.c.l.b16 %v3259
    %v4650 = vunpack.c.h.b16 %v3259
    %v4651 = vunpack.c.l.b16 %v3260
    %v4652 = vunpack.c.h.b16 %v3260
    %v4653 = vunpack.c.l.b16 %v3261
    %v4654 = vunpack.c.h.b16 %v3261
    %v4655 = vunpack.c.l.b16 %v3262
    %v4656 = vunpack.c.l.b16 %v3263
    %v4657 = vunpack.c.h.b16 %v3263
    %v4658 = vunpack.c.l.b16 %v3264
    %v4659 = vunpack.c.h.b16 %v3264
    %v4660 = vunpack.c.l.b16 %v3265
    %v4661 = vunpack.c.h.b16 %v3265
    %v4662 = vunpack.c.l.b16 %v3266
    %v4663 = vunpack.c.l.b16 %v3267
    %v4664 = vunpack.c.h.b16 %v3267
    %v4665 = vunpack.c.l.b16 %v3268
    %v4666 = vunpack.c.h.b16 %v3268
    %v4667 = vunpack.c.l.b16 %v3269
    %v4668 = vunpack.c.h.b16 %v3269
    %v4669 = vunpack.c.l.b16 %v3270
    %v4670 = vunpack.c.l.b16 %v3271
    %v4671 = vunpack.c.h.b16 %v3271
    %v4672 = vunpack.c.l.b16 %v3272
    %v4673 = vunpack.c.h.b16 %v3272
    %v4674 = vunpack.c.l.b16 %v3273
    %v4675 = vunpack.c.h.b16 %v3273
    %v4676 = vunpack.c.l.b16 %v3274
    %v4677 = vunpack.c.l.b16 %v3275
    %v4678 = vunpack.c.h.b16 %v3275
    %v4679 = vunpack.c.l.b16 %v3276
    %v4680 = vunpack.c.h.b16 %v3276
    %v4681 = vunpack.c.l.b16 %v3277
    %v4682 = vunpack.c.h.b16 %v3277
    %v4683 = vunpack.c.l.b16 %v3278
    %v4684 = vunpack.c.l.b16 %v3279
    %v4685 = vunpack.c.h.b16 %v3279
    %v4686 = vunpack.c.l.b16 %v3280
    %v4687 = vunpack.c.h.b16 %v3280
    %v4688 = vunpack.c.l.b16 %v3281
    %v4689 = vunpack.c.h.b16 %v3281
    %v4690 = vunpack.c.l.b16 %v3282
    %v4691 = vpack.c.b16 %v3802, %v3795
    %v4692 = vpack.c.b16 %v3803, %v3796
    %v4693 = vpack.c.b16 %v3804, %v3797
    %v4694 = vpack.c.b16 %v3805, %v3798
    %v4695 = vpack.c.b16 %v3806, %v3799
    %v4696 = vpack.c.b16 %v3807, %v3800
    %v4697 = vpack.c.b16 %v3808, %v3801
    %v4698 = vpack.c.b16 %v3816, %v3809
    %v4699 = vpack.c.b16 %v3817, %v3810
    %v4700 = vpack.c.b16 %v3818, %v3811
    %v4701 = vpack.c.b16 %v3819, %v3812
    %v4702 = vpack.c.b16 %v3820, %v3813
    %v4703 = vpack.c.b16 %v3821, %v3814
    %v4704 = vpack.c.b16 %v3822, %v3815
    %v4705 = vpack.c.b16 %v3830, %v3823
    %v4706 = vpack.c.b16 %v3831, %v3824
    %v4707 = vpack.c.b16 %v3832, %v3825
    %v4708 = vpack.c.b16 %v3833, %v3826
    %v4709 = vpack.c.b16 %v3834, %v3827
    %v4710 = vpack.c.b16 %v3835, %v3828
    %v4711 = vpack.c.b16 %v3836, %v3829
    %v4712 = vpack.c.b16 %v3844, %v3837
    %v4713 = vpack.c.b16 %v3845, %v3838
    %v4714 = vpack.c.b16 %v3846, %v3839
    %v4715 = vpack.c.b16 %v3847, %v3840
    %v4716 = vpack.c.b16 %v3848, %v3841
    %v4717 = vpack.c.b16 %v3849, %v3842
    %v4718 = vpack.c.b16 %v3850, %v3843
    %v4719 = vpack.c.b16 %v3858, %v3851
    %v4720 = vpack.c.b16 %v3859, %v3852
    %v4721 = vpack.c.b16 %v3860, %v3853
    %v4722 = vpack.c.b16 %v3861, %v3854
    %v4723 = vpack.c.b16 %v3862, %v3855
    %v4724 = vpack.c.b16 %v3863, %v3856
    %v4725 = vpack.c.b16 %v3864, %v3857
    %v4726 = vpack.c.b16 %v3872, %v3865
    %v4727 = vpack.c.b16 %v3873, %v3866
    %v4728 = vpack.c.b16 %v3874, %v3867
    %v4729 = vpack.c.b16 %v3875, %v3868
    %v4730 = vpack.c.b16 %v3876, %v3869
    %v4731 = vpack.c.b16 %v3877, %v3870
    %v4732 = vpack.c.b16 %v3878, %v3871
    %v4733 = vpack.c.b16 %v3886, %v3879
    %v4734 = vpack.c.b16 %v3887, %v3880
    %v4735 = vpack.c.b16 %v3888, %v3881
    %v4736 = vpack.c.b16 %v3889, %v3882
    %v4737 = vpack.c.b16 %v3890, %v3883
    %v4738 = vpack.c.b16 %v3891, %v3884
    %v4739 = vpack.c.b16 %v3892, %v3885
    %v4740 = vpack.c.b16 %v3900, %v3893
    %v4741 = vpack.c.b16 %v3901, %v3894
    %v4742 = vpack.c.b16 %v3902, %v3895
    %v4743 = vpack.c.b16 %v3903, %v3896
    %v4744 = vpack.c.b16 %v3904, %v3897
    %v4745 = vpack.c.b16 %v3905, %v3898
    %v4746 = vpack.c.b16 %v3906, %v3899
    %v4747 = vpack.c.b16 %v3914, %v3907
    %v4748 = vpack.c.b16 %v3915, %v3908
    %v4749 = vpack.c.b16 %v3916, %v3909
    %v4750 = vpack.c.b16 %v3917, %v3910
    %v4751 = vpack.c.b16 %v3918, %v3911
    %v4752 = vpack.c.b16 %v3919, %v3912
    %v4753 = vpack.c.b16 %v3920, %v3913
    %v4754 = vpack.c.b16 %v3928, %v3921
    %v4755 = vpack.c.b16 %v3929, %v3922
    %v4756 = vpack.c.b16 %v3930, %v3923
    %v4757 = vpack.c.b16 %v3931, %v3924
    %v4758 = vpack.c.b16 %v3932, %v3925
    %v4759 = vpack.c.b16 %v3933, %v3926
    %v4760 = vpack.c.b16 %v3934, %v3927
    %v4761 = vpack.c.b16 %v3942, %v3935
    %v4762 = vpack.c.b16 %v3943, %v3936
    %v4763 = vpack.c.b16 %v3944, %v3937
    %v4764 = vpack.c.b16 %v3945, %v3938
    %v4765 = vpack.c.b16 %v3946, %v3939
    %v4766 = vpack.c.b16 %v3947, %v3940
    %v4767 = vpack.c.b16 %v3948, %v3941
    %v4768 = vpack.c.b16 %v3956, %v3949
    %v4769 = vpack.c.b16 %v3957, %v3950
    %v4770 = vpack.c.b16 %v3958, %v3951
    %v4771 = vpack.c.b16 %v3959, %v3952
    %v4772 = vpack.c.b16 %v3960, %v3953
    %v4773 = vpack.c.b16 %v3961, %v3954
    %v4774 = vpack.c.b16 %v3962, %v3955
    %v4775 = vpack.c.b16 %v3970, %v3963
    %v4776 = vpack.c.b16 %v3971, %v3964
    %v4777 = vpack.c.b16 %v3972, %v3965
    %v4778 = vpack.c.b16 %v3973, %v3966
    %v4779 = vpack.c.b16 %v3974, %v3967
    %v4780 = vpack.c.b16 %v3975, %v3968
    %v4781 = vpack.c.b16 %v3976, %v3969
    %v4782 = vpack.c.b16 %v3984, %v3977
    %v4783 = vpack.c.b16 %v3985, %v3978
    %v4784 = vpack.c.b16 %v3986, %v3979
    %v4785 = vpack.c.b16 %v3987, %v3980
    %v4786 = vpack.c.b16 %v3988, %v3981
    %v4787 = vpack.c.b16 %v3989, %v3982
    %v4788 = vpack.c.b16 %v3990, %v3983
    %v4789 = vpack.c.b16 %v3998, %v3991
    %v4790 = vpack.c.b16 %v3999, %v3992
    %v4791 = vpack.c.b16 %v4000, %v3993
    %v4792 = vpack.c.b16 %v4001, %v3994
    %v4793 = vpack.c.b16 %v4002, %v3995
    %v4794 = vpack.c.b16 %v4003, %v3996
    %v4795 = vpack.c.b16 %v4004, %v3997
    %v4796 = vpack.c.b16 %v4012, %v4005
    %v4797 = vpack.c.b16 %v4013, %v4006
    %v4798 = vpack.c.b16 %v4014, %v4007
    %v4799 = vpack.c.b16 %v4015, %v4008
    %v4800 = vpack.c.b16 %v4016, %v4009
    %v4801 = vpack.c.b16 %v4017, %v4010
    %v4802 = vpack.c.b16 %v4018, %v4011
    %v4803 = vpack.c.b16 %v4026, %v4019
    %v4804 = vpack.c.b16 %v4027, %v4020
    %v4805 = vpack.c.b16 %v4028, %v4021
    %v4806 = vpack.c.b16 %v4029, %v4022
    %v4807 = vpack.c.b16 %v4030, %v4023
    %v4808 = vpack.c.b16 %v4031, %v4024
    %v4809 = vpack.c.b16 %v4032, %v4025
    %v4810 = vpack.c.b16 %v4040, %v4033
    %v4811 = vpack.c.b16 %v4041, %v4034
    %v4812 = vpack.c.b16 %v4042, %v4035
    %v4813 = vpack.c.b16 %v4043, %v4036
    %v4814 = vpack.c.b16 %v4044, %v4037
    %v4815 = vpack.c.b16 %v4045, %v4038
    %v4816 = vpack.c.b16 %v4046, %v4039
    %v4817 = vpack.c.b16 %v4054, %v4047
    %v4818 = vpack.c.b16 %v4055, %v4048
    %v4819 = vpack.c.b16 %v4056, %v4049
    %v4820 = vpack.c.b16 %v4057, %v4050
    %v4821 = vpack.c.b16 %v4058, %v4051
    %v4822 = vpack.c.b16 %v4059, %v4052
    %v4823 = vpack.c.b16 %v4060, %v4053
    %v4824 = vpack.c.b16 %v4068, %v4061
    %v4825 = vpack.c.b16 %v4069, %v4062
    %v4826 = vpack.c.b16 %v4070, %v4063
    %v4827 = vpack.c.b16 %v4071, %v4064
    %v4828 = vpack.c.b16 %v4072, %v4065
    %v4829 = vpack.c.b16 %v4073, %v4066
    %v4830 = vpack.c.b16 %v4074, %v4067
    %v4831 = vpack.c.b16 %v4082, %v4075
    %v4832 = vpack.c.b16 %v4083, %v4076
    %v4833 = vpack.c.b16 %v4084, %v4077
    %v4834 = vpack.c.b16 %v4085, %v4078
    %v4835 = vpack.c.b16 %v4086, %v4079
    %v4836 = vpack.c.b16 %v4087, %v4080
    %v4837 = vpack.c.b16 %v4088, %v4081
    %v4838 = vpack.c.b16 %v4096, %v4089
    %v4839 = vpack.c.b16 %v4097, %v4090
    %v4840 = vpack.c.b16 %v4098, %v4091
    %v4841 = vpack.c.b16 %v4099, %v4092
    %v4842 = vpack.c.b16 %v4100, %v4093
    %v4843 = vpack.c.b16 %v4101, %v4094
    %v4844 = vpack.c.b16 %v4102, %v4095
    %v4845 = vpack.c.b16 %v4110, %v4103
    %v4846 = vpack.c.b16 %v4111, %v4104
    %v4847 = vpack.c.b16 %v4112, %v4105
    %v4848 = vpack.c.b16 %v4113, %v4106
    %v4849 = vpack.c.b16 %v4114, %v4107
    %v4850 = vpack.c.b16 %v4115, %v4108
    %v4851 = vpack.c.b16 %v4116, %v4109
    %v4852 = vpack.c.b16 %v4124, %v4117
    %v4853 = vpack.c.b16 %v4125, %v4118
    %v4854 = vpack.c.b16 %v4126, %v4119
    %v4855 = vpack.c.b16 %v4127, %v4120
    %v4856 = vpack.c.b16 %v4128, %v4121
    %v4857 = vpack.c.b16 %v4129, %v4122
    %v4858 = vpack.c.b16 %v4130, %v4123
    %v4859 = vpack.c.b16 %v4138, %v4131
    %v4860 = vpack.c.b16 %v4139, %v4132
    %v4861 = vpack.c.b16 %v4140, %v4133
    %v4862 = vpack.c.b16 %v4141, %v4134
    %v4863 = vpack.c.b16 %v4142, %v4135
    %v4864 = vpack.c.b16 %v4143, %v4136
    %v4865 = vpack.c.b16 %v4144, %v4137
    %v4866 = vpack.c.b16 %v4152, %v4145
    %v4867 = vpack.c.b16 %v4153, %v4146
    %v4868 = vpack.c.b16 %v4154, %v4147
    %v4869 = vpack.c.b16 %v4155, %v4148
    %v4870 = vpack.c.b16 %v4156, %v4149
    %v4871 = vpack.c.b16 %v4157, %v4150
    %v4872 = vpack.c.b16 %v4158, %v4151
    %v4873 = vpack.c.b16 %v4166, %v4159
    %v4874 = vpack.c.b16 %v4167, %v4160
    %v4875 = vpack.c.b16 %v4168, %v4161
    %v4876 = vpack.c.b16 %v4169, %v4162
    %v4877 = vpack.c.b16 %v4170, %v4163
    %v4878 = vpack.c.b16 %v4171, %v4164
    %v4879 = vpack.c.b16 %v4172, %v4165
    %v4880 = vpack.c.b16 %v4180, %v4173
    %v4881 = vpack.c.b16 %v4181, %v4174
    %v4882 = vpack.c.b16 %v4182, %v4175
    %v4883 = vpack.c.b16 %v4183, %v4176
    %v4884 = vpack.c.b16 %v4184, %v4177
    %v4885 = vpack.c.b16 %v4185, %v4178
    %v4886 = vpack.c.b16 %v4186, %v4179
    %v4887 = vpack.c.b16 %v4194, %v4187
    %v4888 = vpack.c.b16 %v4195, %v4188
    %v4889 = vpack.c.b16 %v4196, %v4189
    %v4890 = vpack.c.b16 %v4197, %v4190
    %v4891 = vpack.c.b16 %v4198, %v4191
    %v4892 = vpack.c.b16 %v4199, %v4192
    %v4893 = vpack.c.b16 %v4200, %v4193
    %v4894 = vpack.c.b16 %v4208, %v4201
    %v4895 = vpack.c.b16 %v4209, %v4202
    %v4896 = vpack.c.b16 %v4210, %v4203
    %v4897 = vpack.c.b16 %v4211, %v4204
    %v4898 = vpack.c.b16 %v4212, %v4205
    %v4899 = vpack.c.b16 %v4213, %v4206
    %v4900 = vpack.c.b16 %v4214, %v4207
    %v4901 = vpack.c.b16 %v4222, %v4215
    %v4902 = vpack.c.b16 %v4223, %v4216
    %v4903 = vpack.c.b16 %v4224, %v4217
    %v4904 = vpack.c.b16 %v4225, %v4218
    %v4905 = vpack.c.b16 %v4226, %v4219
    %v4906 = vpack.c.b16 %v4227, %v4220
    %v4907 = vpack.c.b16 %v4228, %v4221
    %v4908 = vpack.c.b16 %v4236, %v4229
    %v4909 = vpack.c.b16 %v4237, %v4230
    %v4910 = vpack.c.b16 %v4238, %v4231
    %v4911 = vpack.c.b16 %v4239, %v4232
    %v4912 = vpack.c.b16 %v4240, %v4233
    %v4913 = vpack.c.b16 %v4241, %v4234
    %v4914 = vpack.c.b16 %v4242, %v4235
    %v4915 = vpack.c.b16 %v4250, %v4243
    %v4916 = vpack.c.b16 %v4251, %v4244
    %v4917 = vpack.c.b16 %v4252, %v4245
    %v4918 = vpack.c.b16 %v4253, %v4246
    %v4919 = vpack.c.b16 %v4254, %v4247
    %v4920 = vpack.c.b16 %v4255, %v4248
    %v4921 = vpack.c.b16 %v4256, %v4249
    %v4922 = vpack.c.b16 %v4264, %v4257
    %v4923 = vpack.c.b16 %v4265, %v4258
    %v4924 = vpack.c.b16 %v4266, %v4259
    %v4925 = vpack.c.b16 %v4267, %v4260
    %v4926 = vpack.c.b16 %v4268, %v4261
    %v4927 = vpack.c.b16 %v4269, %v4262
    %v4928 = vpack.c.b16 %v4270, %v4263
    %v4929 = vpack.c.b16 %v4278, %v4271
    %v4930 = vpack.c.b16 %v4279, %v4272
    %v4931 = vpack.c.b16 %v4280, %v4273
    %v4932 = vpack.c.b16 %v4281, %v4274
    %v4933 = vpack.c.b16 %v4282, %v4275
    %v4934 = vpack.c.b16 %v4283, %v4276
    %v4935 = vpack.c.b16 %v4284, %v4277
    %v4936 = vpack.c.b16 %v4292, %v4285
    %v4937 = vpack.c.b16 %v4293, %v4286
    %v4938 = vpack.c.b16 %v4294, %v4287
    %v4939 = vpack.c.b16 %v4295, %v4288
    %v4940 = vpack.c.b16 %v4296, %v4289
    %v4941 = vpack.c.b16 %v4297, %v4290
    %v4942 = vpack.c.b16 %v4298, %v4291
    %v4943 = vpack.c.b16 %v4306, %v4299
    %v4944 = vpack.c.b16 %v4307, %v4300
    %v4945 = vpack.c.b16 %v4308, %v4301
    %v4946 = vpack.c.b16 %v4309, %v4302
    %v4947 = vpack.c.b16 %v4310, %v4303
    %v4948 = vpack.c.b16 %v4311, %v4304
    %v4949 = vpack.c.b16 %v4312, %v4305
    %v4950 = vpack.c.b16 %v4320, %v4313
    %v4951 = vpack.c.b16 %v4321, %v4314
    %v4952 = vpack.c.b16 %v4322, %v4315
    %v4953 = vpack.c.b16 %v4323, %v4316
    %v4954 = vpack.c.b16 %v4324, %v4317
    %v4955 = vpack.c.b16 %v4325, %v4318
    %v4956 = vpack.c.b16 %v4326, %v4319
    %v4957 = vpack.c.b16 %v4334, %v4327
    %v4958 = vpack.c.b16 %v4335, %v4328
    %v4959 = vpack.c.b16 %v4336, %v4329
    %v4960 = vpack.c.b16 %v4337, %v4330
    %v4961 = vpack.c.b16 %v4338, %v4331
    %v4962 = vpack.c.b16 %v4339, %v4332
    %v4963 = vpack.c.b16 %v4340, %v4333
    %v4964 = vpack.c.b16 %v4348, %v4341
    %v4965 = vpack.c.b16 %v4349, %v4342
    %v4966 = vpack.c.b16 %v4350, %v4343
    %v4967 = vpack.c.b16 %v4351, %v4344
    %v4968 = vpack.c.b16 %v4352, %v4345
    %v4969 = vpack.c.b16 %v4353, %v4346
    %v4970 = vpack.c.b16 %v4354, %v4347
    %v4971 = vpack.c.b16 %v4362, %v4355
    %v4972 = vpack.c.b16 %v4363, %v4356
    %v4973 = vpack.c.b16 %v4364, %v4357
    %v4974 = vpack.c.b16 %v4365, %v4358
    %v4975 = vpack.c.b16 %v4366, %v4359
    %v4976 = vpack.c.b16 %v4367, %v4360
    %v4977 = vpack.c.b16 %v4368, %v4361
    %v4978 = vpack.c.b16 %v4376, %v4369
    %v4979 = vpack.c.b16 %v4377, %v4370
    %v4980 = vpack.c.b16 %v4378, %v4371
    %v4981 = vpack.c.b16 %v4379, %v4372
    %v4982 = vpack.c.b16 %v4380, %v4373
    %v4983 = vpack.c.b16 %v4381, %v4374
    %v4984 = vpack.c.b16 %v4382, %v4375
    %v4985 = vpack.c.b16 %v4390, %v4383
    %v4986 = vpack.c.b16 %v4391, %v4384
    %v4987 = vpack.c.b16 %v4392, %v4385
    %v4988 = vpack.c.b16 %v4393, %v4386
    %v4989 = vpack.c.b16 %v4394, %v4387
    %v4990 = vpack.c.b16 %v4395, %v4388
    %v4991 = vpack.c.b16 %v4396, %v4389
    %v4992 = vpack.c.b16 %v4404, %v4397
    %v4993 = vpack.c.b16 %v4405, %v4398
    %v4994 = vpack.c.b16 %v4406, %v4399
    %v4995 = vpack.c.b16 %v4407, %v4400
    %v4996 = vpack.c.b16 %v4408, %v4401
    %v4997 = vpack.c.b16 %v4409, %v4402
    %v4998 = vpack.c.b16 %v4410, %v4403
    %v4999 = vpack.c.b16 %v4418, %v4411
    %v5000 = vpack.c.b16 %v4419, %v4412
    %v5001 = vpack.c.b16 %v4420, %v4413
    %v5002 = vpack.c.b16 %v4421, %v4414
    %v5003 = vpack.c.b16 %v4422, %v4415
    %v5004 = vpack.c.b16 %v4423, %v4416
    %v5005 = vpack.c.b16 %v4424, %v4417
    %v5006 = vpack.c.b16 %v4432, %v4425
    %v5007 = vpack.c.b16 %v4433, %v4426
    %v5008 = vpack.c.b16 %v4434, %v4427
    %v5009 = vpack.c.b16 %v4435, %v4428
    %v5010 = vpack.c.b16 %v4436, %v4429
    %v5011 = vpack.c.b16 %v4437, %v4430
    %v5012 = vpack.c.b16 %v4438, %v4431
    %v5013 = vpack.c.b16 %v4446, %v4439
    %v5014 = vpack.c.b16 %v4447, %v4440
    %v5015 = vpack.c.b16 %v4448, %v4441
    %v5016 = vpack.c.b16 %v4449, %v4442
    %v5017 = vpack.c.b16 %v4450, %v4443
    %v5018 = vpack.c.b16 %v4451, %v4444
    %v5019 = vpack.c.b16 %v4452, %v4445
    %v5020 = vpack.c.b16 %v4460, %v4453
    %v5021 = vpack.c.b16 %v4461, %v4454
    %v5022 = vpack.c.b16 %v4462, %v4455
    %v5023 = vpack.c.b16 %v4463, %v4456
    %v5024 = vpack.c.b16 %v4464, %v4457
    %v5025 = vpack.c.b16 %v4465, %v4458
    %v5026 = vpack.c.b16 %v4466, %v4459
    %v5027 = vpack.c.b16 %v4474, %v4467
    %v5028 = vpack.c.b16 %v4475, %v4468
    %v5029 = vpack.c.b16 %v4476, %v4469
    %v5030 = vpack.c.b16 %v4477, %v4470
    %v5031 = vpack.c.b16 %v4478, %v4471
    %v5032 = vpack.c.b16 %v4479, %v4472
    %v5033 = vpack.c.b16 %v4480, %v4473
    %v5034 = vpack.c.b16 %v4488, %v4481
    %v5035 = vpack.c.b16 %v4489, %v4482
    %v5036 = vpack.c.b16 %v4490, %v4483
    %v5037 = vpack.c.b16 %v4491, %v4484
    %v5038 = vpack.c.b16 %v4492, %v4485
    %v5039 = vpack.c.b16 %v4493, %v4486
    %v5040 = vpack.c.b16 %v4494, %v4487
    %v5041 = vpack.c.b16 %v4502, %v4495
    %v5042 = vpack.c.b16 %v4503, %v4496
    %v5043 = vpack.c.b16 %v4504, %v4497
    %v5044 = vpack.c.b16 %v4505, %v4498
    %v5045 = vpack.c.b16 %v4506, %v4499
    %v5046 = vpack.c.b16 %v4507, %v4500
    %v5047 = vpack.c.b16 %v4508, %v4501
    %v5048 = vpack.c.b16 %v4516, %v4509
    %v5049 = vpack.c.b16 %v4517, %v4510
    %v5050 = vpack.c.b16 %v4518, %v4511
    %v5051 = vpack.c.b16 %v4519, %v4512
    %v5052 = vpack.c.b16 %v4520, %v4513
    %v5053 = vpack.c.b16 %v4521, %v4514
    %v5054 = vpack.c.b16 %v4522, %v4515
    %v5055 = vpack.c.b16 %v4530, %v4523
    %v5056 = vpack.c.b16 %v4531, %v4524
    %v5057 = vpack.c.b16 %v4532, %v4525
    %v5058 = vpack.c.b16 %v4533, %v4526
    %v5059 = vpack.c.b16 %v4534, %v4527
    %v5060 = vpack.c.b16 %v4535, %v4528
    %v5061 = vpack.c.b16 %v4536, %v4529
    %v5062 = vpack.c.b16 %v4544, %v4537
    %v5063 = vpack.c.b16 %v4545, %v4538
    %v5064 = vpack.c.b16 %v4546, %v4539
    %v5065 = vpack.c.b16 %v4547, %v4540
    %v5066 = vpack.c.b16 %v4548, %v4541
    %v5067 = vpack.c.b16 %v4549, %v4542
    %v5068 = vpack.c.b16 %v4550, %v4543
    %v5069 = vpack.c.b16 %v4558, %v4551
    %v5070 = vpack.c.b16 %v4559, %v4552
    %v5071 = vpack.c.b16 %v4560, %v4553
    %v5072 = vpack.c.b16 %v4561, %v4554
    %v5073 = vpack.c.b16 %v4562, %v4555
    %v5074 = vpack.c.b16 %v4563, %v4556
    %v5075 = vpack.c.b16 %v4564, %v4557
    %v5076 = vpack.c.b16 %v4572, %v4565
    %v5077 = vpack.c.b16 %v4573, %v4566
    %v5078 = vpack.c.b16 %v4574, %v4567
    %v5079 = vpack.c.b16 %v4575, %v4568
    %v5080 = vpack.c.b16 %v4576, %v4569
    %v5081 = vpack.c.b16 %v4577, %v4570
    %v5082 = vpack.c.b16 %v4578, %v4571
    %v5083 = vpack.c.b16 %v4586, %v4579
    %v5084 = vpack.c.b16 %v4587, %v4580
    %v5085 = vpack.c.b16 %v4588, %v4581
    %v5086 = vpack.c.b16 %v4589, %v4582
    %v5087 = vpack.c.b16 %v4590, %v4583
    %v5088 = vpack.c.b16 %v4591, %v4584
    %v5089 = vpack.c.b16 %v4592, %v4585
    %v5090 = vpack.c.b16 %v4600, %v4593
    %v5091 = vpack.c.b16 %v4601, %v4594
    %v5092 = vpack.c.b16 %v4602, %v4595
    %v5093 = vpack.c.b16 %v4603, %v4596
    %v5094 = vpack.c.b16 %v4604, %v4597
    %v5095 = vpack.c.b16 %v4605, %v4598
    %v5096 = vpack.c.b16 %v4606, %v4599
    %v5097 = vpack.c.b16 %v4614, %v4607
    %v5098 = vpack.c.b16 %v4615, %v4608
    %v5099 = vpack.c.b16 %v4616, %v4609
    %v5100 = vpack.c.b16 %v4617, %v4610
    %v5101 = vpack.c.b16 %v4618, %v4611
    %v5102 = vpack.c.b16 %v4619, %v4612
    %v5103 = vpack.c.b16 %v4620, %v4613
    %v5104 = vpack.c.b16 %v4628, %v4621
    %v5105 = vpack.c.b16 %v4629, %v4622
    %v5106 = vpack.c.b16 %v4630, %v4623
    %v5107 = vpack.c.b16 %v4631, %v4624
    %v5108 = vpack.c.b16 %v4632, %v4625
    %v5109 = vpack.c.b16 %v4633, %v4626
    %v5110 = vpack.c.b16 %v4634, %v4627
    %v5111 = vpack.c.b16 %v4642, %v4635
    %v5112 = vpack.c.b16 %v4643, %v4636
    %v5113 = vpack.c.b16 %v4644, %v4637
    %v5114 = vpack.c.b16 %v4645, %v4638
    %v5115 = vpack.c.b16 %v4646, %v4639
    %v5116 = vpack.c.b16 %v4647, %v4640
    %v5117 = vpack.c.b16 %v4648, %v4641
    %v5118 = vpack.c.b16 %v4656, %v4649
    %v5119 = vpack.c.b16 %v4657, %v4650
    %v5120 = vpack.c.b16 %v4658, %v4651
    %v5121 = vpack.c.b16 %v4659, %v4652
    %v5122 = vpack.c.b16 %v4660, %v4653
    %v5123 = vpack.c.b16 %v4661, %v4654
    %v5124 = vpack.c.b16 %v4662, %v4655
    %v5125 = vpack.c.b16 %v4670, %v4663
    %v5126 = vpack.c.b16 %v4671, %v4664
    %v5127 = vpack.c.b16 %v4672, %v4665
    %v5128 = vpack.c.b16 %v4673, %v4666
    %v5129 = vpack.c.b16 %v4674, %v4667
    %v5130 = vpack.c.b16 %v4675, %v4668
    %v5131 = vpack.c.b16 %v4676, %v4669
    %v5132 = vpack.c.b16 %v4684, %v4677
    %v5133 = vpack.c.b16 %v4685, %v4678
    %v5134 = vpack.c.b16 %v4686, %v4679
    %v5135 = vpack.c.b16 %v4687, %v4680
    %v5136 = vpack.c.b16 %v4688, %v4681
    %v5137 = vpack.c.b16 %v4689, %v4682
    %v5138 = vpack.c.b16 %v4690, %v4683
    %5587 = vmatprep.subr.bf16.mxu0 %v4741
    %5588 = vmatpush1.bf16.msra.mxu0 %v4740
    %5589 = vmatprep.subr.bf16.mxu0 %v4734
    %5590 = vmatpush1.bf16.msra.mxu0 %v4733
    %5591 = vmatprep.subr.bf16.mxu0 %v4727
    %5592 = vmatpush1.bf16.msra.mxu0 %v4726
    %5593 = vmatprep.subr.bf16.mxu0 %v4720
    %5594 = vmatpush1.bf16.msra.mxu0 %v4719
    %5595 = vmatprep.subr.bf16.mxu0 %v4713
    %5596 = vmatpush1.bf16.msra.mxu0 %v4712
    %5597 = vmatprep.subr.bf16.mxu0 %v4706
    %5598 = vmatpush1.bf16.msra.mxu0 %v4705
    %5599 = vmatprep.subr.bf16.mxu0 %v4699
    %5600 = vmatpush1.bf16.msra.mxu0 %v4698
    %5601 = vmatprep.subr.bf16.mxu0 %v4692
    %5602 = vmatpush1.bf16.msra.mxu0 %v4691
    %5603 = vmatprep.subr.bf16.mxu0 %v4797
    %5604 = vmatpush2.bf16.msra.mxu0 %v4796
    %5605 = vmatprep.subr.bf16.mxu0 %v4790
    %5606 = vmatpush2.bf16.msra.mxu0 %v4789
    %5607 = vmatprep.subr.bf16.mxu0 %v4783
    %5608 = vmatpush2.bf16.msra.mxu0 %v4782
    %5609 = vmatprep.subr.bf16.mxu0 %v4776
    %5610 = vmatpush2.bf16.msra.mxu0 %v4775
    %5611 = vmatprep.subr.bf16.mxu0 %v4769
    %5612 = vmatpush2.bf16.msra.mxu0 %v4768
    %5613 = vmatprep.subr.bf16.mxu0 %v4762
    %5614 = vmatpush2.bf16.msra.mxu0 %v4761
    %5615 = vmatprep.subr.bf16.mxu0 %v4755
    %5616 = vmatpush2.bf16.msra.mxu0 %v4754
    %5617 = vmatprep.subr.bf16.mxu0 %v4748
    %5618 = vmatpush2.bf16.msra.mxu0 %v4747
    %5619 = vmatprep.mubr.bf16.mxu0 %v2764
    %5620 = vmatmul.mubr.bf16.gmra.mxu0 %v2763
    %v5621 = vpop.f32.mrf.mxu0
    %v5622 = vadd.f32 0.0, %v5621
    %v5623 = vpop.f32.mrf.mxu0
    %v5624 = vadd.f32 0.0, %v5623
    %v5625 = vpop.f32.mrf.mxu0
    %v5626 = vadd.f32 0.0, %v5625
    %v5627 = vpop.f32.mrf.mxu0
    %v5628 = vadd.f32 0.0, %v5627
    %5629 = vdwg.mxu0
    %5630 = vmatprep.subr.bf16.mxu0 %v4853
    %5631 = vmatpush1.bf16.msra.mxu0 %v4852
    %5632 = vmatprep.subr.bf16.mxu0 %v4846
    %5633 = vmatpush1.bf16.msra.mxu0 %v4845
    %5634 = vmatprep.subr.bf16.mxu0 %v4839
    %5635 = vmatpush1.bf16.msra.mxu0 %v4838
    %5636 = vmatprep.subr.bf16.mxu0 %v4832
    %5637 = vmatpush1.bf16.msra.mxu0 %v4831
    %5638 = vmatprep.subr.bf16.mxu0 %v4825
    %5639 = vmatpush1.bf16.msra.mxu0 %v4824
    %5640 = vmatprep.subr.bf16.mxu0 %v4818
    %5641 = vmatpush1.bf16.msra.mxu0 %v4817
    %5642 = vmatprep.subr.bf16.mxu0 %v4811
    %5643 = vmatpush1.bf16.msra.mxu0 %v4810
    %5644 = vmatprep.subr.bf16.mxu0 %v4804
    %5645 = vmatpush1.bf16.msra.mxu0 %v4803
    %5646 = vmatprep.subr.bf16.mxu0 %v4909
    %5647 = vmatpush2.bf16.msra.mxu0 %v4908
    %5648 = vmatprep.subr.bf16.mxu0 %v4902
    %5649 = vmatpush2.bf16.msra.mxu0 %v4901
    %5650 = vmatprep.subr.bf16.mxu0 %v4895
    %5651 = vmatpush2.bf16.msra.mxu0 %v4894
    %5652 = vmatprep.subr.bf16.mxu0 %v4888
    %5653 = vmatpush2.bf16.msra.mxu0 %v4887
    %5654 = vmatprep.subr.bf16.mxu0 %v4881
    %5655 = vmatpush2.bf16.msra.mxu0 %v4880
    %5656 = vmatprep.subr.bf16.mxu0 %v4874
    %5657 = vmatpush2.bf16.msra.mxu0 %v4873
    %5658 = vmatprep.subr.bf16.mxu0 %v4867
    %5659 = vmatpush2.bf16.msra.mxu0 %v4866
    %5660 = vmatprep.subr.bf16.mxu0 %v4860
    %5661 = vmatpush2.bf16.msra.mxu0 %v4859
    %5662 = vmatprep.mubr.bf16.mxu0 %v2766
    %5663 = vmatmul.mubr.bf16.gmra.mxu0 %v2765
    %v5664 = vpop.f32.mrf.mxu0
    %v5665 = vadd.f32 %v5622, %v5664
    %v5666 = vpop.f32.mrf.mxu0
    %v5667 = vadd.f32 %v5624, %v5666
    %v5668 = vpop.f32.mrf.mxu0
    %v5669 = vadd.f32 %v5626, %v5668
    %v5670 = vpop.f32.mrf.mxu0
    %v5671 = vadd.f32 %v5628, %v5670
    %5672 = vdwg.mxu0
    %5673 = vmatprep.subr.bf16.mxu0 %v4965
    %5674 = vmatpush1.bf16.msra.mxu0 %v4964
    %5675 = vmatprep.subr.bf16.mxu0 %v4958
    %5676 = vmatpush1.bf16.msra.mxu0 %v4957
    %5677 = vmatprep.subr.bf16.mxu0 %v4951
    %5678 = vmatpush1.bf16.msra.mxu0 %v4950
    %5679 = vmatprep.subr.bf16.mxu0 %v4944
    %5680 = vmatpush1.bf16.msra.mxu0 %v4943
    %5681 = vmatprep.subr.bf16.mxu0 %v4937
    %5682 = vmatpush1.bf16.msra.mxu0 %v4936
    %5683 = vmatprep.subr.bf16.mxu0 %v4930
    %5684 = vmatpush1.bf16.msra.mxu0 %v4929
    %5685 = vmatprep.subr.bf16.mxu0 %v4923
    %5686 = vmatpush1.bf16.msra.mxu0 %v4922
    %5687 = vmatprep.subr.bf16.mxu0 %v4916
    %5688 = vmatpush1.bf16.msra.mxu0 %v4915
    %5689 = vmatprep.subr.bf16.mxu0 %v5021
    %5690 = vmatpush2.bf16.msra.mxu0 %v5020
    %5691 = vmatprep.subr.bf16.mxu0 %v5014
    %5692 = vmatpush2.bf16.msra.mxu0 %v5013
    %5693 = vmatprep.subr.bf16.mxu0 %v5007
    %5694 = vmatpush2.bf16.msra.mxu0 %v5006
    %5695 = vmatprep.subr.bf16.mxu0 %v5000
    %5696 = vmatpush2.bf16.msra.mxu0 %v4999
    %5697 = vmatprep.subr.bf16.mxu0 %v4993
    %5698 = vmatpush2.bf16.msra.mxu0 %v4992
    %5699 = vmatprep.subr.bf16.mxu0 %v4986
    %5700 = vmatpush2.bf16.msra.mxu0 %v4985
    %5701 = vmatprep.subr.bf16.mxu0 %v4979
    %5702 = vmatpush2.bf16.msra.mxu0 %v4978
    %5703 = vmatprep.subr.bf16.mxu0 %v4972
    %5704 = vmatpush2.bf16.msra.mxu0 %v4971
    %5705 = vmatprep.mubr.bf16.mxu0 %v2768
    %5706 = vmatmul.mubr.bf16.gmra.mxu0 %v2767
    %v5707 = vpop.f32.mrf.mxu0
    %v5708 = vadd.f32 %v5665, %v5707
    %v5709 = vpop.f32.mrf.mxu0
    %v5710 = vadd.f32 %v5667, %v5709
    %v5711 = vpop.f32.mrf.mxu0
    %v5712 = vadd.f32 %v5669, %v5711
    %v5713 = vpop.f32.mrf.mxu0
    %v5714 = vadd.f32 %v5671, %v5713
    %5715 = vdwg.mxu0
    %5716 = vmatprep.subr.bf16.mxu0 %v5077
    %5717 = vmatpush1.bf16.msra.mxu0 %v5076
    %5718 = vmatprep.subr.bf16.mxu0 %v5070
    %5719 = vmatpush1.bf16.msra.mxu0 %v5069
    %5720 = vmatprep.subr.bf16.mxu0 %v5063
    %5721 = vmatpush1.bf16.msra.mxu0 %v5062
    %5722 = vmatprep.subr.bf16.mxu0 %v5056
    %5723 = vmatpush1.bf16.msra.mxu0 %v5055
    %5724 = vmatprep.subr.bf16.mxu0 %v5049
    %5725 = vmatpush1.bf16.msra.mxu0 %v5048
    %5726 = vmatprep.subr.bf16.mxu0 %v5042
    %5727 = vmatpush1.bf16.msra.mxu0 %v5041
    %5728 = vmatprep.subr.bf16.mxu0 %v5035
    %5729 = vmatpush1.bf16.msra.mxu0 %v5034
    %5730 = vmatprep.subr.bf16.mxu0 %v5028
    %5731 = vmatpush1.bf16.msra.mxu0 %v5027
    %5732 = vmatprep.subr.bf16.mxu0 %v5133
    %5733 = vmatpush2.bf16.msra.mxu0 %v5132
    %5734 = vmatprep.subr.bf16.mxu0 %v5126
    %5735 = vmatpush2.bf16.msra.mxu0 %v5125
    %5736 = vmatprep.subr.bf16.mxu0 %v5119
    %5737 = vmatpush2.bf16.msra.mxu0 %v5118
    %5738 = vmatprep.subr.bf16.mxu0 %v5112
    %5739 = vmatpush2.bf16.msra.mxu0 %v5111
    %5740 = vmatprep.subr.bf16.mxu0 %v5105
    %5741 = vmatpush2.bf16.msra.mxu0 %v5104
    %5742 = vmatprep.subr.bf16.mxu0 %v5098
    %5743 = vmatpush2.bf16.msra.mxu0 %v5097
    %5744 = vmatprep.subr.bf16.mxu0 %v5091
    %5745 = vmatpush2.bf16.msra.mxu0 %v5090
    %5746 = vmatprep.subr.bf16.mxu0 %v5084
    %5747 = vmatpush2.bf16.msra.mxu0 %v5083
    %5748 = vmatprep.mubr.bf16.mxu0 %v2770
    %5749 = vmatmul.mubr.bf16.gmra.mxu0 %v2769
    %v5750 = vpop.f32.mrf.mxu0
    %v5751 = vadd.f32 %v5708, %v5750
    %v5752 = vpop.f32.mrf.mxu0
    %v5753 = vadd.f32 %v5710, %v5752
    %v5754 = vpop.f32.mrf.mxu0
    %v5755 = vadd.f32 %v5712, %v5754
    %v5756 = vpop.f32.mrf.mxu0
    %v5757 = vadd.f32 %v5714, %v5756
    %5758 = vdwg.mxu0
    %5759 = vmatprep.subr.bf16.mxu0 %v4743
    %5760 = vmatpush1.bf16.msra.mxu0 %v4742
    %5761 = vmatprep.subr.bf16.mxu0 %v4736
    %5762 = vmatpush1.bf16.msra.mxu0 %v4735
    %5763 = vmatprep.subr.bf16.mxu0 %v4729
    %5764 = vmatpush1.bf16.msra.mxu0 %v4728
    %5765 = vmatprep.subr.bf16.mxu0 %v4722
    %5766 = vmatpush1.bf16.msra.mxu0 %v4721
    %5767 = vmatprep.subr.bf16.mxu0 %v4715
    %5768 = vmatpush1.bf16.msra.mxu0 %v4714
    %5769 = vmatprep.subr.bf16.mxu0 %v4708
    %5770 = vmatpush1.bf16.msra.mxu0 %v4707
    %5771 = vmatprep.subr.bf16.mxu0 %v4701
    %5772 = vmatpush1.bf16.msra.mxu0 %v4700
    %5773 = vmatprep.subr.bf16.mxu0 %v4694
    %5774 = vmatpush1.bf16.msra.mxu0 %v4693
    %5775 = vmatprep.subr.bf16.mxu0 %v4799
    %5776 = vmatpush2.bf16.msra.mxu0 %v4798
    %5777 = vmatprep.subr.bf16.mxu0 %v4792
    %5778 = vmatpush2.bf16.msra.mxu0 %v4791
    %5779 = vmatprep.subr.bf16.mxu0 %v4785
    %5780 = vmatpush2.bf16.msra.mxu0 %v4784
    %5781 = vmatprep.subr.bf16.mxu0 %v4778
    %5782 = vmatpush2.bf16.msra.mxu0 %v4777
    %5783 = vmatprep.subr.bf16.mxu0 %v4771
    %5784 = vmatpush2.bf16.msra.mxu0 %v4770
    %5785 = vmatprep.subr.bf16.mxu0 %v4764
    %5786 = vmatpush2.bf16.msra.mxu0 %v4763
    %5787 = vmatprep.subr.bf16.mxu0 %v4757
    %5788 = vmatpush2.bf16.msra.mxu0 %v4756
    %5789 = vmatprep.subr.bf16.mxu0 %v4750
    %5790 = vmatpush2.bf16.msra.mxu0 %v4749
    %5791 = vmatprep.mubr.bf16.mxu0 %v2764
    %5792 = vmatmul.mubr.bf16.gmra.mxu0 %v2763
    %v5793 = vpop.f32.mrf.mxu0
    %v5794 = vadd.f32 0.0, %v5793
    %v5795 = vpop.f32.mrf.mxu0
    %v5796 = vadd.f32 0.0, %v5795
    %v5797 = vpop.f32.mrf.mxu0
    %v5798 = vadd.f32 0.0, %v5797
    %v5799 = vpop.f32.mrf.mxu0
    %v5800 = vadd.f32 0.0, %v5799
    %5801 = vdwg.mxu0
    %5802 = vmatprep.subr.bf16.mxu0 %v4855
    %5803 = vmatpush1.bf16.msra.mxu0 %v4854
    %5804 = vmatprep.subr.bf16.mxu0 %v4848
    %5805 = vmatpush1.bf16.msra.mxu0 %v4847
    %5806 = vmatprep.subr.bf16.mxu0 %v4841
    %5807 = vmatpush1.bf16.msra.mxu0 %v4840
    %5808 = vmatprep.subr.bf16.mxu0 %v4834
    %5809 = vmatpush1.bf16.msra.mxu0 %v4833
    %5810 = vmatprep.subr.bf16.mxu0 %v4827
    %5811 = vmatpush1.bf16.msra.mxu0 %v4826
    %5812 = vmatprep.subr.bf16.mxu0 %v4820
    %5813 = vmatpush1.bf16.msra.mxu0 %v4819
    %5814 = vmatprep.subr.bf16.mxu0 %v4813
    %5815 = vmatpush1.bf16.msra.mxu0 %v4812
    %5816 = vmatprep.subr.bf16.mxu0 %v4806
    %5817 = vmatpush1.bf16.msra.mxu0 %v4805
    %5818 = vmatprep.subr.bf16.mxu0 %v4911
    %5819 = vmatpush2.bf16.msra.mxu0 %v4910
    %5820 = vmatprep.subr.bf16.mxu0 %v4904
    %5821 = vmatpush2.bf16.msra.mxu0 %v4903
    %5822 = vmatprep.subr.bf16.mxu0 %v4897
    %5823 = vmatpush2.bf16.msra.mxu0 %v4896
    %5824 = vmatprep.subr.bf16.mxu0 %v4890
    %5825 = vmatpush2.bf16.msra.mxu0 %v4889
    %5826 = vmatprep.subr.bf16.mxu0 %v4883
    %5827 = vmatpush2.bf16.msra.mxu0 %v4882
    %5828 = vmatprep.subr.bf16.mxu0 %v4876
    %5829 = vmatpush2.bf16.msra.mxu0 %v4875
    %5830 = vmatprep.subr.bf16.mxu0 %v4869
    %5831 = vmatpush2.bf16.msra.mxu0 %v4868
    %5832 = vmatprep.subr.bf16.mxu0 %v4862
    %5833 = vmatpush2.bf16.msra.mxu0 %v4861
    %5834 = vmatprep.mubr.bf16.mxu0 %v2766
    %5835 = vmatmul.mubr.bf16.gmra.mxu0 %v2765
    %v5836 = vpop.f32.mrf.mxu0
    %v5837 = vadd.f32 %v5794, %v5836
    %v5838 = vpop.f32.mrf.mxu0
    %v5839 = vadd.f32 %v5796, %v5838
    %v5840 = vpop.f32.mrf.mxu0
    %v5841 = vadd.f32 %v5798, %v5840
    %v5842 = vpop.f32.mrf.mxu0
    %v5843 = vadd.f32 %v5800, %v5842
    %5844 = vdwg.mxu0
    %5845 = vmatprep.subr.bf16.mxu0 %v4967
    %5846 = vmatpush1.bf16.msra.mxu0 %v4966
    %5847 = vmatprep.subr.bf16.mxu0 %v4960
    %5848 = vmatpush1.bf16.msra.mxu0 %v4959
    %5849 = vmatprep.subr.bf16.mxu0 %v4953
    %5850 = vmatpush1.bf16.msra.mxu0 %v4952
    %5851 = vmatprep.subr.bf16.mxu0 %v4946
    %5852 = vmatpush1.bf16.msra.mxu0 %v4945
    %5853 = vmatprep.subr.bf16.mxu0 %v4939
    %5854 = vmatpush1.bf16.msra.mxu0 %v4938
    %5855 = vmatprep.subr.bf16.mxu0 %v4932
    %5856 = vmatpush1.bf16.msra.mxu0 %v4931
    %5857 = vmatprep.subr.bf16.mxu0 %v4925
    %5858 = vmatpush1.bf16.msra.mxu0 %v4924
    %5859 = vmatprep.subr.bf16.mxu0 %v4918
    %5860 = vmatpush1.bf16.msra.mxu0 %v4917
    %5861 = vmatprep.subr.bf16.mxu0 %v5023
    %5862 = vmatpush2.bf16.msra.mxu0 %v5022
    %5863 = vmatprep.subr.bf16.mxu0 %v5016
    %5864 = vmatpush2.bf16.msra.mxu0 %v5015
    %5865 = vmatprep.subr.bf16.mxu0 %v5009
    %5866 = vmatpush2.bf16.msra.mxu0 %v5008
    %5867 = vmatprep.subr.bf16.mxu0 %v5002
    %5868 = vmatpush2.bf16.msra.mxu0 %v5001
    %5869 = vmatprep.subr.bf16.mxu0 %v4995
    %5870 = vmatpush2.bf16.msra.mxu0 %v4994
    %5871 = vmatprep.subr.bf16.mxu0 %v4988
    %5872 = vmatpush2.bf16.msra.mxu0 %v4987
    %5873 = vmatprep.subr.bf16.mxu0 %v4981
    %5874 = vmatpush2.bf16.msra.mxu0 %v4980
    %5875 = vmatprep.subr.bf16.mxu0 %v4974
    %5876 = vmatpush2.bf16.msra.mxu0 %v4973
    %5877 = vmatprep.mubr.bf16.mxu0 %v2768
    %5878 = vmatmul.mubr.bf16.gmra.mxu0 %v2767
    %v5879 = vpop.f32.mrf.mxu0
    %v5880 = vadd.f32 %v5837, %v5879
    %v5881 = vpop.f32.mrf.mxu0
    %v5882 = vadd.f32 %v5839, %v5881
    %v5883 = vpop.f32.mrf.mxu0
    %v5884 = vadd.f32 %v5841, %v5883
    %v5885 = vpop.f32.mrf.mxu0
    %v5886 = vadd.f32 %v5843, %v5885
    %5887 = vdwg.mxu0
    %5888 = vmatprep.subr.bf16.mxu0 %v5079
    %5889 = vmatpush1.bf16.msra.mxu0 %v5078
    %5890 = vmatprep.subr.bf16.mxu0 %v5072
    %5891 = vmatpush1.bf16.msra.mxu0 %v5071
    %5892 = vmatprep.subr.bf16.mxu0 %v5065
    %5893 = vmatpush1.bf16.msra.mxu0 %v5064
    %5894 = vmatprep.subr.bf16.mxu0 %v5058
    %5895 = vmatpush1.bf16.msra.mxu0 %v5057
    %5896 = vmatprep.subr.bf16.mxu0 %v5051
    %5897 = vmatpush1.bf16.msra.mxu0 %v5050
    %5898 = vmatprep.subr.bf16.mxu0 %v5044
    %5899 = vmatpush1.bf16.msra.mxu0 %v5043
    %5900 = vmatprep.subr.bf16.mxu0 %v5037
    %5901 = vmatpush1.bf16.msra.mxu0 %v5036
    %5902 = vmatprep.subr.bf16.mxu0 %v5030
    %5903 = vmatpush1.bf16.msra.mxu0 %v5029
    %5904 = vmatprep.subr.bf16.mxu0 %v5135
    %5905 = vmatpush2.bf16.msra.mxu0 %v5134
    %5906 = vmatprep.subr.bf16.mxu0 %v5128
    %5907 = vmatpush2.bf16.msra.mxu0 %v5127
    %5908 = vmatprep.subr.bf16.mxu0 %v5121
    %5909 = vmatpush2.bf16.msra.mxu0 %v5120
    %5910 = vmatprep.subr.bf16.mxu0 %v5114
    %5911 = vmatpush2.bf16.msra.mxu0 %v5113
    %5912 = vmatprep.subr.bf16.mxu0 %v5107
    %5913 = vmatpush2.bf16.msra.mxu0 %v5106
    %5914 = vmatprep.subr.bf16.mxu0 %v5100
    %5915 = vmatpush2.bf16.msra.mxu0 %v5099
    %5916 = vmatprep.subr.bf16.mxu0 %v5093
    %5917 = vmatpush2.bf16.msra.mxu0 %v5092
    %5918 = vmatprep.subr.bf16.mxu0 %v5086
    %5919 = vmatpush2.bf16.msra.mxu0 %v5085
    %5920 = vmatprep.mubr.bf16.mxu0 %v2770
    %5921 = vmatmul.mubr.bf16.gmra.mxu0 %v2769
    %v5922 = vpop.f32.mrf.mxu0
    %v5923 = vadd.f32 %v5880, %v5922
    %v5924 = vpop.f32.mrf.mxu0
    %v5925 = vadd.f32 %v5882, %v5924
    %v5926 = vpop.f32.mrf.mxu0
    %v5927 = vadd.f32 %v5884, %v5926
    %v5928 = vpop.f32.mrf.mxu0
    %v5929 = vadd.f32 %v5886, %v5928
    %5930 = vdwg.mxu0
    %5931 = vmatprep.subr.bf16.mxu0 %v4745
    %5932 = vmatpush1.bf16.msra.mxu0 %v4744
    %5933 = vmatprep.subr.bf16.mxu0 %v4738
    %5934 = vmatpush1.bf16.msra.mxu0 %v4737
    %5935 = vmatprep.subr.bf16.mxu0 %v4731
    %5936 = vmatpush1.bf16.msra.mxu0 %v4730
    %5937 = vmatprep.subr.bf16.mxu0 %v4724
    %5938 = vmatpush1.bf16.msra.mxu0 %v4723
    %5939 = vmatprep.subr.bf16.mxu0 %v4717
    %5940 = vmatpush1.bf16.msra.mxu0 %v4716
    %5941 = vmatprep.subr.bf16.mxu0 %v4710
    %5942 = vmatpush1.bf16.msra.mxu0 %v4709
    %5943 = vmatprep.subr.bf16.mxu0 %v4703
    %5944 = vmatpush1.bf16.msra.mxu0 %v4702
    %5945 = vmatprep.subr.bf16.mxu0 %v4696
    %5946 = vmatpush1.bf16.msra.mxu0 %v4695
    %5947 = vmatprep.subr.bf16.mxu0 %v4801
    %5948 = vmatpush2.bf16.msra.mxu0 %v4800
    %5949 = vmatprep.subr.bf16.mxu0 %v4794
    %5950 = vmatpush2.bf16.msra.mxu0 %v4793
    %5951 = vmatprep.subr.bf16.mxu0 %v4787
    %5952 = vmatpush2.bf16.msra.mxu0 %v4786
    %5953 = vmatprep.subr.bf16.mxu0 %v4780
    %5954 = vmatpush2.bf16.msra.mxu0 %v4779
    %5955 = vmatprep.subr.bf16.mxu0 %v4773
    %5956 = vmatpush2.bf16.msra.mxu0 %v4772
    %5957 = vmatprep.subr.bf16.mxu0 %v4766
    %5958 = vmatpush2.bf16.msra.mxu0 %v4765
    %5959 = vmatprep.subr.bf16.mxu0 %v4759
    %5960 = vmatpush2.bf16.msra.mxu0 %v4758
    %5961 = vmatprep.subr.bf16.mxu0 %v4752
    %5962 = vmatpush2.bf16.msra.mxu0 %v4751
    %5963 = vmatprep.mubr.bf16.mxu0 %v2764
    %5964 = vmatmul.mubr.bf16.gmra.mxu0 %v2763
    %v5965 = vpop.f32.mrf.mxu0
    %v5966 = vadd.f32 0.0, %v5965
    %v5967 = vpop.f32.mrf.mxu0
    %v5968 = vadd.f32 0.0, %v5967
    %v5969 = vpop.f32.mrf.mxu0
    %v5970 = vadd.f32 0.0, %v5969
    %v5971 = vpop.f32.mrf.mxu0
    %v5972 = vadd.f32 0.0, %v5971
    %5973 = vdwg.mxu0
    %5974 = vmatprep.subr.bf16.mxu0 %v4857
    %5975 = vmatpush1.bf16.msra.mxu0 %v4856
    %5976 = vmatprep.subr.bf16.mxu0 %v4850
    %5977 = vmatpush1.bf16.msra.mxu0 %v4849
    %5978 = vmatprep.subr.bf16.mxu0 %v4843
    %5979 = vmatpush1.bf16.msra.mxu0 %v4842
    %5980 = vmatprep.subr.bf16.mxu0 %v4836
    %5981 = vmatpush1.bf16.msra.mxu0 %v4835
    %5982 = vmatprep.subr.bf16.mxu0 %v4829
    %5983 = vmatpush1.bf16.msra.mxu0 %v4828
    %5984 = vmatprep.subr.bf16.mxu0 %v4822
    %5985 = vmatpush1.bf16.msra.mxu0 %v4821
    %5986 = vmatprep.subr.bf16.mxu0 %v4815
    %5987 = vmatpush1.bf16.msra.mxu0 %v4814
    %5988 = vmatprep.subr.bf16.mxu0 %v4808
    %5989 = vmatpush1.bf16.msra.mxu0 %v4807
    %5990 = vmatprep.subr.bf16.mxu0 %v4913
    %5991 = vmatpush2.bf16.msra.mxu0 %v4912
    %5992 = vmatprep.subr.bf16.mxu0 %v4906
    %5993 = vmatpush2.bf16.msra.mxu0 %v4905
    %5994 = vmatprep.subr.bf16.mxu0 %v4899
    %5995 = vmatpush2.bf16.msra.mxu0 %v4898
    %5996 = vmatprep.subr.bf16.mxu0 %v4892
    %5997 = vmatpush2.bf16.msra.mxu0 %v4891
    %5998 = vmatprep.subr.bf16.mxu0 %v4885
    %5999 = vmatpush2.bf16.msra.mxu0 %v4884
    %6000 = vmatprep.subr.bf16.mxu0 %v4878
    %6001 = vmatpush2.bf16.msra.mxu0 %v4877
    %6002 = vmatprep.subr.bf16.mxu0 %v4871
    %6003 = vmatpush2.bf16.msra.mxu0 %v4870
    %6004 = vmatprep.subr.bf16.mxu0 %v4864
    %6005 = vmatpush2.bf16.msra.mxu0 %v4863
    %6006 = vmatprep.mubr.bf16.mxu0 %v2766
    %6007 = vmatmul.mubr.bf16.gmra.mxu0 %v2765
    %v6008 = vpop.f32.mrf.mxu0
    %v6009 = vadd.f32 %v5966, %v6008
    %v6010 = vpop.f32.mrf.mxu0
    %v6011 = vadd.f32 %v5968, %v6010
    %v6012 = vpop.f32.mrf.mxu0
    %v6013 = vadd.f32 %v5970, %v6012
    %v6014 = vpop.f32.mrf.mxu0
    %v6015 = vadd.f32 %v5972, %v6014
    %6016 = vdwg.mxu0
    %6017 = vmatprep.subr.bf16.mxu0 %v4969
    %6018 = vmatpush1.bf16.msra.mxu0 %v4968
    %6019 = vmatprep.subr.bf16.mxu0 %v4962
    %6020 = vmatpush1.bf16.msra.mxu0 %v4961
    %6021 = vmatprep.subr.bf16.mxu0 %v4955
    %6022 = vmatpush1.bf16.msra.mxu0 %v4954
    %6023 = vmatprep.subr.bf16.mxu0 %v4948
    %6024 = vmatpush1.bf16.msra.mxu0 %v4947
    %6025 = vmatprep.subr.bf16.mxu0 %v4941
    %6026 = vmatpush1.bf16.msra.mxu0 %v4940
    %6027 = vmatprep.subr.bf16.mxu0 %v4934
    %6028 = vmatpush1.bf16.msra.mxu0 %v4933
    %6029 = vmatprep.subr.bf16.mxu0 %v4927
    %6030 = vmatpush1.bf16.msra.mxu0 %v4926
    %6031 = vmatprep.subr.bf16.mxu0 %v4920
    %6032 = vmatpush1.bf16.msra.mxu0 %v4919
    %6033 = vmatprep.subr.bf16.mxu0 %v5025
    %6034 = vmatpush2.bf16.msra.mxu0 %v5024
    %6035 = vmatprep.subr.bf16.mxu0 %v5018
    %6036 = vmatpush2.bf16.msra.mxu0 %v5017
    %6037 = vmatprep.subr.bf16.mxu0 %v5011
    %6038 = vmatpush2.bf16.msra.mxu0 %v5010
    %6039 = vmatprep.subr.bf16.mxu0 %v5004
    %6040 = vmatpush2.bf16.msra.mxu0 %v5003
    %6041 = vmatprep.subr.bf16.mxu0 %v4997
    %6042 = vmatpush2.bf16.msra.mxu0 %v4996
    %6043 = vmatprep.subr.bf16.mxu0 %v4990
    %6044 = vmatpush2.bf16.msra.mxu0 %v4989
    %6045 = vmatprep.subr.bf16.mxu0 %v4983
    %6046 = vmatpush2.bf16.msra.mxu0 %v4982
    %6047 = vmatprep.subr.bf16.mxu0 %v4976
    %6048 = vmatpush2.bf16.msra.mxu0 %v4975
    %6049 = vmatprep.mubr.bf16.mxu0 %v2768
    %6050 = vmatmul.mubr.bf16.gmra.mxu0 %v2767
    %v6051 = vpop.f32.mrf.mxu0
    %v6052 = vadd.f32 %v6009, %v6051
    %v6053 = vpop.f32.mrf.mxu0
    %v6054 = vadd.f32 %v6011, %v6053
    %v6055 = vpop.f32.mrf.mxu0
    %v6056 = vadd.f32 %v6013, %v6055
    %v6057 = vpop.f32.mrf.mxu0
    %v6058 = vadd.f32 %v6015, %v6057
    %6059 = vdwg.mxu0
    %6060 = vmatprep.subr.bf16.mxu0 %v5081
    %6061 = vmatpush1.bf16.msra.mxu0 %v5080
    %6062 = vmatprep.subr.bf16.mxu0 %v5074
    %6063 = vmatpush1.bf16.msra.mxu0 %v5073
    %6064 = vmatprep.subr.bf16.mxu0 %v5067
    %6065 = vmatpush1.bf16.msra.mxu0 %v5066
    %6066 = vmatprep.subr.bf16.mxu0 %v5060
    %6067 = vmatpush1.bf16.msra.mxu0 %v5059
    %6068 = vmatprep.subr.bf16.mxu0 %v5053
    %6069 = vmatpush1.bf16.msra.mxu0 %v5052
    %6070 = vmatprep.subr.bf16.mxu0 %v5046
    %6071 = vmatpush1.bf16.msra.mxu0 %v5045
    %6072 = vmatprep.subr.bf16.mxu0 %v5039
    %6073 = vmatpush1.bf16.msra.mxu0 %v5038
    %6074 = vmatprep.subr.bf16.mxu0 %v5032
    %6075 = vmatpush1.bf16.msra.mxu0 %v5031
    %6076 = vmatprep.subr.bf16.mxu0 %v5137
    %6077 = vmatpush2.bf16.msra.mxu0 %v5136
    %6078 = vmatprep.subr.bf16.mxu0 %v5130
    %6079 = vmatpush2.bf16.msra.mxu0 %v5129
    %6080 = vmatprep.subr.bf16.mxu0 %v5123
    %6081 = vmatpush2.bf16.msra.mxu0 %v5122
    %6082 = vmatprep.subr.bf16.mxu0 %v5116
    %6083 = vmatpush2.bf16.msra.mxu0 %v5115
    %6084 = vmatprep.subr.bf16.mxu0 %v5109
    %6085 = vmatpush2.bf16.msra.mxu0 %v5108
    %6086 = vmatprep.subr.bf16.mxu0 %v5102
    %6087 = vmatpush2.bf16.msra.mxu0 %v5101
    %6088 = vmatprep.subr.bf16.mxu0 %v5095
    %6089 = vmatpush2.bf16.msra.mxu0 %v5094
    %6090 = vmatprep.subr.bf16.mxu0 %v5088
    %6091 = vmatpush2.bf16.msra.mxu0 %v5087
    %6092 = vmatprep.mubr.bf16.mxu0 %v2770
    %6093 = vmatmul.mubr.bf16.gmra.mxu0 %v2769
    %v6094 = vpop.f32.mrf.mxu0
    %v6095 = vadd.f32 %v6052, %v6094
    %v6096 = vpop.f32.mrf.mxu0
    %v6097 = vadd.f32 %v6054, %v6096
    %v6098 = vpop.f32.mrf.mxu0
    %v6099 = vadd.f32 %v6056, %v6098
    %v6100 = vpop.f32.mrf.mxu0
    %v6101 = vadd.f32 %v6058, %v6100
    %6102 = vdwg.mxu0
    %6103 = vmatprep.subr.bf16.mxu0 0
    %6104 = vmatpush1.bf16.msra.mxu0 %v4746
    %6105 = vmatprep.subr.bf16.mxu0 0
    %6106 = vmatpush1.bf16.msra.mxu0 %v4739
    %6107 = vmatprep.subr.bf16.mxu0 0
    %6108 = vmatpush1.bf16.msra.mxu0 %v4732
    %6109 = vmatprep.subr.bf16.mxu0 0
    %6110 = vmatpush1.bf16.msra.mxu0 %v4725
    %6111 = vmatprep.subr.bf16.mxu0 0
    %6112 = vmatpush1.bf16.msra.mxu0 %v4718
    %6113 = vmatprep.subr.bf16.mxu0 0
    %6114 = vmatpush1.bf16.msra.mxu0 %v4711
    %6115 = vmatprep.subr.bf16.mxu0 0
    %6116 = vmatpush1.bf16.msra.mxu0 %v4704
    %6117 = vmatprep.subr.bf16.mxu0 0
    %6118 = vmatpush1.bf16.msra.mxu0 %v4697
    %6119 = vmatprep.subr.bf16.mxu0 0
    %6120 = vmatpush2.bf16.msra.mxu0 %v4802
    %6121 = vmatprep.subr.bf16.mxu0 0
    %6122 = vmatpush2.bf16.msra.mxu0 %v4795
    %6123 = vmatprep.subr.bf16.mxu0 0
    %6124 = vmatpush2.bf16.msra.mxu0 %v4788
    %6125 = vmatprep.subr.bf16.mxu0 0
    %6126 = vmatpush2.bf16.msra.mxu0 %v4781
    %6127 = vmatprep.subr.bf16.mxu0 0
    %6128 = vmatpush2.bf16.msra.mxu0 %v4774
    %6129 = vmatprep.subr.bf16.mxu0 0
    %6130 = vmatpush2.bf16.msra.mxu0 %v4767
    %6131 = vmatprep.subr.bf16.mxu0 0
    %6132 = vmatpush2.bf16.msra.mxu0 %v4760
    %6133 = vmatprep.subr.bf16.mxu0 0
    %6134 = vmatpush2.bf16.msra.mxu0 %v4753
    %6135 = vmatprep.mubr.bf16.mxu0 %v2764
    %6136 = vmatmul.mubr.bf16.gmra.mxu0 %v2763
    %v6137 = vpop.f32.mrf.mxu0
    %v6138 = vadd.f32 0.0, %v6137
    %v6139 = vpop.f32.mrf.mxu0
    %v6140 = vpop.f32.mrf.mxu0
    %v6141 = vadd.f32 0.0, %v6140
    %v6142 = vpop.f32.mrf.mxu0
    %6143 = vdwg.mxu0
    %6144 = vmatprep.subr.bf16.mxu0 0
    %6145 = vmatpush1.bf16.msra.mxu0 %v4858
    %6146 = vmatprep.subr.bf16.mxu0 0
    %6147 = vmatpush1.bf16.msra.mxu0 %v4851
    %6148 = vmatprep.subr.bf16.mxu0 0
    %6149 = vmatpush1.bf16.msra.mxu0 %v4844
    %6150 = vmatprep.subr.bf16.mxu0 0
    %6151 = vmatpush1.bf16.msra.mxu0 %v4837
    %6152 = vmatprep.subr.bf16.mxu0 0
    %6153 = vmatpush1.bf16.msra.mxu0 %v4830
    %6154 = vmatprep.subr.bf16.mxu0 0
    %6155 = vmatpush1.bf16.msra.mxu0 %v4823
    %6156 = vmatprep.subr.bf16.mxu0 0
    %6157 = vmatpush1.bf16.msra.mxu0 %v4816
    %6158 = vmatprep.subr.bf16.mxu0 0
    %6159 = vmatpush1.bf16.msra.mxu0 %v4809
    %6160 = vmatprep.subr.bf16.mxu0 0
    %6161 = vmatpush2.bf16.msra.mxu0 %v4914
    %6162 = vmatprep.subr.bf16.mxu0 0
    %6163 = vmatpush2.bf16.msra.mxu0 %v4907
    %6164 = vmatprep.subr.bf16.mxu0 0
    %6165 = vmatpush2.bf16.msra.mxu0 %v4900
    %6166 = vmatprep.subr.bf16.mxu0 0
    %6167 = vmatpush2.bf16.msra.mxu0 %v4893
    %6168 = vmatprep.subr.bf16.mxu0 0
    %6169 = vmatpush2.bf16.msra.mxu0 %v4886
    %6170 = vmatprep.subr.bf16.mxu0 0
    %6171 = vmatpush2.bf16.msra.mxu0 %v4879
    %6172 = vmatprep.subr.bf16.mxu0 0
    %6173 = vmatpush2.bf16.msra.mxu0 %v4872
    %6174 = vmatprep.subr.bf16.mxu0 0
    %6175 = vmatpush2.bf16.msra.mxu0 %v4865
    %6176 = vmatprep.mubr.bf16.mxu0 %v2766
    %6177 = vmatmul.mubr.bf16.gmra.mxu0 %v2765
    %v6178 = vpop.f32.mrf.mxu0
    %v6179 = vadd.f32 %v6138, %v6178
    %v6180 = vpop.f32.mrf.mxu0
    %v6181 = vpop.f32.mrf.mxu0
    %v6182 = vadd.f32 %v6141, %v6181
    %v6183 = vpop.f32.mrf.mxu0
    %6184 = vdwg.mxu0
    %6185 = vmatprep.subr.bf16.mxu0 0
    %6186 = vmatpush1.bf16.msra.mxu0 %v4970
    %6187 = vmatprep.subr.bf16.mxu0 0
    %6188 = vmatpush1.bf16.msra.mxu0 %v4963
    %6189 = vmatprep.subr.bf16.mxu0 0
    %6190 = vmatpush1.bf16.msra.mxu0 %v4956
    %6191 = vmatprep.subr.bf16.mxu0 0
    %6192 = vmatpush1.bf16.msra.mxu0 %v4949
    %6193 = vmatprep.subr.bf16.mxu0 0
    %6194 = vmatpush1.bf16.msra.mxu0 %v4942
    %6195 = vmatprep.subr.bf16.mxu0 0
    %6196 = vmatpush1.bf16.msra.mxu0 %v4935
    %6197 = vmatprep.subr.bf16.mxu0 0
    %6198 = vmatpush1.bf16.msra.mxu0 %v4928
    %6199 = vmatprep.subr.bf16.mxu0 0
    %6200 = vmatpush1.bf16.msra.mxu0 %v4921
    %6201 = vmatprep.subr.bf16.mxu0 0
    %6202 = vmatpush2.bf16.msra.mxu0 %v5026
    %6203 = vmatprep.subr.bf16.mxu0 0
    %6204 = vmatpush2.bf16.msra.mxu0 %v5019
    %6205 = vmatprep.subr.bf16.mxu0 0
    %6206 = vmatpush2.bf16.msra.mxu0 %v5012
    %6207 = vmatprep.subr.bf16.mxu0 0
    %6208 = vmatpush2.bf16.msra.mxu0 %v5005
    %6209 = vmatprep.subr.bf16.mxu0 0
    %6210 = vmatpush2.bf16.msra.mxu0 %v4998
    %6211 = vmatprep.subr.bf16.mxu0 0
    %6212 = vmatpush2.bf16.msra.mxu0 %v4991
    %6213 = vmatprep.subr.bf16.mxu0 0
    %6214 = vmatpush2.bf16.msra.mxu0 %v4984
    %6215 = vmatprep.subr.bf16.mxu0 0
    %6216 = vmatpush2.bf16.msra.mxu0 %v4977
    %6217 = vmatprep.mubr.bf16.mxu0 %v2768
    %6218 = vmatmul.mubr.bf16.gmra.mxu0 %v2767
    %v6219 = vpop.f32.mrf.mxu0
    %v6220 = vadd.f32 %v6179, %v6219
    %v6221 = vpop.f32.mrf.mxu0
    %v6222 = vpop.f32.mrf.mxu0
    %v6223 = vadd.f32 %v6182, %v6222
    %v6224 = vpop.f32.mrf.mxu0
    %6225 = vdwg.mxu0
    %6226 = vmatprep.subr.bf16.mxu0 0
    %6227 = vmatpush1.bf16.msra.mxu0 %v5082
    %6228 = vmatprep.subr.bf16.mxu0 0
    %6229 = vmatpush1.bf16.msra.mxu0 %v5075
    %6230 = vmatprep.subr.bf16.mxu0 0
    %6231 = vmatpush1.bf16.msra.mxu0 %v5068
    %6232 = vmatprep.subr.bf16.mxu0 0
    %6233 = vmatpush1.bf16.msra.mxu0 %v5061
    %6234 = vmatprep.subr.bf16.mxu0 0
    %6235 = vmatpush1.bf16.msra.mxu0 %v5054
    %6236 = vmatprep.subr.bf16.mxu0 0
    %6237 = vmatpush1.bf16.msra.mxu0 %v5047
    %6238 = vmatprep.subr.bf16.mxu0 0
    %6239 = vmatpush1.bf16.msra.mxu0 %v5040
    %6240 = vmatprep.subr.bf16.mxu0 0
    %6241 = vmatpush1.bf16.msra.mxu0 %v5033
    %6242 = vmatprep.subr.bf16.mxu0 0
    %6243 = vmatpush2.bf16.msra.mxu0 %v5138
    %6244 = vmatprep.subr.bf16.mxu0 0
    %6245 = vmatpush2.bf16.msra.mxu0 %v5131
    %6246 = vmatprep.subr.bf16.mxu0 0
    %6247 = vmatpush2.bf16.msra.mxu0 %v5124
    %6248 = vmatprep.subr.bf16.mxu0 0
    %6249 = vmatpush2.bf16.msra.mxu0 %v5117
    %6250 = vmatprep.subr.bf16.mxu0 0
    %6251 = vmatpush2.bf16.msra.mxu0 %v5110
    %6252 = vmatprep.subr.bf16.mxu0 0
    %6253 = vmatpush2.bf16.msra.mxu0 %v5103
    %6254 = vmatprep.subr.bf16.mxu0 0
    %6255 = vmatpush2.bf16.msra.mxu0 %v5096
    %6256 = vmatprep.subr.bf16.mxu0 0
    %6257 = vmatpush2.bf16.msra.mxu0 %v5089
    %6258 = vmatprep.mubr.bf16.mxu0 %v2770
    %6259 = vmatmul.mubr.bf16.gmra.mxu0 %v2769
    %v6260 = vpop.f32.mrf.mxu0
    %v6261 = vadd.f32 %v6220, %v6260
    %v6262 = vpop.f32.mrf.mxu0
    %v6263 = vpop.f32.mrf.mxu0
    %v6264 = vadd.f32 %v6223, %v6263
    %v6265 = vpop.f32.mrf.mxu0
    %6266 = vdwg.mxu0
    %v6267 = vpack.c.bf16 %v5755, %v5751
    %v6268 = vpack.c.bf16 %v5757, %v5753
    %v6269 = vpack.c.bf16 %v5927, %v5923
    %v6270 = vpack.c.bf16 %v5929, %v5925
    %v6271 = vpack.c.bf16 %v6099, %v6095
    %v6272 = vpack.c.bf16 %v6101, %v6097
    %v6273 = vpack.c.bf16 %v6264, %v6261
    %v6274 = vld [vmem:[%s8] sm:$0x7f]
    %v6276 = vlaneseq
    %v6277 = vshrl.u32 %v6276, 7
    %v6278 = vsub.s32 0, %v6277
    %v6279 = vrot.slane %v6274, %v6278
    %v6280 = vlaneseq
    %v6281 = vshrl.u32 %v6280, 7
    %v6282 = vsub.s32 1, %v6281
    %v6283 = vrot.slane %v6274, %v6282
    %v6284 = vlaneseq
    %v6285 = vshrl.u32 %v6284, 7
    %v6286 = vsub.s32 2, %v6285
    %v6287 = vrot.slane %v6274, %v6286
    %v6288 = vlaneseq
    %v6289 = vshrl.u32 %v6288, 7
    %v6290 = vsub.s32 3, %v6289
    %v6291 = vrot.slane %v6274, %v6290
    %v6292 = vlaneseq
    %v6293 = vshrl.u32 %v6292, 7
    %v6294 = vsub.s32 4, %v6293
    %v6295 = vrot.slane %v6274, %v6294
    %v6296 = vlaneseq
    %v6297 = vshrl.u32 %v6296, 7
    %v6298 = vsub.s32 5, %v6297
    %v6299 = vrot.slane %v6274, %v6298
    %v6300 = vlaneseq
    %v6301 = vshrl.u32 %v6300, 7
    %v6302 = vsub.s32 6, %v6301
    %v6303 = vrot.slane %v6274, %v6302
    %v6311 = vpack.c.bf16 %v6279, %v6279
    %v6312 = vpack.c.bf16 %v6283, %v6283
    %v6313 = vpack.c.bf16 %v6287, %v6287
    %v6314 = vpack.c.bf16 %v6291, %v6291
    %v6315 = vpack.c.bf16 %v6295, %v6295
    %v6316 = vpack.c.bf16 %v6299, %v6299
    %v6317 = vpack.c.bf16 %v6303, %v6303
    %v6319 = vpack.i.b16 %v6311, %v6311
    %v6321 = vlaneseq
    %v6322 = vshrl.u32 %v6321, 7
    %v6323 = vsub.s32 0, %v6322
    %v6324 = vrot.slane %v6319, %v6323
    %v6326 = vpack.i.b16 %v6312, %v6312
    %v6328 = vlaneseq
    %v6329 = vshrl.u32 %v6328, 7
    %v6330 = vsub.s32 0, %v6329
    %v6331 = vrot.slane %v6326, %v6330
    %v6333 = vpack.i.b16 %v6313, %v6313
    %v6335 = vlaneseq
    %v6336 = vshrl.u32 %v6335, 7
    %v6337 = vsub.s32 0, %v6336
    %v6338 = vrot.slane %v6333, %v6337
    %v6340 = vpack.i.b16 %v6314, %v6314
    %v6342 = vlaneseq
    %v6343 = vshrl.u32 %v6342, 7
    %v6344 = vsub.s32 0, %v6343
    %v6345 = vrot.slane %v6340, %v6344
    %v6347 = vpack.i.b16 %v6315, %v6315
    %v6349 = vlaneseq
    %v6350 = vshrl.u32 %v6349, 7
    %v6351 = vsub.s32 0, %v6350
    %v6352 = vrot.slane %v6347, %v6351
    %v6354 = vpack.i.b16 %v6316, %v6316
    %v6356 = vlaneseq
    %v6357 = vshrl.u32 %v6356, 7
    %v6358 = vsub.s32 0, %v6357
    %v6359 = vrot.slane %v6354, %v6358
    %v6361 = vpack.i.b16 %v6317, %v6317
    %v6363 = vlaneseq
    %v6364 = vshrl.u32 %v6363, 7
    %v6365 = vsub.s32 0, %v6364
    %v6366 = vrot.slane %v6361, %v6365
    %v6367 = vadd.bf16 %v6267, %v6324
    %v6368 = vadd.bf16 %v6268, %v6331
    %v6369 = vadd.bf16 %v6269, %v6338
    %v6370 = vadd.bf16 %v6270, %v6345
    %v6371 = vadd.bf16 %v6271, %v6352
    %v6372 = vadd.bf16 %v6272, %v6359
    %v6373 = vadd.bf16 %v6273, %v6366
    %v6374 = vtanh.bf16.pop %v6367
    %v6375 = vtanh.bf16.pop %v6368
    %v6376 = vtanh.bf16.pop %v6369
    %v6377 = vtanh.bf16.pop %v6370
    %v6378 = vtanh.bf16.pop %v6371
    %v6379 = vtanh.bf16.pop %v6372
    %v6380 = vtanh.bf16.pop %v6373
    %v6381 = vunpack.c.l.bf16 %v6374
    %v6382 = vunpack.c.l.bf16 %v6375
    %v6383 = vunpack.c.l.bf16 %v6376
    %v6384 = vunpack.c.l.bf16 %v6377
    %v6385 = vunpack.c.l.bf16 %v6378
    %v6386 = vunpack.c.l.bf16 %v6379
    %v6387 = vunpack.c.l.bf16 %v6380
    %v6388 = vunpack.c.h.bf16 %v6374
    %v6389 = vunpack.c.h.bf16 %v6375
    %v6390 = vunpack.c.h.bf16 %v6376
    %v6391 = vunpack.c.h.bf16 %v6377
    %v6392 = vunpack.c.h.bf16 %v6378
    %v6393 = vunpack.c.h.bf16 %v6379
    %v6394 = vunpack.c.h.bf16 %v6380
    %6395 = vst [vmem:[#allocation2] sm:$0xff] %v6381
    %6396 = vst [vmem:[#allocation2 + $0x8] sm:$0xff] %v6382
    %6397 = vst [vmem:[#allocation2 + $0x10] sm:$0xff] %v6383
    %6398 = vst [vmem:[#allocation2 + $0x18] sm:$0xff] %v6384
    %6399 = vst [vmem:[#allocation2 + $0x20] sm:$0xff] %v6385
    %6400 = vst [vmem:[#allocation2 + $0x28] sm:$0xff] %v6386
    %vm6401 = vcmask 130048
    %6402 = vst.msk [vmem:[#allocation2 + $0x30] sm:$0xff] %vm6401, %v6387
    %6403 = vst [vmem:[#allocation2 + $0x38] sm:$0xff] %v6388
    %6404 = vst [vmem:[#allocation2 + $0x40] sm:$0xff] %v6389
    %6405 = vst [vmem:[#allocation2 + $0x48] sm:$0xff] %v6390
    %6406 = vst [vmem:[#allocation2 + $0x50] sm:$0xff] %v6391
    %6407 = vst [vmem:[#allocation2 + $0x58] sm:$0xff] %v6392
    %6408 = vst [vmem:[#allocation2 + $0x60] sm:$0xff] %v6393
    %6409 = vst.msk [vmem:[#allocation2 + $0x68] sm:$0xff] %vm6401, %v6394
    // Predicated region
    $region38: #{_generator_forward.1} parent=1 // pred_check
      _
    $region39: #{_generator_forward.1} parent=1 // pred_check_branch
      %6411 = sbr.rel (0) target = $region41
    $region40: #{_generator_forward.1} parent=1 // pred_region
      %s6413 = ssub.s32 1792, 1792
      %6414 = vsyncadd [#allocation3], %s6413
      %s6415 = sshll.u32 [#allocation2], 4
      %s6416 = int_to_ptr.vmem [resolvable:$true] %s6415
      %6421 = dma.vmem_to_hbm [thread:$0]  %s6416, 1792, %s9, [#allocation3], 896, 896, 56
    $region41: #{_generator_forward.1} parent=1 // pred_fallthru
      _
    // Predicated region
    $region42: #{_generator_forward.1} parent=1 // pred_check
      _
    $region43: #{_generator_forward.1} parent=1 // pred_check_branch
      %6423 = sbr.rel (0) target = $region45
    $region44: #{_generator_forward.1} parent=1 // pred_region
      %6424 = dma.done [#allocation3], 1792
    $region45: #{_generator_forward.1} parent=1 // pred_fallthru
      _
    %6425 = vsyncpa [#allocation3], 1

</llo_original>
